<compile_context>
chip_gen: v5e
topology: v5e:2x2
jax: 0.10.0
libtpu: 0.0.40
codegen_flags: <defaults>
</compile_context>

<pallas_src>
import functools
import math

import jax
import jax.numpy as jnp
from jax import lax
from jax.experimental import pallas as pl
from jax.experimental.pallas import tpu as pltpu

_NEG_INF = -1e30


# ----------------------------------------------------------------------------
# Kernel: the whole CombinedMHA forward in one invocation (no grid).
#
#   x1, x2    : (BN, Din)          f32  (BN = batch*seq, batch folded into rows)
#   bias      : (BN, BN)           f32  additive cross-batch mask (0 / -1e30)
#   w1q/k/v   : (4, Din, H*Dk|Dv)  bf16 stage-1 head-folded weights
#                                  (module order: self1, self2, attn1, attn2;
#                                   norm factor folded into w1q)
#   w2q/k/v   : (2, 4*H*Dv, H*Dk|Dv) bf16 stage-2 projections with stage-1
#                                  W_out folded in, zero-padded to slab width
#   wo2       : (2*H*Dv, 2*E)      bf16 block-diagonal final output projection
#   out       : (BN, 2*E)          f32  [out1 | out2]
#   heads1/2  : VMEM f32 scratch slabs for per-head attention outputs
# ----------------------------------------------------------------------------
def _combined_mha_kernel(x1_ref, x2_ref, bias_ref,
                         w1q_ref, w1k_ref, w1v_ref,
                         w2q_ref, w2k_ref, w2v_ref, wo2_ref,
                         out_ref, heads1_ref, heads2_ref, *,
                         num_heads, key_dim, val_dim):
    H, Dk, Dv = num_heads, key_dim, val_dim
    bias = bias_ref[...]                               # (BN, BN) f32, hoisted
    x1 = x1_ref[...].astype(jnp.bfloat16)              # bf16 MXU operands
    x2 = x2_ref[...].astype(jnp.bfloat16)
    xs = (x1, x2)

    def attend(q, k, v, heads_ref, lane_off):
        # q/k: (BN, H*Dk) f32, v: (BN, H*Dv) f32 (softmax path stays f32).
        # Per-head pieces are stored straight into the scratch slab (no concat).
        for h in range(H):
            qh = q[:, h * Dk:(h + 1) * Dk]
            kh = k[:, h * Dk:(h + 1) * Dk]
            vh = v[:, h * Dv:(h + 1) * Dv]
            # q @ k^T without an explicit transpose: contract dim 1 of both.
            s = lax.dot_general(qh, kh, (((1,), (1,)), ((), ())),
                                preferred_element_type=jnp.float32)   # (BN, BN)
            s = s + bias                                # kill cross-batch attention
            s = s - jnp.max(s, axis=-1, keepdims=True)
            e = jnp.exp(s)
            p = e * pl.reciprocal(jnp.sum(e, axis=-1, keepdims=True), approx=True)
            piece = jnp.dot(p, vh, preferred_element_type=jnp.float32)  # (BN, Dv)
            off = lane_off + h * Dv
            heads_ref[:, off:off + Dv] = piece

    # ---- stage 1: self1, self2, attn1, attn2 (query stream, key/value stream)
    q_src = (0, 1, 0, 1)
    h_src = (0, 1, 1, 0)
    for m in range(4):
        q = jnp.dot(xs[q_src[m]], w1q_ref[m], preferred_element_type=jnp.float32)
        k = jnp.dot(xs[h_src[m]], w1k_ref[m], preferred_element_type=jnp.float32)
        v = jnp.dot(xs[h_src[m]], w1v_ref[m], preferred_element_type=jnp.float32)
        attend(q, k, v, heads1_ref, m * H * Dv)

    # ---- stage 2: combined1, combined2.
    # Stage-1 W_out is already folded into w2q/w2k/w2v (zero-padded to the full
    # slab width), so the stage-1 head slab feeds the projections directly —
    # one wide matmul each, no lane slicing, no block-diagonal Wo matmul.
    slab1 = heads1_ref[...].astype(jnp.bfloat16)        # (BN, 4*H*Dv) = (16, 128)
    for m in range(2):
        q = jnp.dot(slab1, w2q_ref[m], preferred_element_type=jnp.float32)
        k = jnp.dot(slab1, w2k_ref[m], preferred_element_type=jnp.float32)
        v = jnp.dot(slab1, w2v_ref[m], preferred_element_type=jnp.float32)
        attend(q, k, v, heads2_ref, m * H * Dv)

    # Final block-diagonal output projection -> [out1 | out2], single wide store.
    slab2 = heads2_ref[...].astype(jnp.bfloat16)        # (BN, 2*H*Dv)
    out_ref[...] = jnp.dot(slab2, wo2_ref[...], preferred_element_type=jnp.float32)


# ----------------------------------------------------------------------------
# Wrapper: weight preparation (head folding, norm folding, stage-1 Wo folding,
# block-diag final Wo, bf16 pre-cast) + single pallas_call.
# ----------------------------------------------------------------------------
def _fold_heads(w):
    """(H, Din, D) -> (Din, H*D), head-major along the folded axis."""
    H, din, d = w.shape
    return jnp.transpose(w, (1, 0, 2)).reshape(din, H * d)


def combined_mha_forward(input1, input2, all_params):
    p_self1, p_self2, p_attn1, p_attn2, p_comb1, p_comb2 = all_params
    B, N, Din = input1.shape
    H, _, Dk = p_self1[0].shape
    Dv = p_self1[2].shape[-1]
    E = p_self1[3].shape[-1]
    assert input2.shape == input1.shape
    assert Din == E, ("CombinedMHA: stage-2 modules consume stage-1 outputs of "
                      "width embed_dim, so input_dim must equal embed_dim")
    BN = B * N
    nf = 1.0 / math.sqrt(Dk)
    slab_w = 4 * H * Dv                       # stage-1 head slab width (lane-dense 128)

    # Stage-1 weights: head-folded, norm folded into W_query, bf16 pre-cast.
    stage1 = (p_self1, p_self2, p_attn1, p_attn2)
    w1q = jnp.stack([_fold_heads(p[0]) * nf for p in stage1]).astype(jnp.bfloat16)
    w1k = jnp.stack([_fold_heads(p[1]) for p in stage1]).astype(jnp.bfloat16)
    w1v = jnp.stack([_fold_heads(p[2]) for p in stage1]).astype(jnp.bfloat16)

    def folded_stage2(wo_src, w_proj, block, scale=1.0):
        # Fold stage-1 W_out into a stage-2 projection (f32 product, then pad
        # to the full slab width so no lane slicing is needed in the kernel).
        m = wo_src.reshape(H * Dv, E) @ (_fold_heads(w_proj) * scale)    # (H*Dv, H*D)
        full = jnp.zeros((slab_w, m.shape[-1]), jnp.float32)
        return full.at[block * H * Dv:(block + 1) * H * Dv].set(m)

    # slab-1 lane blocks: 0=self1 | 1=self2 | 2=attn1 | 3=attn2
    # comb1: q <- self1 output, k/v <- attn1 output
    # comb2: q <- self2 output, k/v <- attn2 output
    w2q = jnp.stack([folded_stage2(p_self1[3], p_comb1[0], 0, nf),
                     folded_stage2(p_self2[3], p_comb2[0], 1, nf)]).astype(jnp.bfloat16)
    w2k = jnp.stack([folded_stage2(p_attn1[3], p_comb1[1], 2),
                     folded_stage2(p_attn2[3], p_comb2[1], 3)]).astype(jnp.bfloat16)
    w2v = jnp.stack([folded_stage2(p_attn1[3], p_comb1[2], 2),
                     folded_stage2(p_attn2[3], p_comb2[2], 3)]).astype(jnp.bfloat16)

    # Final output projection: block-diagonal (2*H*Dv, 2*E) -> [out1 | out2].
    wo2 = jnp.zeros((2 * H * Dv, 2 * E), jnp.float32)
    wo2 = wo2.at[:H * Dv, :E].set(p_comb1[3].reshape(H * Dv, E))
    wo2 = wo2.at[H * Dv:, E:].set(p_comb2[3].reshape(H * Dv, E))
    wo2 = wo2.astype(jnp.bfloat16)

    # Cross-batch additive bias: batch folded into rows, so positions may only
    # attend within their own batch element.
    bidx = jnp.arange(BN, dtype=jnp.int32) // N
    bias = jnp.where(bidx[:, None] == bidx[None, :], 0.0, _NEG_INF).astype(jnp.float32)

    x1 = input1.reshape(BN, Din)
    x2 = input2.reshape(BN, Din)

    kernel = functools.partial(_combined_mha_kernel,
                               num_heads=H, key_dim=Dk, val_dim=Dv)

    vmem = pl.BlockSpec(memory_space=pltpu.MemorySpace.VMEM)
    y = pl.pallas_call(
        kernel,
        out_shape=jax.ShapeDtypeStruct((BN, 2 * E), jnp.float32),
        in_specs=[vmem] * 10,
        out_specs=vmem,
        scratch_shapes=[pltpu.VMEM((BN, slab_w), jnp.float32),       # stage-1 heads
                        pltpu.VMEM((BN, 2 * H * Dv), jnp.float32)],  # stage-2 heads
    )(x1, x2, bias, w1q, w1k, w1v, w2q, w2k, w2v, wo2)

    y = y.reshape(B, N, 2 * E)
    return y[..., :E], y[..., E:]


# ----------------------------------------------------------------------------
# Pure-JAX reference (mirrors the PyTorch MHA.forward exactly, mask=None)
# ----------------------------------------------------------------------------
def mha_ref(q, h, params):
    wq, wk, wv, wo = params
    Dk = wq.shape[-1]
    query = jnp.einsum("bqd,hdk->hbqk", q, wq)
    key = jnp.einsum("bnd,hdk->hbnk", h, wk)
    value = jnp.einsum("bnd,hdv->hbnv", h, wv)
    compat = jnp.einsum("hbqk,hbnk->hbqn", query, key) / math.sqrt(Dk)
    attn = jax.nn.softmax(compat, axis=-1)
    heads = jnp.einsum("hbqn,hbnv->hbqv", attn, value)
    return jnp.einsum("hbqv,hve->bqe", heads, wo)


def combined_mha_forward_ref(input1, input2, all_params):
    (p_self1, p_self2, p_attn1, p_attn2, p_comb1, p_comb2) = all_params
    x1_x1 = mha_ref(input1, input1, p_self1)
    x2_x2 = mha_ref(input2, input2, p_self2)
    x1_x2 = mha_ref(input1, input2, p_attn1)
    x2_x1 = mha_ref(input2, input1, p_attn2)
    out1 = mha_ref(x1_x1, x1_x2, p_comb1)
    out2 = mha_ref(x2_x2, x2_x1, p_comb2)
    return out1, out2


# ----------------------------------------------------------------------------
# Parameter construction (deterministic; matches PyTorch init distribution)
# ----------------------------------------------------------------------------
def init_mha_params(key, num_heads, input_dim, embed_dim):
    val_dim = embed_dim // num_heads
    key_dim = val_dim
    shapes = [
        (num_heads, input_dim, key_dim),   # W_query
        (num_heads, input_dim, key_dim),   # W_key
        (num_heads, input_dim, val_dim),   # W_val
        (num_heads, val_dim, embed_dim),   # W_out
    ]
    keys = jax.random.split(key, len(shapes))
    params = []
    for k, shp in zip(keys, shapes):
        std = 1.0 / math.sqrt(shp[-1])
        params.append(jax.random.uniform(k, shp, jnp.float32, -std, std))
    return tuple(params)


if __name__ == "__main__":
    # input_dim must equal embed_dim so second-stage attention consumes the
    # first-stage outputs (same constraint as the PyTorch module).
    NUM_HEADS = 4
    INPUT_DIM = 32
    EMBED_DIM = 32
    B, N = 2, 8

    root = jax.random.PRNGKey(0)
    k_in1, k_in2, *k_mods = jax.random.split(root, 8)

    input1 = jax.random.normal(k_in1, (B, N, INPUT_DIM), jnp.float32)
    input2 = jax.random.normal(k_in2, (B, N, INPUT_DIM), jnp.float32)

    all_params = tuple(
        init_mha_params(k, NUM_HEADS, INPUT_DIM, EMBED_DIM) for k in k_mods[:6]
    )

    fwd = jax.jit(combined_mha_forward)
    out1, out2 = fwd(input1, input2, all_params)
    jax.block_until_ready((out1, out2))

    # Correctness vs. the pure-f32 reference.  MXU operands (inputs, projection
    # weights, folded stage-2 weights, attention probabilities feeding the
    # final projection) are bf16 across two chained attention stages, plus an
    # approximate-reciprocal softmax denominator -> tolerance tightened to a
    # few e-2 (vs 1e-1 previously); structural bugs would be >>1e-1.
    ref1, ref2 = combined_mha_forward_ref(input1, input2, all_params)
    assert out1.shape == ref1.shape and out2.shape == ref2.shape
    assert jnp.allclose(out1, ref1, atol=3e-2, rtol=2e-2), "out1 mismatch"
    assert jnp.allclose(out2, ref2, atol=3e-2, rtol=2e-2), "out2 mismatch"

    print("KERNEL_OK")
</pallas_src>

<mosaic_0001>
module attributes {stable_mosaic.version = 11 : i64} {
  func.func @_combined_mha_kernel(%arg0: memref<16x32xf32, #tpu.memory_space<vmem>>, %arg1: memref<16x32xf32, #tpu.memory_space<vmem>>, %arg2: memref<16x16xf32, #tpu.memory_space<vmem>>, %arg3: memref<4x32x32xbf16, #tpu.memory_space<vmem>>, %arg4: memref<4x32x32xbf16, #tpu.memory_space<vmem>>, %arg5: memref<4x32x32xbf16, #tpu.memory_space<vmem>>, %arg6: memref<2x128x32xbf16, #tpu.memory_space<vmem>>, %arg7: memref<2x128x32xbf16, #tpu.memory_space<vmem>>, %arg8: memref<2x128x32xbf16, #tpu.memory_space<vmem>>, %arg9: memref<64x64xbf16, #tpu.memory_space<vmem>>, %arg10: memref<16x64xf32, #tpu.memory_space<vmem>>, %arg11: memref<16x128xf32, #tpu.memory_space<vmem>>, %arg12: memref<16x64xf32, #tpu.memory_space<vmem>>) attributes {dimension_semantics = [], scalar_prefetch = 0 : i64, scratch_operands = 2 : i64, tpu.core_type = #tpu.core_type<tc>} {
    %c0 = arith.constant 0 : index
    %c0_0 = arith.constant 0 : index
    %0 = vector.load %arg2[%c0, %c0_0] : memref<16x16xf32, #tpu.memory_space<vmem>>, vector<16x16xf32>
    %c0_1 = arith.constant 0 : index
    %c0_2 = arith.constant 0 : index
    %1 = vector.load %arg0[%c0_1, %c0_2] : memref<16x32xf32, #tpu.memory_space<vmem>>, vector<16x32xf32>
    %2 = arith.truncf %1 : vector<16x32xf32> to vector<16x32xbf16>
    %c0_3 = arith.constant 0 : index
    %c0_4 = arith.constant 0 : index
    %3 = vector.load %arg1[%c0_3, %c0_4] : memref<16x32xf32, #tpu.memory_space<vmem>>, vector<16x32xf32>
    %4 = arith.truncf %3 : vector<16x32xf32> to vector<16x32xbf16>
    %c0_5 = arith.constant 0 : index
    %c0_6 = arith.constant 0 : index
    %c0_7 = arith.constant 0 : index
    %5 = vector.load %arg3[%c0_5, %c0_6, %c0_7] : memref<4x32x32xbf16, #tpu.memory_space<vmem>>, vector<1x32x32xbf16>
    %6 = vector.shape_cast %5 : vector<1x32x32xbf16> to vector<32x32xbf16>
    %cst = arith.constant dense<0.000000e+00> : vector<16x32xf32>
    %7 = tpu.matmul %2, %6, %cst {dimension_numbers = #tpu.dot_dimension_numbers<[1], [0], [0], [1], [0, 0, 1, 1], [], []>} : vector<16x32xbf16>, vector<32x32xbf16>, vector<16x32xf32> -> vector<16x32xf32>
    %c0_8 = arith.constant 0 : index
    %c0_9 = arith.constant 0 : index
    %c0_10 = arith.constant 0 : index
    %8 = vector.load %arg4[%c0_8, %c0_9, %c0_10] : memref<4x32x32xbf16, #tpu.memory_space<vmem>>, vector<1x32x32xbf16>
    %9 = vector.shape_cast %8 : vector<1x32x32xbf16> to vector<32x32xbf16>
    %cst_11 = arith.constant dense<0.000000e+00> : vector<16x32xf32>
    %10 = tpu.matmul %2, %9, %cst_11 {dimension_numbers = #tpu.dot_dimension_numbers<[1], [0], [0], [1], [0, 0, 1, 1], [], []>} : vector<16x32xbf16>, vector<32x32xbf16>, vector<16x32xf32> -> vector<16x32xf32>
    %c0_12 = arith.constant 0 : index
    %c0_13 = arith.constant 0 : index
    %c0_14 = arith.constant 0 : index
    %11 = vector.load %arg5[%c0_12, %c0_13, %c0_14] : memref<4x32x32xbf16, #tpu.memory_space<vmem>>, vector<1x32x32xbf16>
    %12 = vector.shape_cast %11 : vector<1x32x32xbf16> to vector<32x32xbf16>
    %cst_15 = arith.constant dense<0.000000e+00> : vector<16x32xf32>
    %13 = tpu.matmul %2, %12, %cst_15 {dimension_numbers = #tpu.dot_dimension_numbers<[1], [0], [0], [1], [0, 0, 1, 1], [], []>} : vector<16x32xbf16>, vector<32x32xbf16>, vector<16x32xf32> -> vector<16x32xf32>
    %14 = vector.extract_strided_slice %7 {offsets = [0, 0], sizes = [16, 8], strides = [1, 1]} : vector<16x32xf32> to vector<16x8xf32>
    %15 = vector.extract_strided_slice %10 {offsets = [0, 0], sizes = [16, 8], strides = [1, 1]} : vector<16x32xf32> to vector<16x8xf32>
    %16 = vector.extract_strided_slice %13 {offsets = [0, 0], sizes = [16, 8], strides = [1, 1]} : vector<16x32xf32> to vector<16x8xf32>
    %cst_16 = arith.constant dense<0.000000e+00> : vector<16x16xf32>
    %17 = tpu.matmul %14, %15, %cst_16 {dimension_numbers = #tpu.dot_dimension_numbers<[1], [1], [0], [0], [0, 0, 1, 0], [], []>} : vector<16x8xf32>, vector<16x8xf32>, vector<16x16xf32> -> vector<16x16xf32>
    %18 = arith.addf %17, %0 : vector<16x16xf32>
    %cst_17 = arith.constant dense<0xFF800000> : vector<16xf32>
    %19 = vector.multi_reduction <maximumf>, %18, %cst_17 [1] : vector<16x16xf32> to vector<16xf32>
    %20 = vector.shape_cast %19 : vector<16xf32> to vector<16x1xf32>
    %21 = vector.broadcast %20 : vector<16x1xf32> to vector<16x16xf32>
    %22 = arith.subf %18, %21 : vector<16x16xf32>
    %23 = math.exp %22 : vector<16x16xf32>
    %cst_18 = arith.constant dense<0.000000e+00> : vector<16xf32>
    %24 = vector.multi_reduction <add>, %23, %cst_18 [1] : vector<16x16xf32> to vector<16xf32>
    %25 = vector.shape_cast %24 : vector<16xf32> to vector<16x1xf32>
    %26 = tpu.reciprocal %25 {approx = true} : vector<16x1xf32> -> vector<16x1xf32>
    %27 = vector.broadcast %26 : vector<16x1xf32> to vector<16x16xf32>
    %28 = arith.mulf %23, %27 : vector<16x16xf32>
    %cst_19 = arith.constant dense<0.000000e+00> : vector<16x8xf32>
    %29 = tpu.matmul %28, %16, %cst_19 {dimension_numbers = #tpu.dot_dimension_numbers<[1], [0], [0], [1], [0, 0, 1, 1], [], []>} : vector<16x16xf32>, vector<16x8xf32>, vector<16x8xf32> -> vector<16x8xf32>
    %c0_20 = arith.constant 0 : index
    %c0_21 = arith.constant 0 : index
    %30 = vector.load %arg11[%c0_20, %c0_21] : memref<16x128xf32, #tpu.memory_space<vmem>>, vector<16x8xf32>
    tpu.vector_store %arg11[%c0_20, %c0_21], %29 {strides = array<i32>} : memref<16x128xf32, #tpu.memory_space<vmem>>, vector<16x8xf32>,
    %31 = vector.extract_strided_slice %7 {offsets = [0, 8], sizes = [16, 8], strides = [1, 1]} : vector<16x32xf32> to vector<16x8xf32>
    %32 = vector.extract_strided_slice %10 {offsets = [0, 8], sizes = [16, 8], strides = [1, 1]} : vector<16x32xf32> to vector<16x8xf32>
    %33 = vector.extract_strided_slice %13 {offsets = [0, 8], sizes = [16, 8], strides = [1, 1]} : vector<16x32xf32> to vector<16x8xf32>
    %cst_22 = arith.constant dense<0.000000e+00> : vector<16x16xf32>
    %34 = tpu.matmul %31, %32, %cst_22 {dimension_numbers = #tpu.dot_dimension_numbers<[1], [1], [0], [0], [0, 0, 1, 0], [], []>} : vector<16x8xf32>, vector<16x8xf32>, vector<16x16xf32> -> vector<16x16xf32>
    %35 = arith.addf %34, %0 : vector<16x16xf32>
    %cst_23 = arith.constant dense<0xFF800000> : vector<16xf32>
    %36 = vector.multi_reduction <maximumf>, %35, %cst_23 [1] : vector<16x16xf32> to vector<16xf32>
    %37 = vector.shape_cast %36 : vector<16xf32> to vector<16x1xf32>
    %38 = vector.broadcast %37 : vector<16x1xf32> to vector<16x16xf32>
    %39 = arith.subf %35, %38 : vector<16x16xf32>
    %40 = math.exp %39 : vector<16x16xf32>
    %cst_24 = arith.constant dense<0.000000e+00> : vector<16xf32>
    %41 = vector.multi_reduction <add>, %40, %cst_24 [1] : vector<16x16xf32> to vector<16xf32>
    %42 = vector.shape_cast %41 : vector<16xf32> to vector<16x1xf32>
    %43 = tpu.reciprocal %42 {approx = true} : vector<16x1xf32> -> vector<16x1xf32>
    %44 = vector.broadcast %43 : vector<16x1xf32> to vector<16x16xf32>
    %45 = arith.mulf %40, %44 : vector<16x16xf32>
    %cst_25 = arith.constant dense<0.000000e+00> : vector<16x8xf32>
    %46 = tpu.matmul %45, %33, %cst_25 {dimension_numbers = #tpu.dot_dimension_numbers<[1], [0], [0], [1], [0, 0, 1, 1], [], []>} : vector<16x16xf32>, vector<16x8xf32>, vector<16x8xf32> -> vector<16x8xf32>
    %c0_26 = arith.constant 0 : index
    %c8 = arith.constant 8 : index
    %47 = vector.load %arg11[%c0_26, %c8] : memref<16x128xf32, #tpu.memory_space<vmem>>, vector<16x8xf32>
    tpu.vector_store %arg11[%c0_26, %c8], %46 {strides = array<i32>} : memref<16x128xf32, #tpu.memory_space<vmem>>, vector<16x8xf32>,
    %48 = vector.extract_strided_slice %7 {offsets = [0, 16], sizes = [16, 8], strides = [1, 1]} : vector<16x32xf32> to vector<16x8xf32>
    %49 = vector.extract_strided_slice %10 {offsets = [0, 16], sizes = [16, 8], strides = [1, 1]} : vector<16x32xf32> to vector<16x8xf32>
    %50 = vector.extract_strided_slice %13 {offsets = [0, 16], sizes = [16, 8], strides = [1, 1]} : vector<16x32xf32> to vector<16x8xf32>
    %cst_27 = arith.constant dense<0.000000e+00> : vector<16x16xf32>
    %51 = tpu.matmul %48, %49, %cst_27 {dimension_numbers = #tpu.dot_dimension_numbers<[1], [1], [0], [0], [0, 0, 1, 0], [], []>} : vector<16x8xf32>, vector<16x8xf32>, vector<16x16xf32> -> vector<16x16xf32>
    %52 = arith.addf %51, %0 : vector<16x16xf32>
    %cst_28 = arith.constant dense<0xFF800000> : vector<16xf32>
    %53 = vector.multi_reduction <maximumf>, %52, %cst_28 [1] : vector<16x16xf32> to vector<16xf32>
    %54 = vector.shape_cast %53 : vector<16xf32> to vector<16x1xf32>
    %55 = vector.broadcast %54 : vector<16x1xf32> to vector<16x16xf32>
    %56 = arith.subf %52, %55 : vector<16x16xf32>
    %57 = math.exp %56 : vector<16x16xf32>
    %cst_29 = arith.constant dense<0.000000e+00> : vector<16xf32>
    %58 = vector.multi_reduction <add>, %57, %cst_29 [1] : vector<16x16xf32> to vector<16xf32>
    %59 = vector.shape_cast %58 : vector<16xf32> to vector<16x1xf32>
    %60 = tpu.reciprocal %59 {approx = true} : vector<16x1xf32> -> vector<16x1xf32>
    %61 = vector.broadcast %60 : vector<16x1xf32> to vector<16x16xf32>
    %62 = arith.mulf %57, %61 : vector<16x16xf32>
    %cst_30 = arith.constant dense<0.000000e+00> : vector<16x8xf32>
    %63 = tpu.matmul %62, %50, %cst_30 {dimension_numbers = #tpu.dot_dimension_numbers<[1], [0], [0], [1], [0, 0, 1, 1], [], []>} : vector<16x16xf32>, vector<16x8xf32>, vector<16x8xf32> -> vector<16x8xf32>
    %c0_31 = arith.constant 0 : index
    %c16 = arith.constant 16 : index
    %64 = vector.load %arg11[%c0_31, %c16] : memref<16x128xf32, #tpu.memory_space<vmem>>, vector<16x8xf32>
    tpu.vector_store %arg11[%c0_31, %c16], %63 {strides = array<i32>} : memref<16x128xf32, #tpu.memory_space<vmem>>, vector<16x8xf32>,
    %65 = vector.extract_strided_slice %7 {offsets = [0, 24], sizes = [16, 8], strides = [1, 1]} : vector<16x32xf32> to vector<16x8xf32>
    %66 = vector.extract_strided_slice %10 {offsets = [0, 24], sizes = [16, 8], strides = [1, 1]} : vector<16x32xf32> to vector<16x8xf32>
    %67 = vector.extract_strided_slice %13 {offsets = [0, 24], sizes = [16, 8], strides = [1, 1]} : vector<16x32xf32> to vector<16x8xf32>
    %cst_32 = arith.constant dense<0.000000e+00> : vector<16x16xf32>
    %68 = tpu.matmul %65, %66, %cst_32 {dimension_numbers = #tpu.dot_dimension_numbers<[1], [1], [0], [0], [0, 0, 1, 0], [], []>} : vector<16x8xf32>, vector<16x8xf32>, vector<16x16xf32> -> vector<16x16xf32>
    %69 = arith.addf %68, %0 : vector<16x16xf32>
    %cst_33 = arith.constant dense<0xFF800000> : vector<16xf32>
    %70 = vector.multi_reduction <maximumf>, %69, %cst_33 [1] : vector<16x16xf32> to vector<16xf32>
    %71 = vector.shape_cast %70 : vector<16xf32> to vector<16x1xf32>
    %72 = vector.broadcast %71 : vector<16x1xf32> to vector<16x16xf32>
    %73 = arith.subf %69, %72 : vector<16x16xf32>
    %74 = math.exp %73 : vector<16x16xf32>
    %cst_34 = arith.constant dense<0.000000e+00> : vector<16xf32>
    %75 = vector.multi_reduction <add>, %74, %cst_34 [1] : vector<16x16xf32> to vector<16xf32>
    %76 = vector.shape_cast %75 : vector<16xf32> to vector<16x1xf32>
    %77 = tpu.reciprocal %76 {approx = true} : vector<16x1xf32> -> vector<16x1xf32>
    %78 = vector.broadcast %77 : vector<16x1xf32> to vector<16x16xf32>
    %79 = arith.mulf %74, %78 : vector<16x16xf32>
    %cst_35 = arith.constant dense<0.000000e+00> : vector<16x8xf32>
    %80 = tpu.matmul %79, %67, %cst_35 {dimension_numbers = #tpu.dot_dimension_numbers<[1], [0], [0], [1], [0, 0, 1, 1], [], []>} : vector<16x16xf32>, vector<16x8xf32>, vector<16x8xf32> -> vector<16x8xf32>
    %c0_36 = arith.constant 0 : index
    %c24 = arith.constant 24 : index
    %81 = vector.load %arg11[%c0_36, %c24] : memref<16x128xf32, #tpu.memory_space<vmem>>, vector<16x8xf32>
    tpu.vector_store %arg11[%c0_36, %c24], %80 {strides = array<i32>} : memref<16x128xf32, #tpu.memory_space<vmem>>, vector<16x8xf32>,
    %c1 = arith.constant 1 : index
    %c0_37 = arith.constant 0 : index
    %c0_38 = arith.constant 0 : index
    %82 = vector.load %arg3[%c1, %c0_37, %c0_38] : memref<4x32x32xbf16, #tpu.memory_space<vmem>>, vector<1x32x32xbf16>
    %83 = vector.shape_cast %82 : vector<1x32x32xbf16> to vector<32x32xbf16>
    %cst_39 = arith.constant dense<0.000000e+00> : vector<16x32xf32>
    %84 = tpu.matmul %4, %83, %cst_39 {dimension_numbers = #tpu.dot_dimension_numbers<[1], [0], [0], [1], [0, 0, 1, 1], [], []>} : vector<16x32xbf16>, vector<32x32xbf16>, vector<16x32xf32> -> vector<16x32xf32>
    %c1_40 = arith.constant 1 : index
    %c0_41 = arith.constant 0 : index
    %c0_42 = arith.constant 0 : index
    %85 = vector.load %arg4[%c1_40, %c0_41, %c0_42] : memref<4x32x32xbf16, #tpu.memory_space<vmem>>, vector<1x32x32xbf16>
    %86 = vector.shape_cast %85 : vector<1x32x32xbf16> to vector<32x32xbf16>
    %cst_43 = arith.constant dense<0.000000e+00> : vector<16x32xf32>
    %87 = tpu.matmul %4, %86, %cst_43 {dimension_numbers = #tpu.dot_dimension_numbers<[1], [0], [0], [1], [0, 0, 1, 1], [], []>} : vector<16x32xbf16>, vector<32x32xbf16>, vector<16x32xf32> -> vector<16x32xf32>
    %c1_44 = arith.constant 1 : index
    %c0_45 = arith.constant 0 : index
    %c0_46 = arith.constant 0 : index
    %88 = vector.load %arg5[%c1_44, %c0_45, %c0_46] : memref<4x32x32xbf16, #tpu.memory_space<vmem>>, vector<1x32x32xbf16>
    %89 = vector.shape_cast %88 : vector<1x32x32xbf16> to vector<32x32xbf16>
    %cst_47 = arith.constant dense<0.000000e+00> : vector<16x32xf32>
    %90 = tpu.matmul %4, %89, %cst_47 {dimension_numbers = #tpu.dot_dimension_numbers<[1], [0], [0], [1], [0, 0, 1, 1], [], []>} : vector<16x32xbf16>, vector<32x32xbf16>, vector<16x32xf32> -> vector<16x32xf32>
    %91 = vector.extract_strided_slice %84 {offsets = [0, 0], sizes = [16, 8], strides = [1, 1]} : vector<16x32xf32> to vector<16x8xf32>
    %92 = vector.extract_strided_slice %87 {offsets = [0, 0], sizes = [16, 8], strides = [1, 1]} : vector<16x32xf32> to vector<16x8xf32>
    %93 = vector.extract_strided_slice %90 {offsets = [0, 0], sizes = [16, 8], strides = [1, 1]} : vector<16x32xf32> to vector<16x8xf32>
    %cst_48 = arith.constant dense<0.000000e+00> : vector<16x16xf32>
    %94 = tpu.matmul %91, %92, %cst_48 {dimension_numbers = #tpu.dot_dimension_numbers<[1], [1], [0], [0], [0, 0, 1, 0], [], []>} : vector<16x8xf32>, vector<16x8xf32>, vector<16x16xf32> -> vector<16x16xf32>
    %95 = arith.addf %94, %0 : vector<16x16xf32>
    %cst_49 = arith.constant dense<0xFF800000> : vector<16xf32>
    %96 = vector.multi_reduction <maximumf>, %95, %cst_49 [1] : vector<16x16xf32> to vector<16xf32>
    %97 = vector.shape_cast %96 : vector<16xf32> to vector<16x1xf32>
    %98 = vector.broadcast %97 : vector<16x1xf32> to vector<16x16xf32>
    %99 = arith.subf %95, %98 : vector<16x16xf32>
    %100 = math.exp %99 : vector<16x16xf32>
    %cst_50 = arith.constant dense<0.000000e+00> : vector<16xf32>
    %101 = vector.multi_reduction <add>, %100, %cst_50 [1] : vector<16x16xf32> to vector<16xf32>
    %102 = vector.shape_cast %101 : vector<16xf32> to vector<16x1xf32>
    %103 = tpu.reciprocal %102 {approx = true} : vector<16x1xf32> -> vector<16x1xf32>
    %104 = vector.broadcast %103 : vector<16x1xf32> to vector<16x16xf32>
    %105 = arith.mulf %100, %104 : vector<16x16xf32>
    %cst_51 = arith.constant dense<0.000000e+00> : vector<16x8xf32>
    %106 = tpu.matmul %105, %93, %cst_51 {dimension_numbers = #tpu.dot_dimension_numbers<[1], [0], [0], [1], [0, 0, 1, 1], [], []>} : vector<16x16xf32>, vector<16x8xf32>, vector<16x8xf32> -> vector<16x8xf32>
    %c0_52 = arith.constant 0 : index
    %c32 = arith.constant 32 : index
    %107 = vector.load %arg11[%c0_52, %c32] : memref<16x128xf32, #tpu.memory_space<vmem>>, vector<16x8xf32>
    tpu.vector_store %arg11[%c0_52, %c32], %106 {strides = array<i32>} : memref<16x128xf32, #tpu.memory_space<vmem>>, vector<16x8xf32>,
    %108 = vector.extract_strided_slice %84 {offsets = [0, 8], sizes = [16, 8], strides = [1, 1]} : vector<16x32xf32> to vector<16x8xf32>
    %109 = vector.extract_strided_slice %87 {offsets = [0, 8], sizes = [16, 8], strides = [1, 1]} : vector<16x32xf32> to vector<16x8xf32>
    %110 = vector.extract_strided_slice %90 {offsets = [0, 8], sizes = [16, 8], strides = [1, 1]} : vector<16x32xf32> to vector<16x8xf32>
    %cst_53 = arith.constant dense<0.000000e+00> : vector<16x16xf32>
    %111 = tpu.matmul %108, %109, %cst_53 {dimension_numbers = #tpu.dot_dimension_numbers<[1], [1], [0], [0], [0, 0, 1, 0], [], []>} : vector<16x8xf32>, vector<16x8xf32>, vector<16x16xf32> -> vector<16x16xf32>
    %112 = arith.addf %111, %0 : vector<16x16xf32>
    %cst_54 = arith.constant dense<0xFF800000> : vector<16xf32>
    %113 = vector.multi_reduction <maximumf>, %112, %cst_54 [1] : vector<16x16xf32> to vector<16xf32>
    %114 = vector.shape_cast %113 : vector<16xf32> to vector<16x1xf32>
    %115 = vector.broadcast %114 : vector<16x1xf32> to vector<16x16xf32>
    %116 = arith.subf %112, %115 : vector<16x16xf32>
    %117 = math.exp %116 : vector<16x16xf32>
    %cst_55 = arith.constant dense<0.000000e+00> : vector<16xf32>
    %118 = vector.multi_reduction <add>, %117, %cst_55 [1] : vector<16x16xf32> to vector<16xf32>
    %119 = vector.shape_cast %118 : vector<16xf32> to vector<16x1xf32>
    %120 = tpu.reciprocal %119 {approx = true} : vector<16x1xf32> -> vector<16x1xf32>
    %121 = vector.broadcast %120 : vector<16x1xf32> to vector<16x16xf32>
    %122 = arith.mulf %117, %121 : vector<16x16xf32>
    %cst_56 = arith.constant dense<0.000000e+00> : vector<16x8xf32>
    %123 = tpu.matmul %122, %110, %cst_56 {dimension_numbers = #tpu.dot_dimension_numbers<[1], [0], [0], [1], [0, 0, 1, 1], [], []>} : vector<16x16xf32>, vector<16x8xf32>, vector<16x8xf32> -> vector<16x8xf32>
    %c0_57 = arith.constant 0 : index
    %c40 = arith.constant 40 : index
    %124 = vector.load %arg11[%c0_57, %c40] : memref<16x128xf32, #tpu.memory_space<vmem>>, vector<16x8xf32>
    tpu.vector_store %arg11[%c0_57, %c40], %123 {strides = array<i32>} : memref<16x128xf32, #tpu.memory_space<vmem>>, vector<16x8xf32>,
    %125 = vector.extract_strided_slice %84 {offsets = [0, 16], sizes = [16, 8], strides = [1, 1]} : vector<16x32xf32> to vector<16x8xf32>
    %126 = vector.extract_strided_slice %87 {offsets = [0, 16], sizes = [16, 8], strides = [1, 1]} : vector<16x32xf32> to vector<16x8xf32>
    %127 = vector.extract_strided_slice %90 {offsets = [0, 16], sizes = [16, 8], strides = [1, 1]} : vector<16x32xf32> to vector<16x8xf32>
    %cst_58 = arith.constant dense<0.000000e+00> : vector<16x16xf32>
    %128 = tpu.matmul %125, %126, %cst_58 {dimension_numbers = #tpu.dot_dimension_numbers<[1], [1], [0], [0], [0, 0, 1, 0], [], []>} : vector<16x8xf32>, vector<16x8xf32>, vector<16x16xf32> -> vector<16x16xf32>
    %129 = arith.addf %128, %0 : vector<16x16xf32>
    %cst_59 = arith.constant dense<0xFF800000> : vector<16xf32>
    %130 = vector.multi_reduction <maximumf>, %129, %cst_59 [1] : vector<16x16xf32> to vector<16xf32>
    %131 = vector.shape_cast %130 : vector<16xf32> to vector<16x1xf32>
    %132 = vector.broadcast %131 : vector<16x1xf32> to vector<16x16xf32>
    %133 = arith.subf %129, %132 : vector<16x16xf32>
    %134 = math.exp %133 : vector<16x16xf32>
    %cst_60 = arith.constant dense<0.000000e+00> : vector<16xf32>
    %135 = vector.multi_reduction <add>, %134, %cst_60 [1] : vector<16x16xf32> to vector<16xf32>
    %136 = vector.shape_cast %135 : vector<16xf32> to vector<16x1xf32>
    %137 = tpu.reciprocal %136 {approx = true} : vector<16x1xf32> -> vector<16x1xf32>
    %138 = vector.broadcast %137 : vector<16x1xf32> to vector<16x16xf32>
    %139 = arith.mulf %134, %138 : vector<16x16xf32>
    %cst_61 = arith.constant dense<0.000000e+00> : vector<16x8xf32>
    %140 = tpu.matmul %139, %127, %cst_61 {dimension_numbers = #tpu.dot_dimension_numbers<[1], [0], [0], [1], [0, 0, 1, 1], [], []>} : vector<16x16xf32>, vector<16x8xf32>, vector<16x8xf32> -> vector<16x8xf32>
    %c0_62 = arith.constant 0 : index
    %c48 = arith.constant 48 : index
    %141 = vector.load %arg11[%c0_62, %c48] : memref<16x128xf32, #tpu.memory_space<vmem>>, vector<16x8xf32>
    tpu.vector_store %arg11[%c0_62, %c48], %140 {strides = array<i32>} : memref<16x128xf32, #tpu.memory_space<vmem>>, vector<16x8xf32>,
    %142 = vector.extract_strided_slice %84 {offsets = [0, 24], sizes = [16, 8], strides = [1, 1]} : vector<16x32xf32> to vector<16x8xf32>
    %143 = vector.extract_strided_slice %87 {offsets = [0, 24], sizes = [16, 8], strides = [1, 1]} : vector<16x32xf32> to vector<16x8xf32>
    %144 = vector.extract_strided_slice %90 {offsets = [0, 24], sizes = [16, 8], strides = [1, 1]} : vector<16x32xf32> to vector<16x8xf32>
    %cst_63 = arith.constant dense<0.000000e+00> : vector<16x16xf32>
    %145 = tpu.matmul %142, %143, %cst_63 {dimension_numbers = #tpu.dot_dimension_numbers<[1], [1], [0], [0], [0, 0, 1, 0], [], []>} : vector<16x8xf32>, vector<16x8xf32>, vector<16x16xf32> -> vector<16x16xf32>
    %146 = arith.addf %145, %0 : vector<16x16xf32>
    %cst_64 = arith.constant dense<0xFF800000> : vector<16xf32>
    %147 = vector.multi_reduction <maximumf>, %146, %cst_64 [1] : vector<16x16xf32> to vector<16xf32>
    %148 = vector.shape_cast %147 : vector<16xf32> to vector<16x1xf32>
    %149 = vector.broadcast %148 : vector<16x1xf32> to vector<16x16xf32>
    %150 = arith.subf %146, %149 : vector<16x16xf32>
    %151 = math.exp %150 : vector<16x16xf32>
    %cst_65 = arith.constant dense<0.000000e+00> : vector<16xf32>
    %152 = vector.multi_reduction <add>, %151, %cst_65 [1] : vector<16x16xf32> to vector<16xf32>
    %153 = vector.shape_cast %152 : vector<16xf32> to vector<16x1xf32>
    %154 = tpu.reciprocal %153 {approx = true} : vector<16x1xf32> -> vector<16x1xf32>
    %155 = vector.broadcast %154 : vector<16x1xf32> to vector<16x16xf32>
    %156 = arith.mulf %151, %155 : vector<16x16xf32>
    %cst_66 = arith.constant dense<0.000000e+00> : vector<16x8xf32>
    %157 = tpu.matmul %156, %144, %cst_66 {dimension_numbers = #tpu.dot_dimension_numbers<[1], [0], [0], [1], [0, 0, 1, 1], [], []>} : vector<16x16xf32>, vector<16x8xf32>, vector<16x8xf32> -> vector<16x8xf32>
    %c0_67 = arith.constant 0 : index
    %c56 = arith.constant 56 : index
    %158 = vector.load %arg11[%c0_67, %c56] : memref<16x128xf32, #tpu.memory_space<vmem>>, vector<16x8xf32>
    tpu.vector_store %arg11[%c0_67, %c56], %157 {strides = array<i32>} : memref<16x128xf32, #tpu.memory_space<vmem>>, vector<16x8xf32>,
    %c2 = arith.constant 2 : index
    %c0_68 = arith.constant 0 : index
    %c0_69 = arith.constant 0 : index
    %159 = vector.load %arg3[%c2, %c0_68, %c0_69] : memref<4x32x32xbf16, #tpu.memory_space<vmem>>, vector<1x32x32xbf16>
    %160 = vector.shape_cast %159 : vector<1x32x32xbf16> to vector<32x32xbf16>
    %cst_70 = arith.constant dense<0.000000e+00> : vector<16x32xf32>
    %161 = tpu.matmul %2, %160, %cst_70 {dimension_numbers = #tpu.dot_dimension_numbers<[1], [0], [0], [1], [0, 0, 1, 1], [], []>} : vector<16x32xbf16>, vector<32x32xbf16>, vector<16x32xf32> -> vector<16x32xf32>
    %c2_71 = arith.constant 2 : index
    %c0_72 = arith.constant 0 : index
    %c0_73 = arith.constant 0 : index
    %162 = vector.load %arg4[%c2_71, %c0_72, %c0_73] : memref<4x32x32xbf16, #tpu.memory_space<vmem>>, vector<1x32x32xbf16>
    %163 = vector.shape_cast %162 : vector<1x32x32xbf16> to vector<32x32xbf16>
    %cst_74 = arith.constant dense<0.000000e+00> : vector<16x32xf32>
    %164 = tpu.matmul %4, %163, %cst_74 {dimension_numbers = #tpu.dot_dimension_numbers<[1], [0], [0], [1], [0, 0, 1, 1], [], []>} : vector<16x32xbf16>, vector<32x32xbf16>, vector<16x32xf32> -> vector<16x32xf32>
    %c2_75 = arith.constant 2 : index
    %c0_76 = arith.constant 0 : index
    %c0_77 = arith.constant 0 : index
    %165 = vector.load %arg5[%c2_75, %c0_76, %c0_77] : memref<4x32x32xbf16, #tpu.memory_space<vmem>>, vector<1x32x32xbf16>
    %166 = vector.shape_cast %165 : vector<1x32x32xbf16> to vector<32x32xbf16>
    %cst_78 = arith.constant dense<0.000000e+00> : vector<16x32xf32>
    %167 = tpu.matmul %4, %166, %cst_78 {dimension_numbers = #tpu.dot_dimension_numbers<[1], [0], [0], [1], [0, 0, 1, 1], [], []>} : vector<16x32xbf16>, vector<32x32xbf16>, vector<16x32xf32> -> vector<16x32xf32>
    %168 = vector.extract_strided_slice %161 {offsets = [0, 0], sizes = [16, 8], strides = [1, 1]} : vector<16x32xf32> to vector<16x8xf32>
    %169 = vector.extract_strided_slice %164 {offsets = [0, 0], sizes = [16, 8], strides = [1, 1]} : vector<16x32xf32> to vector<16x8xf32>
    %170 = vector.extract_strided_slice %167 {offsets = [0, 0], sizes = [16, 8], strides = [1, 1]} : vector<16x32xf32> to vector<16x8xf32>
    %cst_79 = arith.constant dense<0.000000e+00> : vector<16x16xf32>
    %171 = tpu.matmul %168, %169, %cst_79 {dimension_numbers = #tpu.dot_dimension_numbers<[1], [1], [0], [0], [0, 0, 1, 0], [], []>} : vector<16x8xf32>, vector<16x8xf32>, vector<16x16xf32> -> vector<16x16xf32>
    %172 = arith.addf %171, %0 : vector<16x16xf32>
    %cst_80 = arith.constant dense<0xFF800000> : vector<16xf32>
    %173 = vector.multi_reduction <maximumf>, %172, %cst_80 [1] : vector<16x16xf32> to vector<16xf32>
    %174 = vector.shape_cast %173 : vector<16xf32> to vector<16x1xf32>
    %175 = vector.broadcast %174 : vector<16x1xf32> to vector<16x16xf32>
    %176 = arith.subf %172, %175 : vector<16x16xf32>
    %177 = math.exp %176 : vector<16x16xf32>
    %cst_81 = arith.constant dense<0.000000e+00> : vector<16xf32>
    %178 = vector.multi_reduction <add>, %177, %cst_81 [1] : vector<16x16xf32> to vector<16xf32>
    %179 = vector.shape_cast %178 : vector<16xf32> to vector<16x1xf32>
    %180 = tpu.reciprocal %179 {approx = true} : vector<16x1xf32> -> vector<16x1xf32>
    %181 = vector.broadcast %180 : vector<16x1xf32> to vector<16x16xf32>
    %182 = arith.mulf %177, %181 : vector<16x16xf32>
    %cst_82 = arith.constant dense<0.000000e+00> : vector<16x8xf32>
    %183 = tpu.matmul %182, %170, %cst_82 {dimension_numbers = #tpu.dot_dimension_numbers<[1], [0], [0], [1], [0, 0, 1, 1], [], []>} : vector<16x16xf32>, vector<16x8xf32>, vector<16x8xf32> -> vector<16x8xf32>
    %c0_83 = arith.constant 0 : index
    %c64 = arith.constant 64 : index
    %184 = vector.load %arg11[%c0_83, %c64] : memref<16x128xf32, #tpu.memory_space<vmem>>, vector<16x8xf32>
    tpu.vector_store %arg11[%c0_83, %c64], %183 {strides = array<i32>} : memref<16x128xf32, #tpu.memory_space<vmem>>, vector<16x8xf32>,
    %185 = vector.extract_strided_slice %161 {offsets = [0, 8], sizes = [16, 8], strides = [1, 1]} : vector<16x32xf32> to vector<16x8xf32>
    %186 = vector.extract_strided_slice %164 {offsets = [0, 8], sizes = [16, 8], strides = [1, 1]} : vector<16x32xf32> to vector<16x8xf32>
    %187 = vector.extract_strided_slice %167 {offsets = [0, 8], sizes = [16, 8], strides = [1, 1]} : vector<16x32xf32> to vector<16x8xf32>
    %cst_84 = arith.constant dense<0.000000e+00> : vector<16x16xf32>
    %188 = tpu.matmul %185, %186, %cst_84 {dimension_numbers = #tpu.dot_dimension_numbers<[1], [1], [0], [0], [0, 0, 1, 0], [], []>} : vector<16x8xf32>, vector<16x8xf32>, vector<16x16xf32> -> vector<16x16xf32>
    %189 = arith.addf %188, %0 : vector<16x16xf32>
    %cst_85 = arith.constant dense<0xFF800000> : vector<16xf32>
    %190 = vector.multi_reduction <maximumf>, %189, %cst_85 [1] : vector<16x16xf32> to vector<16xf32>
    %191 = vector.shape_cast %190 : vector<16xf32> to vector<16x1xf32>
    %192 = vector.broadcast %191 : vector<16x1xf32> to vector<16x16xf32>
    %193 = arith.subf %189, %192 : vector<16x16xf32>
    %194 = math.exp %193 : vector<16x16xf32>
    %cst_86 = arith.constant dense<0.000000e+00> : vector<16xf32>
    %195 = vector.multi_reduction <add>, %194, %cst_86 [1] : vector<16x16xf32> to vector<16xf32>
    %196 = vector.shape_cast %195 : vector<16xf32> to vector<16x1xf32>
    %197 = tpu.reciprocal %196 {approx = true} : vector<16x1xf32> -> vector<16x1xf32>
    %198 = vector.broadcast %197 : vector<16x1xf32> to vector<16x16xf32>
    %199 = arith.mulf %194, %198 : vector<16x16xf32>
    %cst_87 = arith.constant dense<0.000000e+00> : vector<16x8xf32>
    %200 = tpu.matmul %199, %187, %cst_87 {dimension_numbers = #tpu.dot_dimension_numbers<[1], [0], [0], [1], [0, 0, 1, 1], [], []>} : vector<16x16xf32>, vector<16x8xf32>, vector<16x8xf32> -> vector<16x8xf32>
    %c0_88 = arith.constant 0 : index
    %c72 = arith.constant 72 : index
    %201 = vector.load %arg11[%c0_88, %c72] : memref<16x128xf32, #tpu.memory_space<vmem>>, vector<16x8xf32>
    tpu.vector_store %arg11[%c0_88, %c72], %200 {strides = array<i32>} : memref<16x128xf32, #tpu.memory_space<vmem>>, vector<16x8xf32>,
    %202 = vector.extract_strided_slice %161 {offsets = [0, 16], sizes = [16, 8], strides = [1, 1]} : vector<16x32xf32> to vector<16x8xf32>
    %203 = vector.extract_strided_slice %164 {offsets = [0, 16], sizes = [16, 8], strides = [1, 1]} : vector<16x32xf32> to vector<16x8xf32>
    %204 = vector.extract_strided_slice %167 {offsets = [0, 16], sizes = [16, 8], strides = [1, 1]} : vector<16x32xf32> to vector<16x8xf32>
    %cst_89 = arith.constant dense<0.000000e+00> : vector<16x16xf32>
    %205 = tpu.matmul %202, %203, %cst_89 {dimension_numbers = #tpu.dot_dimension_numbers<[1], [1], [0], [0], [0, 0, 1, 0], [], []>} : vector<16x8xf32>, vector<16x8xf32>, vector<16x16xf32> -> vector<16x16xf32>
    %206 = arith.addf %205, %0 : vector<16x16xf32>
    %cst_90 = arith.constant dense<0xFF800000> : vector<16xf32>
    %207 = vector.multi_reduction <maximumf>, %206, %cst_90 [1] : vector<16x16xf32> to vector<16xf32>
    %208 = vector.shape_cast %207 : vector<16xf32> to vector<16x1xf32>
    %209 = vector.broadcast %208 : vector<16x1xf32> to vector<16x16xf32>
    %210 = arith.subf %206, %209 : vector<16x16xf32>
    %211 = math.exp %210 : vector<16x16xf32>
    %cst_91 = arith.constant dense<0.000000e+00> : vector<16xf32>
    %212 = vector.multi_reduction <add>, %211, %cst_91 [1] : vector<16x16xf32> to vector<16xf32>
    %213 = vector.shape_cast %212 : vector<16xf32> to vector<16x1xf32>
    %214 = tpu.reciprocal %213 {approx = true} : vector<16x1xf32> -> vector<16x1xf32>
    %215 = vector.broadcast %214 : vector<16x1xf32> to vector<16x16xf32>
    %216 = arith.mulf %211, %215 : vector<16x16xf32>
    %cst_92 = arith.constant dense<0.000000e+00> : vector<16x8xf32>
    %217 = tpu.matmul %216, %204, %cst_92 {dimension_numbers = #tpu.dot_dimension_numbers<[1], [0], [0], [1], [0, 0, 1, 1], [], []>} : vector<16x16xf32>, vector<16x8xf32>, vector<16x8xf32> -> vector<16x8xf32>
    %c0_93 = arith.constant 0 : index
    %c80 = arith.constant 80 : index
    %218 = vector.load %arg11[%c0_93, %c80] : memref<16x128xf32, #tpu.memory_space<vmem>>, vector<16x8xf32>
    tpu.vector_store %arg11[%c0_93, %c80], %217 {strides = array<i32>} : memref<16x128xf32, #tpu.memory_space<vmem>>, vector<16x8xf32>,
    %219 = vector.extract_strided_slice %161 {offsets = [0, 24], sizes = [16, 8], strides = [1, 1]} : vector<16x32xf32> to vector<16x8xf32>
    %220 = vector.extract_strided_slice %164 {offsets = [0, 24], sizes = [16, 8], strides = [1, 1]} : vector<16x32xf32> to vector<16x8xf32>
    %221 = vector.extract_strided_slice %167 {offsets = [0, 24], sizes = [16, 8], strides = [1, 1]} : vector<16x32xf32> to vector<16x8xf32>
    %cst_94 = arith.constant dense<0.000000e+00> : vector<16x16xf32>
    %222 = tpu.matmul %219, %220, %cst_94 {dimension_numbers = #tpu.dot_dimension_numbers<[1], [1], [0], [0], [0, 0, 1, 0], [], []>} : vector<16x8xf32>, vector<16x8xf32>, vector<16x16xf32> -> vector<16x16xf32>
    %223 = arith.addf %222, %0 : vector<16x16xf32>
    %cst_95 = arith.constant dense<0xFF800000> : vector<16xf32>
    %224 = vector.multi_reduction <maximumf>, %223, %cst_95 [1] : vector<16x16xf32> to vector<16xf32>
    %225 = vector.shape_cast %224 : vector<16xf32> to vector<16x1xf32>
    %226 = vector.broadcast %225 : vector<16x1xf32> to vector<16x16xf32>
    %227 = arith.subf %223, %226 : vector<16x16xf32>
    %228 = math.exp %227 : vector<16x16xf32>
    %cst_96 = arith.constant dense<0.000000e+00> : vector<16xf32>
    %229 = vector.multi_reduction <add>, %228, %cst_96 [1] : vector<16x16xf32> to vector<16xf32>
    %230 = vector.shape_cast %229 : vector<16xf32> to vector<16x1xf32>
    %231 = tpu.reciprocal %230 {approx = true} : vector<16x1xf32> -> vector<16x1xf32>
    %232 = vector.broadcast %231 : vector<16x1xf32> to vector<16x16xf32>
    %233 = arith.mulf %228, %232 : vector<16x16xf32>
    %cst_97 = arith.constant dense<0.000000e+00> : vector<16x8xf32>
    %234 = tpu.matmul %233, %221, %cst_97 {dimension_numbers = #tpu.dot_dimension_numbers<[1], [0], [0], [1], [0, 0, 1, 1], [], []>} : vector<16x16xf32>, vector<16x8xf32>, vector<16x8xf32> -> vector<16x8xf32>
    %c0_98 = arith.constant 0 : index
    %c88 = arith.constant 88 : index
    %235 = vector.load %arg11[%c0_98, %c88] : memref<16x128xf32, #tpu.memory_space<vmem>>, vector<16x8xf32>
    tpu.vector_store %arg11[%c0_98, %c88], %234 {strides = array<i32>} : memref<16x128xf32, #tpu.memory_space<vmem>>, vector<16x8xf32>,
    %c3 = arith.constant 3 : index
    %c0_99 = arith.constant 0 : index
    %c0_100 = arith.constant 0 : index
    %236 = vector.load %arg3[%c3, %c0_99, %c0_100] : memref<4x32x32xbf16, #tpu.memory_space<vmem>>, vector<1x32x32xbf16>
    %237 = vector.shape_cast %236 : vector<1x32x32xbf16> to vector<32x32xbf16>
    %cst_101 = arith.constant dense<0.000000e+00> : vector<16x32xf32>
    %238 = tpu.matmul %4, %237, %cst_101 {dimension_numbers = #tpu.dot_dimension_numbers<[1], [0], [0], [1], [0, 0, 1, 1], [], []>} : vector<16x32xbf16>, vector<32x32xbf16>, vector<16x32xf32> -> vector<16x32xf32>
    %c3_102 = arith.constant 3 : index
    %c0_103 = arith.constant 0 : index
    %c0_104 = arith.constant 0 : index
    %239 = vector.load %arg4[%c3_102, %c0_103, %c0_104] : memref<4x32x32xbf16, #tpu.memory_space<vmem>>, vector<1x32x32xbf16>
    %240 = vector.shape_cast %239 : vector<1x32x32xbf16> to vector<32x32xbf16>
    %cst_105 = arith.constant dense<0.000000e+00> : vector<16x32xf32>
    %241 = tpu.matmul %2, %240, %cst_105 {dimension_numbers = #tpu.dot_dimension_numbers<[1], [0], [0], [1], [0, 0, 1, 1], [], []>} : vector<16x32xbf16>, vector<32x32xbf16>, vector<16x32xf32> -> vector<16x32xf32>
    %c3_106 = arith.constant 3 : index
    %c0_107 = arith.constant 0 : index
    %c0_108 = arith.constant 0 : index
    %242 = vector.load %arg5[%c3_106, %c0_107, %c0_108] : memref<4x32x32xbf16, #tpu.memory_space<vmem>>, vector<1x32x32xbf16>
    %243 = vector.shape_cast %242 : vector<1x32x32xbf16> to vector<32x32xbf16>
    %cst_109 = arith.constant dense<0.000000e+00> : vector<16x32xf32>
    %244 = tpu.matmul %2, %243, %cst_109 {dimension_numbers = #tpu.dot_dimension_numbers<[1], [0], [0], [1], [0, 0, 1, 1], [], []>} : vector<16x32xbf16>, vector<32x32xbf16>, vector<16x32xf32> -> vector<16x32xf32>
    %245 = vector.extract_strided_slice %238 {offsets = [0, 0], sizes = [16, 8], strides = [1, 1]} : vector<16x32xf32> to vector<16x8xf32>
    %246 = vector.extract_strided_slice %241 {offsets = [0, 0], sizes = [16, 8], strides = [1, 1]} : vector<16x32xf32> to vector<16x8xf32>
    %247 = vector.extract_strided_slice %244 {offsets = [0, 0], sizes = [16, 8], strides = [1, 1]} : vector<16x32xf32> to vector<16x8xf32>
    %cst_110 = arith.constant dense<0.000000e+00> : vector<16x16xf32>
    %248 = tpu.matmul %245, %246, %cst_110 {dimension_numbers = #tpu.dot_dimension_numbers<[1], [1], [0], [0], [0, 0, 1, 0], [], []>} : vector<16x8xf32>, vector<16x8xf32>, vector<16x16xf32> -> vector<16x16xf32>
    %249 = arith.addf %248, %0 : vector<16x16xf32>
    %cst_111 = arith.constant dense<0xFF800000> : vector<16xf32>
    %250 = vector.multi_reduction <maximumf>, %249, %cst_111 [1] : vector<16x16xf32> to vector<16xf32>
    %251 = vector.shape_cast %250 : vector<16xf32> to vector<16x1xf32>
    %252 = vector.broadcast %251 : vector<16x1xf32> to vector<16x16xf32>
    %253 = arith.subf %249, %252 : vector<16x16xf32>
    %254 = math.exp %253 : vector<16x16xf32>
    %cst_112 = arith.constant dense<0.000000e+00> : vector<16xf32>
    %255 = vector.multi_reduction <add>, %254, %cst_112 [1] : vector<16x16xf32> to vector<16xf32>
    %256 = vector.shape_cast %255 : vector<16xf32> to vector<16x1xf32>
    %257 = tpu.reciprocal %256 {approx = true} : vector<16x1xf32> -> vector<16x1xf32>
    %258 = vector.broadcast %257 : vector<16x1xf32> to vector<16x16xf32>
    %259 = arith.mulf %254, %258 : vector<16x16xf32>
    %cst_113 = arith.constant dense<0.000000e+00> : vector<16x8xf32>
    %260 = tpu.matmul %259, %247, %cst_113 {dimension_numbers = #tpu.dot_dimension_numbers<[1], [0], [0], [1], [0, 0, 1, 1], [], []>} : vector<16x16xf32>, vector<16x8xf32>, vector<16x8xf32> -> vector<16x8xf32>
    %c0_114 = arith.constant 0 : index
    %c96 = arith.constant 96 : index
    %261 = vector.load %arg11[%c0_114, %c96] : memref<16x128xf32, #tpu.memory_space<vmem>>, vector<16x8xf32>
    tpu.vector_store %arg11[%c0_114, %c96], %260 {strides = array<i32>} : memref<16x128xf32, #tpu.memory_space<vmem>>, vector<16x8xf32>,
    %262 = vector.extract_strided_slice %238 {offsets = [0, 8], sizes = [16, 8], strides = [1, 1]} : vector<16x32xf32> to vector<16x8xf32>
    %263 = vector.extract_strided_slice %241 {offsets = [0, 8], sizes = [16, 8], strides = [1, 1]} : vector<16x32xf32> to vector<16x8xf32>
    %264 = vector.extract_strided_slice %244 {offsets = [0, 8], sizes = [16, 8], strides = [1, 1]} : vector<16x32xf32> to vector<16x8xf32>
    %cst_115 = arith.constant dense<0.000000e+00> : vector<16x16xf32>
    %265 = tpu.matmul %262, %263, %cst_115 {dimension_numbers = #tpu.dot_dimension_numbers<[1], [1], [0], [0], [0, 0, 1, 0], [], []>} : vector<16x8xf32>, vector<16x8xf32>, vector<16x16xf32> -> vector<16x16xf32>
    %266 = arith.addf %265, %0 : vector<16x16xf32>
    %cst_116 = arith.constant dense<0xFF800000> : vector<16xf32>
    %267 = vector.multi_reduction <maximumf>, %266, %cst_116 [1] : vector<16x16xf32> to vector<16xf32>
    %268 = vector.shape_cast %267 : vector<16xf32> to vector<16x1xf32>
    %269 = vector.broadcast %268 : vector<16x1xf32> to vector<16x16xf32>
    %270 = arith.subf %266, %269 : vector<16x16xf32>
    %271 = math.exp %270 : vector<16x16xf32>
    %cst_117 = arith.constant dense<0.000000e+00> : vector<16xf32>
    %272 = vector.multi_reduction <add>, %271, %cst_117 [1] : vector<16x16xf32> to vector<16xf32>
    %273 = vector.shape_cast %272 : vector<16xf32> to vector<16x1xf32>
    %274 = tpu.reciprocal %273 {approx = true} : vector<16x1xf32> -> vector<16x1xf32>
    %275 = vector.broadcast %274 : vector<16x1xf32> to vector<16x16xf32>
    %276 = arith.mulf %271, %275 : vector<16x16xf32>
    %cst_118 = arith.constant dense<0.000000e+00> : vector<16x8xf32>
    %277 = tpu.matmul %276, %264, %cst_118 {dimension_numbers = #tpu.dot_dimension_numbers<[1], [0], [0], [1], [0, 0, 1, 1], [], []>} : vector<16x16xf32>, vector<16x8xf32>, vector<16x8xf32> -> vector<16x8xf32>
    %c0_119 = arith.constant 0 : index
    %c104 = arith.constant 104 : index
    %278 = vector.load %arg11[%c0_119, %c104] : memref<16x128xf32, #tpu.memory_space<vmem>>, vector<16x8xf32>
    tpu.vector_store %arg11[%c0_119, %c104], %277 {strides = array<i32>} : memref<16x128xf32, #tpu.memory_space<vmem>>, vector<16x8xf32>,
    %279 = vector.extract_strided_slice %238 {offsets = [0, 16], sizes = [16, 8], strides = [1, 1]} : vector<16x32xf32> to vector<16x8xf32>
    %280 = vector.extract_strided_slice %241 {offsets = [0, 16], sizes = [16, 8], strides = [1, 1]} : vector<16x32xf32> to vector<16x8xf32>
    %281 = vector.extract_strided_slice %244 {offsets = [0, 16], sizes = [16, 8], strides = [1, 1]} : vector<16x32xf32> to vector<16x8xf32>
    %cst_120 = arith.constant dense<0.000000e+00> : vector<16x16xf32>
    %282 = tpu.matmul %279, %280, %cst_120 {dimension_numbers = #tpu.dot_dimension_numbers<[1], [1], [0], [0], [0, 0, 1, 0], [], []>} : vector<16x8xf32>, vector<16x8xf32>, vector<16x16xf32> -> vector<16x16xf32>
    %283 = arith.addf %282, %0 : vector<16x16xf32>
    %cst_121 = arith.constant dense<0xFF800000> : vector<16xf32>
    %284 = vector.multi_reduction <maximumf>, %283, %cst_121 [1] : vector<16x16xf32> to vector<16xf32>
    %285 = vector.shape_cast %284 : vector<16xf32> to vector<16x1xf32>
    %286 = vector.broadcast %285 : vector<16x1xf32> to vector<16x16xf32>
    %287 = arith.subf %283, %286 : vector<16x16xf32>
    %288 = math.exp %287 : vector<16x16xf32>
    %cst_122 = arith.constant dense<0.000000e+00> : vector<16xf32>
    %289 = vector.multi_reduction <add>, %288, %cst_122 [1] : vector<16x16xf32> to vector<16xf32>
    %290 = vector.shape_cast %289 : vector<16xf32> to vector<16x1xf32>
    %291 = tpu.reciprocal %290 {approx = true} : vector<16x1xf32> -> vector<16x1xf32>
    %292 = vector.broadcast %291 : vector<16x1xf32> to vector<16x16xf32>
    %293 = arith.mulf %288, %292 : vector<16x16xf32>
    %cst_123 = arith.constant dense<0.000000e+00> : vector<16x8xf32>
    %294 = tpu.matmul %293, %281, %cst_123 {dimension_numbers = #tpu.dot_dimension_numbers<[1], [0], [0], [1], [0, 0, 1, 1], [], []>} : vector<16x16xf32>, vector<16x8xf32>, vector<16x8xf32> -> vector<16x8xf32>
    %c0_124 = arith.constant 0 : index
    %c112 = arith.constant 112 : index
    %295 = vector.load %arg11[%c0_124, %c112] : memref<16x128xf32, #tpu.memory_space<vmem>>, vector<16x8xf32>
    tpu.vector_store %arg11[%c0_124, %c112], %294 {strides = array<i32>} : memref<16x128xf32, #tpu.memory_space<vmem>>, vector<16x8xf32>,
    %296 = vector.extract_strided_slice %238 {offsets = [0, 24], sizes = [16, 8], strides = [1, 1]} : vector<16x32xf32> to vector<16x8xf32>
    %297 = vector.extract_strided_slice %241 {offsets = [0, 24], sizes = [16, 8], strides = [1, 1]} : vector<16x32xf32> to vector<16x8xf32>
    %298 = vector.extract_strided_slice %244 {offsets = [0, 24], sizes = [16, 8], strides = [1, 1]} : vector<16x32xf32> to vector<16x8xf32>
    %cst_125 = arith.constant dense<0.000000e+00> : vector<16x16xf32>
    %299 = tpu.matmul %296, %297, %cst_125 {dimension_numbers = #tpu.dot_dimension_numbers<[1], [1], [0], [0], [0, 0, 1, 0], [], []>} : vector<16x8xf32>, vector<16x8xf32>, vector<16x16xf32> -> vector<16x16xf32>
    %300 = arith.addf %299, %0 : vector<16x16xf32>
    %cst_126 = arith.constant dense<0xFF800000> : vector<16xf32>
    %301 = vector.multi_reduction <maximumf>, %300, %cst_126 [1] : vector<16x16xf32> to vector<16xf32>
    %302 = vector.shape_cast %301 : vector<16xf32> to vector<16x1xf32>
    %303 = vector.broadcast %302 : vector<16x1xf32> to vector<16x16xf32>
    %304 = arith.subf %300, %303 : vector<16x16xf32>
    %305 = math.exp %304 : vector<16x16xf32>
    %cst_127 = arith.constant dense<0.000000e+00> : vector<16xf32>
    %306 = vector.multi_reduction <add>, %305, %cst_127 [1] : vector<16x16xf32> to vector<16xf32>
    %307 = vector.shape_cast %306 : vector<16xf32> to vector<16x1xf32>
    %308 = tpu.reciprocal %307 {approx = true} : vector<16x1xf32> -> vector<16x1xf32>
    %309 = vector.broadcast %308 : vector<16x1xf32> to vector<16x16xf32>
    %310 = arith.mulf %305, %309 : vector<16x16xf32>
    %cst_128 = arith.constant dense<0.000000e+00> : vector<16x8xf32>
    %311 = tpu.matmul %310, %298, %cst_128 {dimension_numbers = #tpu.dot_dimension_numbers<[1], [0], [0], [1], [0, 0, 1, 1], [], []>} : vector<16x16xf32>, vector<16x8xf32>, vector<16x8xf32> -> vector<16x8xf32>
    %c0_129 = arith.constant 0 : index
    %c120 = arith.constant 120 : index
    %312 = vector.load %arg11[%c0_129, %c120] : memref<16x128xf32, #tpu.memory_space<vmem>>, vector<16x8xf32>
    tpu.vector_store %arg11[%c0_129, %c120], %311 {strides = array<i32>} : memref<16x128xf32, #tpu.memory_space<vmem>>, vector<16x8xf32>,
    %c0_130 = arith.constant 0 : index
    %c0_131 = arith.constant 0 : index
    %313 = vector.load %arg11[%c0_130, %c0_131] : memref<16x128xf32, #tpu.memory_space<vmem>>, vector<16x128xf32>
    %314 = arith.truncf %313 : vector<16x128xf32> to vector<16x128xbf16>
    %c0_132 = arith.constant 0 : index
    %c0_133 = arith.constant 0 : index
    %c0_134 = arith.constant 0 : index
    %315 = vector.load %arg6[%c0_132, %c0_133, %c0_134] : memref<2x128x32xbf16, #tpu.memory_space<vmem>>, vector<1x128x32xbf16>
    %316 = vector.shape_cast %315 : vector<1x128x32xbf16> to vector<128x32xbf16>
    %cst_135 = arith.constant dense<0.000000e+00> : vector<16x32xf32>
    %317 = tpu.matmul %314, %316, %cst_135 {dimension_numbers = #tpu.dot_dimension_numbers<[1], [0], [0], [1], [0, 0, 1, 1], [], []>} : vector<16x128xbf16>, vector<128x32xbf16>, vector<16x32xf32> -> vector<16x32xf32>
    %c0_136 = arith.constant 0 : index
    %c0_137 = arith.constant 0 : index
    %c0_138 = arith.constant 0 : index
    %318 = vector.load %arg7[%c0_136, %c0_137, %c0_138] : memref<2x128x32xbf16, #tpu.memory_space<vmem>>, vector<1x128x32xbf16>
    %319 = vector.shape_cast %318 : vector<1x128x32xbf16> to vector<128x32xbf16>
    %cst_139 = arith.constant dense<0.000000e+00> : vector<16x32xf32>
    %320 = tpu.matmul %314, %319, %cst_139 {dimension_numbers = #tpu.dot_dimension_numbers<[1], [0], [0], [1], [0, 0, 1, 1], [], []>} : vector<16x128xbf16>, vector<128x32xbf16>, vector<16x32xf32> -> vector<16x32xf32>
    %c0_140 = arith.constant 0 : index
    %c0_141 = arith.constant 0 : index
    %c0_142 = arith.constant 0 : index
    %321 = vector.load %arg8[%c0_140, %c0_141, %c0_142] : memref<2x128x32xbf16, #tpu.memory_space<vmem>>, vector<1x128x32xbf16>
    %322 = vector.shape_cast %321 : vector<1x128x32xbf16> to vector<128x32xbf16>
    %cst_143 = arith.constant dense<0.000000e+00> : vector<16x32xf32>
    %323 = tpu.matmul %314, %322, %cst_143 {dimension_numbers = #tpu.dot_dimension_numbers<[1], [0], [0], [1], [0, 0, 1, 1], [], []>} : vector<16x128xbf16>, vector<128x32xbf16>, vector<16x32xf32> -> vector<16x32xf32>
    %324 = vector.extract_strided_slice %317 {offsets = [0, 0], sizes = [16, 8], strides = [1, 1]} : vector<16x32xf32> to vector<16x8xf32>
    %325 = vector.extract_strided_slice %320 {offsets = [0, 0], sizes = [16, 8], strides = [1, 1]} : vector<16x32xf32> to vector<16x8xf32>
    %326 = vector.extract_strided_slice %323 {offsets = [0, 0], sizes = [16, 8], strides = [1, 1]} : vector<16x32xf32> to vector<16x8xf32>
    %cst_144 = arith.constant dense<0.000000e+00> : vector<16x16xf32>
    %327 = tpu.matmul %324, %325, %cst_144 {dimension_numbers = #tpu.dot_dimension_numbers<[1], [1], [0], [0], [0, 0, 1, 0], [], []>} : vector<16x8xf32>, vector<16x8xf32>, vector<16x16xf32> -> vector<16x16xf32>
    %328 = arith.addf %327, %0 : vector<16x16xf32>
    %cst_145 = arith.constant dense<0xFF800000> : vector<16xf32>
    %329 = vector.multi_reduction <maximumf>, %328, %cst_145 [1] : vector<16x16xf32> to vector<16xf32>
    %330 = vector.shape_cast %329 : vector<16xf32> to vector<16x1xf32>
    %331 = vector.broadcast %330 : vector<16x1xf32> to vector<16x16xf32>
    %332 = arith.subf %328, %331 : vector<16x16xf32>
    %333 = math.exp %332 : vector<16x16xf32>
    %cst_146 = arith.constant dense<0.000000e+00> : vector<16xf32>
    %334 = vector.multi_reduction <add>, %333, %cst_146 [1] : vector<16x16xf32> to vector<16xf32>
    %335 = vector.shape_cast %334 : vector<16xf32> to vector<16x1xf32>
    %336 = tpu.reciprocal %335 {approx = true} : vector<16x1xf32> -> vector<16x1xf32>
    %337 = vector.broadcast %336 : vector<16x1xf32> to vector<16x16xf32>
    %338 = arith.mulf %333, %337 : vector<16x16xf32>
    %cst_147 = arith.constant dense<0.000000e+00> : vector<16x8xf32>
    %339 = tpu.matmul %338, %326, %cst_147 {dimension_numbers = #tpu.dot_dimension_numbers<[1], [0], [0], [1], [0, 0, 1, 1], [], []>} : vector<16x16xf32>, vector<16x8xf32>, vector<16x8xf32> -> vector<16x8xf32>
    %c0_148 = arith.constant 0 : index
    %c0_149 = arith.constant 0 : index
    %340 = vector.load %arg12[%c0_148, %c0_149] : memref<16x64xf32, #tpu.memory_space<vmem>>, vector<16x8xf32>
    tpu.vector_store %arg12[%c0_148, %c0_149], %339 {strides = array<i32>} : memref<16x64xf32, #tpu.memory_space<vmem>>, vector<16x8xf32>,
    %341 = vector.extract_strided_slice %317 {offsets = [0, 8], sizes = [16, 8], strides = [1, 1]} : vector<16x32xf32> to vector<16x8xf32>
    %342 = vector.extract_strided_slice %320 {offsets = [0, 8], sizes = [16, 8], strides = [1, 1]} : vector<16x32xf32> to vector<16x8xf32>
    %343 = vector.extract_strided_slice %323 {offsets = [0, 8], sizes = [16, 8], strides = [1, 1]} : vector<16x32xf32> to vector<16x8xf32>
    %cst_150 = arith.constant dense<0.000000e+00> : vector<16x16xf32>
    %344 = tpu.matmul %341, %342, %cst_150 {dimension_numbers = #tpu.dot_dimension_numbers<[1], [1], [0], [0], [0, 0, 1, 0], [], []>} : vector<16x8xf32>, vector<16x8xf32>, vector<16x16xf32> -> vector<16x16xf32>
    %345 = arith.addf %344, %0 : vector<16x16xf32>
    %cst_151 = arith.constant dense<0xFF800000> : vector<16xf32>
    %346 = vector.multi_reduction <maximumf>, %345, %cst_151 [1] : vector<16x16xf32> to vector<16xf32>
    %347 = vector.shape_cast %346 : vector<16xf32> to vector<16x1xf32>
    %348 = vector.broadcast %347 : vector<16x1xf32> to vector<16x16xf32>
    %349 = arith.subf %345, %348 : vector<16x16xf32>
    %350 = math.exp %349 : vector<16x16xf32>
    %cst_152 = arith.constant dense<0.000000e+00> : vector<16xf32>
    %351 = vector.multi_reduction <add>, %350, %cst_152 [1] : vector<16x16xf32> to vector<16xf32>
    %352 = vector.shape_cast %351 : vector<16xf32> to vector<16x1xf32>
    %353 = tpu.reciprocal %352 {approx = true} : vector<16x1xf32> -> vector<16x1xf32>
    %354 = vector.broadcast %353 : vector<16x1xf32> to vector<16x16xf32>
    %355 = arith.mulf %350, %354 : vector<16x16xf32>
    %cst_153 = arith.constant dense<0.000000e+00> : vector<16x8xf32>
    %356 = tpu.matmul %355, %343, %cst_153 {dimension_numbers = #tpu.dot_dimension_numbers<[1], [0], [0], [1], [0, 0, 1, 1], [], []>} : vector<16x16xf32>, vector<16x8xf32>, vector<16x8xf32> -> vector<16x8xf32>
    %c0_154 = arith.constant 0 : index
    %c8_155 = arith.constant 8 : index
    %357 = vector.load %arg12[%c0_154, %c8_155] : memref<16x64xf32, #tpu.memory_space<vmem>>, vector<16x8xf32>
    tpu.vector_store %arg12[%c0_154, %c8_155], %356 {strides = array<i32>} : memref<16x64xf32, #tpu.memory_space<vmem>>, vector<16x8xf32>,
    %358 = vector.extract_strided_slice %317 {offsets = [0, 16], sizes = [16, 8], strides = [1, 1]} : vector<16x32xf32> to vector<16x8xf32>
    %359 = vector.extract_strided_slice %320 {offsets = [0, 16], sizes = [16, 8], strides = [1, 1]} : vector<16x32xf32> to vector<16x8xf32>
    %360 = vector.extract_strided_slice %323 {offsets = [0, 16], sizes = [16, 8], strides = [1, 1]} : vector<16x32xf32> to vector<16x8xf32>
    %cst_156 = arith.constant dense<0.000000e+00> : vector<16x16xf32>
    %361 = tpu.matmul %358, %359, %cst_156 {dimension_numbers = #tpu.dot_dimension_numbers<[1], [1], [0], [0], [0, 0, 1, 0], [], []>} : vector<16x8xf32>, vector<16x8xf32>, vector<16x16xf32> -> vector<16x16xf32>
    %362 = arith.addf %361, %0 : vector<16x16xf32>
    %cst_157 = arith.constant dense<0xFF800000> : vector<16xf32>
    %363 = vector.multi_reduction <maximumf>, %362, %cst_157 [1] : vector<16x16xf32> to vector<16xf32>
    %364 = vector.shape_cast %363 : vector<16xf32> to vector<16x1xf32>
    %365 = vector.broadcast %364 : vector<16x1xf32> to vector<16x16xf32>
    %366 = arith.subf %362, %365 : vector<16x16xf32>
    %367 = math.exp %366 : vector<16x16xf32>
    %cst_158 = arith.constant dense<0.000000e+00> : vector<16xf32>
    %368 = vector.multi_reduction <add>, %367, %cst_158 [1] : vector<16x16xf32> to vector<16xf32>
    %369 = vector.shape_cast %368 : vector<16xf32> to vector<16x1xf32>
    %370 = tpu.reciprocal %369 {approx = true} : vector<16x1xf32> -> vector<16x1xf32>
    %371 = vector.broadcast %370 : vector<16x1xf32> to vector<16x16xf32>
    %372 = arith.mulf %367, %371 : vector<16x16xf32>
    %cst_159 = arith.constant dense<0.000000e+00> : vector<16x8xf32>
    %373 = tpu.matmul %372, %360, %cst_159 {dimension_numbers = #tpu.dot_dimension_numbers<[1], [0], [0], [1], [0, 0, 1, 1], [], []>} : vector<16x16xf32>, vector<16x8xf32>, vector<16x8xf32> -> vector<16x8xf32>
    %c0_160 = arith.constant 0 : index
    %c16_161 = arith.constant 16 : index
    %374 = vector.load %arg12[%c0_160, %c16_161] : memref<16x64xf32, #tpu.memory_space<vmem>>, vector<16x8xf32>
    tpu.vector_store %arg12[%c0_160, %c16_161], %373 {strides = array<i32>} : memref<16x64xf32, #tpu.memory_space<vmem>>, vector<16x8xf32>,
    %375 = vector.extract_strided_slice %317 {offsets = [0, 24], sizes = [16, 8], strides = [1, 1]} : vector<16x32xf32> to vector<16x8xf32>
    %376 = vector.extract_strided_slice %320 {offsets = [0, 24], sizes = [16, 8], strides = [1, 1]} : vector<16x32xf32> to vector<16x8xf32>
    %377 = vector.extract_strided_slice %323 {offsets = [0, 24], sizes = [16, 8], strides = [1, 1]} : vector<16x32xf32> to vector<16x8xf32>
    %cst_162 = arith.constant dense<0.000000e+00> : vector<16x16xf32>
    %378 = tpu.matmul %375, %376, %cst_162 {dimension_numbers = #tpu.dot_dimension_numbers<[1], [1], [0], [0], [0, 0, 1, 0], [], []>} : vector<16x8xf32>, vector<16x8xf32>, vector<16x16xf32> -> vector<16x16xf32>
    %379 = arith.addf %378, %0 : vector<16x16xf32>
    %cst_163 = arith.constant dense<0xFF800000> : vector<16xf32>
    %380 = vector.multi_reduction <maximumf>, %379, %cst_163 [1] : vector<16x16xf32> to vector<16xf32>
    %381 = vector.shape_cast %380 : vector<16xf32> to vector<16x1xf32>
    %382 = vector.broadcast %381 : vector<16x1xf32> to vector<16x16xf32>
    %383 = arith.subf %379, %382 : vector<16x16xf32>
    %384 = math.exp %383 : vector<16x16xf32>
    %cst_164 = arith.constant dense<0.000000e+00> : vector<16xf32>
    %385 = vector.multi_reduction <add>, %384, %cst_164 [1] : vector<16x16xf32> to vector<16xf32>
    %386 = vector.shape_cast %385 : vector<16xf32> to vector<16x1xf32>
    %387 = tpu.reciprocal %386 {approx = true} : vector<16x1xf32> -> vector<16x1xf32>
    %388 = vector.broadcast %387 : vector<16x1xf32> to vector<16x16xf32>
    %389 = arith.mulf %384, %388 : vector<16x16xf32>
    %cst_165 = arith.constant dense<0.000000e+00> : vector<16x8xf32>
    %390 = tpu.matmul %389, %377, %cst_165 {dimension_numbers = #tpu.dot_dimension_numbers<[1], [0], [0], [1], [0, 0, 1, 1], [], []>} : vector<16x16xf32>, vector<16x8xf32>, vector<16x8xf32> -> vector<16x8xf32>
    %c0_166 = arith.constant 0 : index
    %c24_167 = arith.constant 24 : index
    %391 = vector.load %arg12[%c0_166, %c24_167] : memref<16x64xf32, #tpu.memory_space<vmem>>, vector<16x8xf32>
    tpu.vector_store %arg12[%c0_166, %c24_167], %390 {strides = array<i32>} : memref<16x64xf32, #tpu.memory_space<vmem>>, vector<16x8xf32>,
    %c1_168 = arith.constant 1 : index
    %c0_169 = arith.constant 0 : index
    %c0_170 = arith.constant 0 : index
    %392 = vector.load %arg6[%c1_168, %c0_169, %c0_170] : memref<2x128x32xbf16, #tpu.memory_space<vmem>>, vector<1x128x32xbf16>
    %393 = vector.shape_cast %392 : vector<1x128x32xbf16> to vector<128x32xbf16>
    %cst_171 = arith.constant dense<0.000000e+00> : vector<16x32xf32>
    %394 = tpu.matmul %314, %393, %cst_171 {dimension_numbers = #tpu.dot_dimension_numbers<[1], [0], [0], [1], [0, 0, 1, 1], [], []>} : vector<16x128xbf16>, vector<128x32xbf16>, vector<16x32xf32> -> vector<16x32xf32>
    %c1_172 = arith.constant 1 : index
    %c0_173 = arith.constant 0 : index
    %c0_174 = arith.constant 0 : index
    %395 = vector.load %arg7[%c1_172, %c0_173, %c0_174] : memref<2x128x32xbf16, #tpu.memory_space<vmem>>, vector<1x128x32xbf16>
    %396 = vector.shape_cast %395 : vector<1x128x32xbf16> to vector<128x32xbf16>
    %cst_175 = arith.constant dense<0.000000e+00> : vector<16x32xf32>
    %397 = tpu.matmul %314, %396, %cst_175 {dimension_numbers = #tpu.dot_dimension_numbers<[1], [0], [0], [1], [0, 0, 1, 1], [], []>} : vector<16x128xbf16>, vector<128x32xbf16>, vector<16x32xf32> -> vector<16x32xf32>
    %c1_176 = arith.constant 1 : index
    %c0_177 = arith.constant 0 : index
    %c0_178 = arith.constant 0 : index
    %398 = vector.load %arg8[%c1_176, %c0_177, %c0_178] : memref<2x128x32xbf16, #tpu.memory_space<vmem>>, vector<1x128x32xbf16>
    %399 = vector.shape_cast %398 : vector<1x128x32xbf16> to vector<128x32xbf16>
    %cst_179 = arith.constant dense<0.000000e+00> : vector<16x32xf32>
    %400 = tpu.matmul %314, %399, %cst_179 {dimension_numbers = #tpu.dot_dimension_numbers<[1], [0], [0], [1], [0, 0, 1, 1], [], []>} : vector<16x128xbf16>, vector<128x32xbf16>, vector<16x32xf32> -> vector<16x32xf32>
    %401 = vector.extract_strided_slice %394 {offsets = [0, 0], sizes = [16, 8], strides = [1, 1]} : vector<16x32xf32> to vector<16x8xf32>
    %402 = vector.extract_strided_slice %397 {offsets = [0, 0], sizes = [16, 8], strides = [1, 1]} : vector<16x32xf32> to vector<16x8xf32>
    %403 = vector.extract_strided_slice %400 {offsets = [0, 0], sizes = [16, 8], strides = [1, 1]} : vector<16x32xf32> to vector<16x8xf32>
    %cst_180 = arith.constant dense<0.000000e+00> : vector<16x16xf32>
    %404 = tpu.matmul %401, %402, %cst_180 {dimension_numbers = #tpu.dot_dimension_numbers<[1], [1], [0], [0], [0, 0, 1, 0], [], []>} : vector<16x8xf32>, vector<16x8xf32>, vector<16x16xf32> -> vector<16x16xf32>
    %405 = arith.addf %404, %0 : vector<16x16xf32>
    %cst_181 = arith.constant dense<0xFF800000> : vector<16xf32>
    %406 = vector.multi_reduction <maximumf>, %405, %cst_181 [1] : vector<16x16xf32> to vector<16xf32>
    %407 = vector.shape_cast %406 : vector<16xf32> to vector<16x1xf32>
    %408 = vector.broadcast %407 : vector<16x1xf32> to vector<16x16xf32>
    %409 = arith.subf %405, %408 : vector<16x16xf32>
    %410 = math.exp %409 : vector<16x16xf32>
    %cst_182 = arith.constant dense<0.000000e+00> : vector<16xf32>
    %411 = vector.multi_reduction <add>, %410, %cst_182 [1] : vector<16x16xf32> to vector<16xf32>
    %412 = vector.shape_cast %411 : vector<16xf32> to vector<16x1xf32>
    %413 = tpu.reciprocal %412 {approx = true} : vector<16x1xf32> -> vector<16x1xf32>
    %414 = vector.broadcast %413 : vector<16x1xf32> to vector<16x16xf32>
    %415 = arith.mulf %410, %414 : vector<16x16xf32>
    %cst_183 = arith.constant dense<0.000000e+00> : vector<16x8xf32>
    %416 = tpu.matmul %415, %403, %cst_183 {dimension_numbers = #tpu.dot_dimension_numbers<[1], [0], [0], [1], [0, 0, 1, 1], [], []>} : vector<16x16xf32>, vector<16x8xf32>, vector<16x8xf32> -> vector<16x8xf32>
    %c0_184 = arith.constant 0 : index
    %c32_185 = arith.constant 32 : index
    %417 = vector.load %arg12[%c0_184, %c32_185] : memref<16x64xf32, #tpu.memory_space<vmem>>, vector<16x8xf32>
    tpu.vector_store %arg12[%c0_184, %c32_185], %416 {strides = array<i32>} : memref<16x64xf32, #tpu.memory_space<vmem>>, vector<16x8xf32>,
    %418 = vector.extract_strided_slice %394 {offsets = [0, 8], sizes = [16, 8], strides = [1, 1]} : vector<16x32xf32> to vector<16x8xf32>
    %419 = vector.extract_strided_slice %397 {offsets = [0, 8], sizes = [16, 8], strides = [1, 1]} : vector<16x32xf32> to vector<16x8xf32>
    %420 = vector.extract_strided_slice %400 {offsets = [0, 8], sizes = [16, 8], strides = [1, 1]} : vector<16x32xf32> to vector<16x8xf32>
    %cst_186 = arith.constant dense<0.000000e+00> : vector<16x16xf32>
    %421 = tpu.matmul %418, %419, %cst_186 {dimension_numbers = #tpu.dot_dimension_numbers<[1], [1], [0], [0], [0, 0, 1, 0], [], []>} : vector<16x8xf32>, vector<16x8xf32>, vector<16x16xf32> -> vector<16x16xf32>
    %422 = arith.addf %421, %0 : vector<16x16xf32>
    %cst_187 = arith.constant dense<0xFF800000> : vector<16xf32>
    %423 = vector.multi_reduction <maximumf>, %422, %cst_187 [1] : vector<16x16xf32> to vector<16xf32>
    %424 = vector.shape_cast %423 : vector<16xf32> to vector<16x1xf32>
    %425 = vector.broadcast %424 : vector<16x1xf32> to vector<16x16xf32>
    %426 = arith.subf %422, %425 : vector<16x16xf32>
    %427 = math.exp %426 : vector<16x16xf32>
    %cst_188 = arith.constant dense<0.000000e+00> : vector<16xf32>
    %428 = vector.multi_reduction <add>, %427, %cst_188 [1] : vector<16x16xf32> to vector<16xf32>
    %429 = vector.shape_cast %428 : vector<16xf32> to vector<16x1xf32>
    %430 = tpu.reciprocal %429 {approx = true} : vector<16x1xf32> -> vector<16x1xf32>
    %431 = vector.broadcast %430 : vector<16x1xf32> to vector<16x16xf32>
    %432 = arith.mulf %427, %431 : vector<16x16xf32>
    %cst_189 = arith.constant dense<0.000000e+00> : vector<16x8xf32>
    %433 = tpu.matmul %432, %420, %cst_189 {dimension_numbers = #tpu.dot_dimension_numbers<[1], [0], [0], [1], [0, 0, 1, 1], [], []>} : vector<16x16xf32>, vector<16x8xf32>, vector<16x8xf32> -> vector<16x8xf32>
    %c0_190 = arith.constant 0 : index
    %c40_191 = arith.constant 40 : index
    %434 = vector.load %arg12[%c0_190, %c40_191] : memref<16x64xf32, #tpu.memory_space<vmem>>, vector<16x8xf32>
    tpu.vector_store %arg12[%c0_190, %c40_191], %433 {strides = array<i32>} : memref<16x64xf32, #tpu.memory_space<vmem>>, vector<16x8xf32>,
    %435 = vector.extract_strided_slice %394 {offsets = [0, 16], sizes = [16, 8], strides = [1, 1]} : vector<16x32xf32> to vector<16x8xf32>
    %436 = vector.extract_strided_slice %397 {offsets = [0, 16], sizes = [16, 8], strides = [1, 1]} : vector<16x32xf32> to vector<16x8xf32>
    %437 = vector.extract_strided_slice %400 {offsets = [0, 16], sizes = [16, 8], strides = [1, 1]} : vector<16x32xf32> to vector<16x8xf32>
    %cst_192 = arith.constant dense<0.000000e+00> : vector<16x16xf32>
    %438 = tpu.matmul %435, %436, %cst_192 {dimension_numbers = #tpu.dot_dimension_numbers<[1], [1], [0], [0], [0, 0, 1, 0], [], []>} : vector<16x8xf32>, vector<16x8xf32>, vector<16x16xf32> -> vector<16x16xf32>
    %439 = arith.addf %438, %0 : vector<16x16xf32>
    %cst_193 = arith.constant dense<0xFF800000> : vector<16xf32>
    %440 = vector.multi_reduction <maximumf>, %439, %cst_193 [1] : vector<16x16xf32> to vector<16xf32>
    %441 = vector.shape_cast %440 : vector<16xf32> to vector<16x1xf32>
    %442 = vector.broadcast %441 : vector<16x1xf32> to vector<16x16xf32>
    %443 = arith.subf %439, %442 : vector<16x16xf32>
    %444 = math.exp %443 : vector<16x16xf32>
    %cst_194 = arith.constant dense<0.000000e+00> : vector<16xf32>
    %445 = vector.multi_reduction <add>, %444, %cst_194 [1] : vector<16x16xf32> to vector<16xf32>
    %446 = vector.shape_cast %445 : vector<16xf32> to vector<16x1xf32>
    %447 = tpu.reciprocal %446 {approx = true} : vector<16x1xf32> -> vector<16x1xf32>
    %448 = vector.broadcast %447 : vector<16x1xf32> to vector<16x16xf32>
    %449 = arith.mulf %444, %448 : vector<16x16xf32>
    %cst_195 = arith.constant dense<0.000000e+00> : vector<16x8xf32>
    %450 = tpu.matmul %449, %437, %cst_195 {dimension_numbers = #tpu.dot_dimension_numbers<[1], [0], [0], [1], [0, 0, 1, 1], [], []>} : vector<16x16xf32>, vector<16x8xf32>, vector<16x8xf32> -> vector<16x8xf32>
    %c0_196 = arith.constant 0 : index
    %c48_197 = arith.constant 48 : index
    %451 = vector.load %arg12[%c0_196, %c48_197] : memref<16x64xf32, #tpu.memory_space<vmem>>, vector<16x8xf32>
    tpu.vector_store %arg12[%c0_196, %c48_197], %450 {strides = array<i32>} : memref<16x64xf32, #tpu.memory_space<vmem>>, vector<16x8xf32>,
    %452 = vector.extract_strided_slice %394 {offsets = [0, 24], sizes = [16, 8], strides = [1, 1]} : vector<16x32xf32> to vector<16x8xf32>
    %453 = vector.extract_strided_slice %397 {offsets = [0, 24], sizes = [16, 8], strides = [1, 1]} : vector<16x32xf32> to vector<16x8xf32>
    %454 = vector.extract_strided_slice %400 {offsets = [0, 24], sizes = [16, 8], strides = [1, 1]} : vector<16x32xf32> to vector<16x8xf32>
    %cst_198 = arith.constant dense<0.000000e+00> : vector<16x16xf32>
    %455 = tpu.matmul %452, %453, %cst_198 {dimension_numbers = #tpu.dot_dimension_numbers<[1], [1], [0], [0], [0, 0, 1, 0], [], []>} : vector<16x8xf32>, vector<16x8xf32>, vector<16x16xf32> -> vector<16x16xf32>
    %456 = arith.addf %455, %0 : vector<16x16xf32>
    %cst_199 = arith.constant dense<0xFF800000> : vector<16xf32>
    %457 = vector.multi_reduction <maximumf>, %456, %cst_199 [1] : vector<16x16xf32> to vector<16xf32>
    %458 = vector.shape_cast %457 : vector<16xf32> to vector<16x1xf32>
    %459 = vector.broadcast %458 : vector<16x1xf32> to vector<16x16xf32>
    %460 = arith.subf %456, %459 : vector<16x16xf32>
    %461 = math.exp %460 : vector<16x16xf32>
    %cst_200 = arith.constant dense<0.000000e+00> : vector<16xf32>
    %462 = vector.multi_reduction <add>, %461, %cst_200 [1] : vector<16x16xf32> to vector<16xf32>
    %463 = vector.shape_cast %462 : vector<16xf32> to vector<16x1xf32>
    %464 = tpu.reciprocal %463 {approx = true} : vector<16x1xf32> -> vector<16x1xf32>
    %465 = vector.broadcast %464 : vector<16x1xf32> to vector<16x16xf32>
    %466 = arith.mulf %461, %465 : vector<16x16xf32>
    %cst_201 = arith.constant dense<0.000000e+00> : vector<16x8xf32>
    %467 = tpu.matmul %466, %454, %cst_201 {dimension_numbers = #tpu.dot_dimension_numbers<[1], [0], [0], [1], [0, 0, 1, 1], [], []>} : vector<16x16xf32>, vector<16x8xf32>, vector<16x8xf32> -> vector<16x8xf32>
    %c0_202 = arith.constant 0 : index
    %c56_203 = arith.constant 56 : index
    %468 = vector.load %arg12[%c0_202, %c56_203] : memref<16x64xf32, #tpu.memory_space<vmem>>, vector<16x8xf32>
    tpu.vector_store %arg12[%c0_202, %c56_203], %467 {strides = array<i32>} : memref<16x64xf32, #tpu.memory_space<vmem>>, vector<16x8xf32>,
    %c0_204 = arith.constant 0 : index
    %c0_205 = arith.constant 0 : index
    %469 = vector.load %arg12[%c0_204, %c0_205] : memref<16x64xf32, #tpu.memory_space<vmem>>, vector<16x64xf32>
    %470 = arith.truncf %469 : vector<16x64xf32> to vector<16x64xbf16>
    %c0_206 = arith.constant 0 : index
    %c0_207 = arith.constant 0 : index
    %471 = vector.load %arg9[%c0_206, %c0_207] : memref<64x64xbf16, #tpu.memory_space<vmem>>, vector<64x64xbf16>
    %cst_208 = arith.constant dense<0.000000e+00> : vector<16x64xf32>
    %472 = tpu.matmul %470, %471, %cst_208 {dimension_numbers = #tpu.dot_dimension_numbers<[1], [0], [0], [1], [0, 0, 1, 1], [], []>} : vector<16x64xbf16>, vector<64x64xbf16>, vector<16x64xf32> -> vector<16x64xf32>
    %c0_209 = arith.constant 0 : index
    %c0_210 = arith.constant 0 : index
    %473 = vector.load %arg10[%c0_209, %c0_210] : memref<16x64xf32, #tpu.memory_space<vmem>>, vector<16x64xf32>
    tpu.vector_store %arg10[%c0_209, %c0_210], %472 {strides = array<i32>} : memref<16x64xf32, #tpu.memory_space<vmem>>, vector<16x64xf32>,
    return
  }
}

</mosaic_0001>

<llo_original>
// kernel: combined_mha_forward.1
$region0: #{combined_mha_forward.1}
  #allocation0 [shape = 'u32[]', space=smem, size = 0x4, offset = 0x4, fixed_abs, tag = 'smem constant byte address 0x4 - core index']
  #allocation1 [shape = 'u32[72,128]{1,0:T(1,128)}', space=vmem, size = 0x9000, scoped, tag = 'internal scratch']
  #allocation2 [shape = 'f32[16,128]{1,0:T(8,128)}', space=vmem, size = 0x2000, scoped, tag = 'scratch operand']
  #allocation3 [shape = 'f32[16,64]{1,0:T(8,128)}', space=vmem, size = 0x2000, scoped, tag = 'scratch operand']
  %s0 = inlined_call_operand.vmem [shape: f32[16,32], index: 0, kind: input, shape index: {}]
  %s1 = inlined_call_operand.vmem [shape: f32[16,32], index: 1, kind: input, shape index: {}]
  %s2 = inlined_call_operand.vmem [shape: f32[16,16], index: 2, kind: input, shape index: {}]
  %s3 = inlined_call_operand.vmem [shape: bf16[4,32,32], index: 3, kind: input, shape index: {}]
  %s4 = inlined_call_operand.vmem [shape: bf16[4,32,32], index: 4, kind: input, shape index: {}]
  %s5 = inlined_call_operand.vmem [shape: bf16[4,32,32], index: 5, kind: input, shape index: {}]
  %s6 = inlined_call_operand.vmem [shape: bf16[2,128,32], index: 6, kind: input, shape index: {}]
  %s7 = inlined_call_operand.vmem [shape: bf16[2,128,32], index: 7, kind: input, shape index: {}]
  %s8 = inlined_call_operand.vmem [shape: bf16[2,128,32], index: 8, kind: input, shape index: {}]
  %s9 = inlined_call_operand.vmem [shape: bf16[64,64], index: 9, kind: input, shape index: {}]
  %s10 = inlined_call_operand.vmem [shape: f32[16,64], index: 10, kind: output, shape index: {}]
  %s11 = sld [smem:[#allocation0]]
  $region50: #{combined_mha_forward.1} parent=0
    _
  %s13 = ssub.s32 1, %s11
  %s14 = scalar_select 0, %s13, %s11
  // Predicated region
  $region2: #{combined_mha_forward.1} parent=0 // pred_check
    _
  $region3: #{combined_mha_forward.1} parent=0 // pred_check_branch
    %16 = sbr.rel (0) target = $region5
  $region4: #{combined_mha_forward.1} parent=0 // pred_region
    _
  $region5: #{combined_mha_forward.1} parent=0 // pred_fallthru
    _
  // Predicated region
  $region6: #{combined_mha_forward.1} parent=0 // pred_check
    _
  $region7: #{combined_mha_forward.1} parent=0 // pred_check_branch
    %18 = sbr.rel (0) target = $region9
  $region8: #{combined_mha_forward.1} parent=0 // pred_region
    _
  $region9: #{combined_mha_forward.1} parent=0 // pred_fallthru
    _
  // Predicated region
  $region10: #{combined_mha_forward.1} parent=0 // pred_check
    _
  $region11: #{combined_mha_forward.1} parent=0 // pred_check_branch
    %20 = sbr.rel (0) target = $region13
  $region12: #{combined_mha_forward.1} parent=0 // pred_region
    _
  $region13: #{combined_mha_forward.1} parent=0 // pred_fallthru
    _
  // Predicated region
  $region14: #{combined_mha_forward.1} parent=0 // pred_check
    _
  $region15: #{combined_mha_forward.1} parent=0 // pred_check_branch
    %22 = sbr.rel (0) target = $region17
  $region16: #{combined_mha_forward.1} parent=0 // pred_region
    _
  $region17: #{combined_mha_forward.1} parent=0 // pred_fallthru
    _
  // Predicated region
  $region18: #{combined_mha_forward.1} parent=0 // pred_check
    _
  $region19: #{combined_mha_forward.1} parent=0 // pred_check_branch
    %24 = sbr.rel (0) target = $region21
  $region20: #{combined_mha_forward.1} parent=0 // pred_region
    _
  $region21: #{combined_mha_forward.1} parent=0 // pred_fallthru
    _
  // Predicated region
  $region22: #{combined_mha_forward.1} parent=0 // pred_check
    _
  $region23: #{combined_mha_forward.1} parent=0 // pred_check_branch
    %26 = sbr.rel (0) target = $region25
  $region24: #{combined_mha_forward.1} parent=0 // pred_region
    _
  $region25: #{combined_mha_forward.1} parent=0 // pred_fallthru
    _
  // Predicated region
  $region26: #{combined_mha_forward.1} parent=0 // pred_check
    _
  $region27: #{combined_mha_forward.1} parent=0 // pred_check_branch
    %28 = sbr.rel (0) target = $region29
  $region28: #{combined_mha_forward.1} parent=0 // pred_region
    _
  $region29: #{combined_mha_forward.1} parent=0 // pred_fallthru
    _
  // Predicated region
  $region30: #{combined_mha_forward.1} parent=0 // pred_check
    _
  $region31: #{combined_mha_forward.1} parent=0 // pred_check_branch
    %30 = sbr.rel (0) target = $region33
  $region32: #{combined_mha_forward.1} parent=0 // pred_region
    _
  $region33: #{combined_mha_forward.1} parent=0 // pred_fallthru
    _
  // Predicated region
  $region34: #{combined_mha_forward.1} parent=0 // pred_check
    _
  $region35: #{combined_mha_forward.1} parent=0 // pred_check_branch
    %32 = sbr.rel (0) target = $region37
  $region36: #{combined_mha_forward.1} parent=0 // pred_region
    _
  $region37: #{combined_mha_forward.1} parent=0 // pred_fallthru
    _
  // Predicated region
  $region38: #{combined_mha_forward.1} parent=0 // pred_check
    _
  $region39: #{combined_mha_forward.1} parent=0 // pred_check_branch
    %34 = sbr.rel (0) target = $region41
  $region40: #{combined_mha_forward.1} parent=0 // pred_region
    _
  $region41: #{combined_mha_forward.1} parent=0 // pred_fallthru
    _
  %v36 = vld [vmem:[%s2] sm:$0xff]
  %v37 = vld [vmem:[%s2 + $0x8] sm:$0xff]
  %v38 = vld [vmem:[%s0] sm:$0xff]
  %v39 = vld [vmem:[%s0 + $0x8] sm:$0xff]
  %v40 = vpack.c.bf16 %v39, %v38
  %v41 = vld [vmem:[%s1] sm:$0xff]
  %v42 = vld [vmem:[%s1 + $0x8] sm:$0xff]
  %v43 = vpack.c.bf16 %v42, %v41
  %v44 = vld [vmem:[%s3] sm:$0xf]
  %v45 = vld [vmem:[%s3 + $0x4] sm:$0xf]
  %v46 = vld [vmem:[%s3 + $0x8] sm:$0xf]
  %v47 = vld [vmem:[%s3 + $0xc] sm:$0xf]
  %v52 = vunpack.c.l.b16 %v44
  %v53 = vunpack.c.l.b16 %v45
  %v54 = vunpack.c.l.b16 %v46
  %v55 = vunpack.c.l.b16 %v47
  %v56 = vpack.c.b16 %v53, %v52
  %v57 = vpack.c.b16 %v55, %v54
  %vm60 = vcmask 261120
  %v62 = vsel %vm60, %v40, 0
  %64 = vmatpush.bf16.msra.mxu0 0
  %65 = vmatpush.bf16.msra.mxu0 0
  %66 = vmatpush.bf16.msra.mxu0 0
  %67 = vmatpush.bf16.msra.mxu0 0
  %68 = vmatpush.bf16.msra.mxu0 0
  %69 = vmatpush.bf16.msra.mxu0 0
  %70 = vmatpush.bf16.msra.mxu0 %v57
  %71 = vmatpush.bf16.msra.mxu0 %v56
  %72 = vmatmul.bf16.gmra.mxu0 %v62
  %v73 = vpop.f32.mrf.mxu0
  %v74 = vadd.f32 0.0, %v73
  %v75 = vpop.f32.mrf.mxu0
  %v76 = vadd.f32 0.0, %v75
  %77 = vdwg.mxu0
  %v78 = vld [vmem:[%s4] sm:$0xf]
  %v79 = vld [vmem:[%s4 + $0x4] sm:$0xf]
  %v80 = vld [vmem:[%s4 + $0x8] sm:$0xf]
  %v81 = vld [vmem:[%s4 + $0xc] sm:$0xf]
  %v86 = vunpack.c.l.b16 %v78
  %v87 = vunpack.c.l.b16 %v79
  %v88 = vunpack.c.l.b16 %v80
  %v89 = vunpack.c.l.b16 %v81
  %v90 = vpack.c.b16 %v87, %v86
  %v91 = vpack.c.b16 %v89, %v88
  %94 = vmatpush.bf16.msra.mxu0 0
  %95 = vmatpush.bf16.msra.mxu0 0
  %96 = vmatpush.bf16.msra.mxu0 0
  %97 = vmatpush.bf16.msra.mxu0 0
  %98 = vmatpush.bf16.msra.mxu0 0
  %99 = vmatpush.bf16.msra.mxu0 0
  %100 = vmatpush.bf16.msra.mxu0 %v91
  %101 = vmatpush.bf16.msra.mxu0 %v90
  %102 = vmatmul.bf16.gmra.mxu0 %v62
  %v103 = vpop.f32.mrf.mxu0
  %v104 = vadd.f32 0.0, %v103
  %v105 = vpop.f32.mrf.mxu0
  %v106 = vadd.f32 0.0, %v105
  %107 = vdwg.mxu0
  %v108 = vld [vmem:[%s5] sm:$0xf]
  %v109 = vld [vmem:[%s5 + $0x4] sm:$0xf]
  %v110 = vld [vmem:[%s5 + $0x8] sm:$0xf]
  %v111 = vld [vmem:[%s5 + $0xc] sm:$0xf]
  %v116 = vunpack.c.l.b16 %v108
  %v117 = vunpack.c.l.b16 %v109
  %v118 = vunpack.c.l.b16 %v110
  %v119 = vunpack.c.l.b16 %v111
  %v120 = vpack.c.b16 %v117, %v116
  %v121 = vpack.c.b16 %v119, %v118
  %124 = vmatpush.bf16.msra.mxu0 0
  %125 = vmatpush.bf16.msra.mxu0 0
  %126 = vmatpush.bf16.msra.mxu0 0
  %127 = vmatpush.bf16.msra.mxu0 0
  %128 = vmatpush.bf16.msra.mxu0 0
  %129 = vmatpush.bf16.msra.mxu0 0
  %130 = vmatpush.bf16.msra.mxu0 %v121
  %131 = vmatpush.bf16.msra.mxu0 %v120
  %132 = vmatmul.bf16.gmra.mxu0 %v62
  %v133 = vpop.f32.mrf.mxu0
  %v134 = vadd.f32 0.0, %v133
  %v135 = vpop.f32.mrf.mxu0
  %v136 = vadd.f32 0.0, %v135
  %137 = vdwg.mxu0
  %vm138 = vcmask 64512
  %v140 = vsel %vm138, %v74, 0
  %v143 = vsel %vm138, %v76, 0
  %v146 = vsel %vm138, %v104, 0
  %v149 = vsel %vm138, %v106, 0
  %151 = vmatpush.xpose.msra.mxu0 0.0
  %152 = vmatpush.xpose.msra.mxu0 0.0
  %153 = vmatpush.xpose.msra.mxu0 0.0
  %154 = vmatpush.xpose.msra.mxu0 0.0
  %155 = vmatpush.xpose.msra.mxu0 0.0
  %156 = vmatpush.xpose.msra.mxu0 0.0
  %157 = vmatpush.xpose.msra.mxu0 0.0
  %158 = vmatpush.xpose.msra.mxu0 0.0
  %159 = vmatpush.xpose.msra.mxu0 0.0
  %160 = vmatpush.xpose.msra.mxu0 0.0
  %161 = vmatpush.xpose.msra.mxu0 0.0
  %162 = vmatpush.xpose.msra.mxu0 0.0
  %163 = vmatpush.xpose.msra.mxu0 0.0
  %164 = vmatpush.xpose.msra.mxu0 0.0
  %165 = vmatpush.xpose.msra.mxu0 %v149
  %166 = vmatpush.xpose.msra.mxu0 %v146
  %167 = vmatmul.f32.gmra.mxu0 %v140
  %v168 = vpop.f32.mrf.mxu0
  %v169 = vadd.f32 %v36, %v168
  %170 = vmatmul.f32.gmra.mxu0 %v143
  %v171 = vpop.f32.mrf.mxu0
  %v172 = vadd.f32 %v37, %v171
  %173 = vdwg.mxu0
  %vm174 = vcmask 130048
  %v175 = vsel %vm174, %v169, -inf
  %176 = vmax.xlane.f32.xlu0 %v175
  %v177 = vpop.xlane.xlu0 %176
  %v178 = vsel %vm174, %v172, -inf
  %179 = vmax.xlane.f32.xlu0 %v178
  %v180 = vpop.xlane.xlu0 %179
  %v181 = vsub.f32 %v169, %v177
  %v182 = vsub.f32 %v172, %v180
  %v183 = vmul.f32 %v181, 1.442695
  %v184 = vpow.pop %v183
  %v185 = vmul.f32 %v182, 1.442695
  %v186 = vpow.pop %v185
  %v187 = vsel %vm174, %v184, 0.0
  %188 = vadd.xlane.f32.xlu0 %v187
  %v189 = vpop.xlane.xlu0 %188
  %v190 = vsel %vm174, %v186, 0.0
  %191 = vadd.xlane.f32.xlu0 %v190
  %v192 = vpop.xlane.xlu0 %191
  %v193 = vrcp.pop %v189
  %v194 = vrcp.pop %v192
  %v195 = vmul.f32 %v184, %v193
  %v196 = vmul.f32 %v186, %v194
  %v198 = vsel %vm174, %v195, 0
  %v201 = vsel %vm174, %v196, 0
  %203 = vmatpush.msra.mxu0 0.0
  %204 = vmatpush.msra.mxu0 0.0
  %205 = vmatpush.msra.mxu0 0.0
  %206 = vmatpush.msra.mxu0 0.0
  %207 = vmatpush.msra.mxu0 0.0
  %208 = vmatpush.msra.mxu0 0.0
  %209 = vmatpush.msra.mxu0 0.0
  %210 = vmatpush.msra.mxu0 0.0
  %211 = vmatpush.msra.mxu0 0.0
  %212 = vmatpush.msra.mxu0 0.0
  %213 = vmatpush.msra.mxu0 0.0
  %214 = vmatpush.msra.mxu0 0.0
  %215 = vmatpush.msra.mxu0 0.0
  %216 = vmatpush.msra.mxu0 0.0
  %217 = vmatpush.msra.mxu0 %v136
  %218 = vmatpush.msra.mxu0 %v134
  %219 = vmatmul.f32.gmra.mxu0 %v198
  %v220 = vpop.f32.mrf.mxu0
  %v221 = vadd.f32 0.0, %v220
  %222 = vmatmul.f32.gmra.mxu0 %v201
  %v223 = vpop.f32.mrf.mxu0
  %v224 = vadd.f32 0.0, %v223
  %225 = vdwg.mxu0
  %226 = vst.msk [vmem:[#allocation2] sm:$0xff] %vm138, %v221
  %227 = vst.msk [vmem:[#allocation2 + $0x8] sm:$0xff] %vm138, %v224
  %228 = vrot.lane.b32.xlu0 %v74, 120
  %v229 = vpop.permute.xlu0 %228
  %230 = vrot.lane.b32.xlu0 %v76, 120
  %v231 = vpop.permute.xlu0 %230
  %232 = vrot.lane.b32.xlu0 %v104, 120
  %v233 = vpop.permute.xlu0 %232
  %234 = vrot.lane.b32.xlu0 %v106, 120
  %v235 = vpop.permute.xlu0 %234
  %v236 = vsel %vm138, %v229, 0
  %v238 = vsel %vm138, %v231, 0
  %v240 = vsel %vm138, %v233, 0
  %v242 = vsel %vm138, %v235, 0
  %244 = vmatpush.xpose.msra.mxu0 0.0
  %245 = vmatpush.xpose.msra.mxu0 0.0
  %246 = vmatpush.xpose.msra.mxu0 0.0
  %247 = vmatpush.xpose.msra.mxu0 0.0
  %248 = vmatpush.xpose.msra.mxu0 0.0
  %249 = vmatpush.xpose.msra.mxu0 0.0
  %250 = vmatpush.xpose.msra.mxu0 0.0
  %251 = vmatpush.xpose.msra.mxu0 0.0
  %252 = vmatpush.xpose.msra.mxu0 0.0
  %253 = vmatpush.xpose.msra.mxu0 0.0
  %254 = vmatpush.xpose.msra.mxu0 0.0
  %255 = vmatpush.xpose.msra.mxu0 0.0
  %256 = vmatpush.xpose.msra.mxu0 0.0
  %257 = vmatpush.xpose.msra.mxu0 0.0
  %258 = vmatpush.xpose.msra.mxu0 %v242
  %259 = vmatpush.xpose.msra.mxu0 %v240
  %260 = vmatmul.f32.gmra.mxu0 %v236
  %v261 = vpop.f32.mrf.mxu0
  %v262 = vadd.f32 %v36, %v261
  %263 = vmatmul.f32.gmra.mxu0 %v238
  %v264 = vpop.f32.mrf.mxu0
  %v265 = vadd.f32 %v37, %v264
  %266 = vdwg.mxu0
  %v267 = vsel %vm174, %v262, -inf
  %268 = vmax.xlane.f32.xlu0 %v267
  %v269 = vpop.xlane.xlu0 %268
  %v270 = vsel %vm174, %v265, -inf
  %271 = vmax.xlane.f32.xlu0 %v270
  %v272 = vpop.xlane.xlu0 %271
  %v273 = vsub.f32 %v262, %v269
  %v274 = vsub.f32 %v265, %v272
  %v275 = vmul.f32 %v273, 1.442695
  %v276 = vpow.pop %v275
  %v277 = vmul.f32 %v274, 1.442695
  %v278 = vpow.pop %v277
  %v279 = vsel %vm174, %v276, 0.0
  %280 = vadd.xlane.f32.xlu0 %v279
  %v281 = vpop.xlane.xlu0 %280
  %v282 = vsel %vm174, %v278, 0.0
  %283 = vadd.xlane.f32.xlu0 %v282
  %v284 = vpop.xlane.xlu0 %283
  %v285 = vrcp.pop %v281
  %v286 = vrcp.pop %v284
  %v287 = vmul.f32 %v276, %v285
  %v288 = vmul.f32 %v278, %v286
  %291 = vrot.lane.b32.xlu0 %v134, 120
  %v292 = vpop.permute.xlu0 %291
  %293 = vrot.lane.b32.xlu0 %v136, 120
  %v294 = vpop.permute.xlu0 %293
  %v298 = vsel %vm174, %v287, 0
  %v301 = vsel %vm174, %v288, 0
  %303 = vmatpush.msra.mxu0 0.0
  %304 = vmatpush.msra.mxu0 0.0
  %305 = vmatpush.msra.mxu0 0.0
  %306 = vmatpush.msra.mxu0 0.0
  %307 = vmatpush.msra.mxu0 0.0
  %308 = vmatpush.msra.mxu0 0.0
  %309 = vmatpush.msra.mxu0 0.0
  %310 = vmatpush.msra.mxu0 0.0
  %311 = vmatpush.msra.mxu0 0.0
  %312 = vmatpush.msra.mxu0 0.0
  %313 = vmatpush.msra.mxu0 0.0
  %314 = vmatpush.msra.mxu0 0.0
  %315 = vmatpush.msra.mxu0 0.0
  %316 = vmatpush.msra.mxu0 0.0
  %317 = vmatpush.msra.mxu0 %v294
  %318 = vmatpush.msra.mxu0 %v292
  %319 = vmatmul.f32.gmra.mxu0 %v298
  %v320 = vpop.f32.mrf.mxu0
  %v321 = vadd.f32 0.0, %v320
  %322 = vmatmul.f32.gmra.mxu0 %v301
  %v323 = vpop.f32.mrf.mxu0
  %v324 = vadd.f32 0.0, %v323
  %325 = vdwg.mxu0
  %328 = vrot.lane.b32.xlu0 %v321, 8
  %v329 = vpop.permute.xlu0 %328
  %330 = vrot.lane.b32.xlu0 %v324, 8
  %v331 = vpop.permute.xlu0 %330
  %vm334 = vcmask 130112
  %335 = vst.msk [vmem:[#allocation2] sm:$0xff] %vm334, %v329
  %336 = vst.msk [vmem:[#allocation2 + $0x8] sm:$0xff] %vm334, %v331
  %337 = vrot.lane.b32.xlu0 %v74, 112
  %v338 = vpop.permute.xlu0 %337
  %339 = vrot.lane.b32.xlu0 %v76, 112
  %v340 = vpop.permute.xlu0 %339
  %341 = vrot.lane.b32.xlu0 %v104, 112
  %v342 = vpop.permute.xlu0 %341
  %343 = vrot.lane.b32.xlu0 %v106, 112
  %v344 = vpop.permute.xlu0 %343
  %v345 = vsel %vm138, %v338, 0
  %v347 = vsel %vm138, %v340, 0
  %v349 = vsel %vm138, %v342, 0
  %v351 = vsel %vm138, %v344, 0
  %353 = vmatpush.xpose.msra.mxu0 0.0
  %354 = vmatpush.xpose.msra.mxu0 0.0
  %355 = vmatpush.xpose.msra.mxu0 0.0
  %356 = vmatpush.xpose.msra.mxu0 0.0
  %357 = vmatpush.xpose.msra.mxu0 0.0
  %358 = vmatpush.xpose.msra.mxu0 0.0
  %359 = vmatpush.xpose.msra.mxu0 0.0
  %360 = vmatpush.xpose.msra.mxu0 0.0
  %361 = vmatpush.xpose.msra.mxu0 0.0
  %362 = vmatpush.xpose.msra.mxu0 0.0
  %363 = vmatpush.xpose.msra.mxu0 0.0
  %364 = vmatpush.xpose.msra.mxu0 0.0
  %365 = vmatpush.xpose.msra.mxu0 0.0
  %366 = vmatpush.xpose.msra.mxu0 0.0
  %367 = vmatpush.xpose.msra.mxu0 %v351
  %368 = vmatpush.xpose.msra.mxu0 %v349
  %369 = vmatmul.f32.gmra.mxu0 %v345
  %v370 = vpop.f32.mrf.mxu0
  %v371 = vadd.f32 %v36, %v370
  %372 = vmatmul.f32.gmra.mxu0 %v347
  %v373 = vpop.f32.mrf.mxu0
  %v374 = vadd.f32 %v37, %v373
  %375 = vdwg.mxu0
  %v376 = vsel %vm174, %v371, -inf
  %377 = vmax.xlane.f32.xlu0 %v376
  %v378 = vpop.xlane.xlu0 %377
  %v379 = vsel %vm174, %v374, -inf
  %380 = vmax.xlane.f32.xlu0 %v379
  %v381 = vpop.xlane.xlu0 %380
  %v382 = vsub.f32 %v371, %v378
  %v383 = vsub.f32 %v374, %v381
  %v384 = vmul.f32 %v382, 1.442695
  %v385 = vpow.pop %v384
  %v386 = vmul.f32 %v383, 1.442695
  %v387 = vpow.pop %v386
  %v388 = vsel %vm174, %v385, 0.0
  %389 = vadd.xlane.f32.xlu0 %v388
  %v390 = vpop.xlane.xlu0 %389
  %v391 = vsel %vm174, %v387, 0.0
  %392 = vadd.xlane.f32.xlu0 %v391
  %v393 = vpop.xlane.xlu0 %392
  %v394 = vrcp.pop %v390
  %v395 = vrcp.pop %v393
  %v396 = vmul.f32 %v385, %v394
  %v397 = vmul.f32 %v387, %v395
  %398 = vrot.lane.b32.xlu0 %v134, 112
  %v399 = vpop.permute.xlu0 %398
  %400 = vrot.lane.b32.xlu0 %v136, 112
  %v401 = vpop.permute.xlu0 %400
  %v405 = vsel %vm174, %v396, 0
  %v408 = vsel %vm174, %v397, 0
  %410 = vmatpush.msra.mxu0 0.0
  %411 = vmatpush.msra.mxu0 0.0
  %412 = vmatpush.msra.mxu0 0.0
  %413 = vmatpush.msra.mxu0 0.0
  %414 = vmatpush.msra.mxu0 0.0
  %415 = vmatpush.msra.mxu0 0.0
  %416 = vmatpush.msra.mxu0 0.0
  %417 = vmatpush.msra.mxu0 0.0
  %418 = vmatpush.msra.mxu0 0.0
  %419 = vmatpush.msra.mxu0 0.0
  %420 = vmatpush.msra.mxu0 0.0
  %421 = vmatpush.msra.mxu0 0.0
  %422 = vmatpush.msra.mxu0 0.0
  %423 = vmatpush.msra.mxu0 0.0
  %424 = vmatpush.msra.mxu0 %v401
  %425 = vmatpush.msra.mxu0 %v399
  %426 = vmatmul.f32.gmra.mxu0 %v405
  %v427 = vpop.f32.mrf.mxu0
  %v428 = vadd.f32 0.0, %v427
  %429 = vmatmul.f32.gmra.mxu0 %v408
  %v430 = vpop.f32.mrf.mxu0
  %v431 = vadd.f32 0.0, %v430
  %432 = vdwg.mxu0
  %435 = vrot.lane.b32.xlu0 %v428, 16
  %v436 = vpop.permute.xlu0 %435
  %437 = vrot.lane.b32.xlu0 %v431, 16
  %v438 = vpop.permute.xlu0 %437
  %vm441 = vcmask 195712
  %442 = vst.msk [vmem:[#allocation2] sm:$0xff] %vm441, %v436
  %443 = vst.msk [vmem:[#allocation2 + $0x8] sm:$0xff] %vm441, %v438
  %444 = vrot.lane.b32.xlu0 %v74, 104
  %v445 = vpop.permute.xlu0 %444
  %446 = vrot.lane.b32.xlu0 %v76, 104
  %v447 = vpop.permute.xlu0 %446
  %448 = vrot.lane.b32.xlu0 %v104, 104
  %v449 = vpop.permute.xlu0 %448
  %450 = vrot.lane.b32.xlu0 %v106, 104
  %v451 = vpop.permute.xlu0 %450
  %v452 = vsel %vm138, %v445, 0
  %v454 = vsel %vm138, %v447, 0
  %v456 = vsel %vm138, %v449, 0
  %v458 = vsel %vm138, %v451, 0
  %460 = vmatpush.xpose.msra.mxu0 0.0
  %461 = vmatpush.xpose.msra.mxu0 0.0
  %462 = vmatpush.xpose.msra.mxu0 0.0
  %463 = vmatpush.xpose.msra.mxu0 0.0
  %464 = vmatpush.xpose.msra.mxu0 0.0
  %465 = vmatpush.xpose.msra.mxu0 0.0
  %466 = vmatpush.xpose.msra.mxu0 0.0
  %467 = vmatpush.xpose.msra.mxu0 0.0
  %468 = vmatpush.xpose.msra.mxu0 0.0
  %469 = vmatpush.xpose.msra.mxu0 0.0
  %470 = vmatpush.xpose.msra.mxu0 0.0
  %471 = vmatpush.xpose.msra.mxu0 0.0
  %472 = vmatpush.xpose.msra.mxu0 0.0
  %473 = vmatpush.xpose.msra.mxu0 0.0
  %474 = vmatpush.xpose.msra.mxu0 %v458
  %475 = vmatpush.xpose.msra.mxu0 %v456
  %476 = vmatmul.f32.gmra.mxu0 %v452
  %v477 = vpop.f32.mrf.mxu0
  %v478 = vadd.f32 %v36, %v477
  %479 = vmatmul.f32.gmra.mxu0 %v454
  %v480 = vpop.f32.mrf.mxu0
  %v481 = vadd.f32 %v37, %v480
  %482 = vdwg.mxu0
  %v483 = vsel %vm174, %v478, -inf
  %484 = vmax.xlane.f32.xlu0 %v483
  %v485 = vpop.xlane.xlu0 %484
  %v486 = vsel %vm174, %v481, -inf
  %487 = vmax.xlane.f32.xlu0 %v486
  %v488 = vpop.xlane.xlu0 %487
  %v489 = vsub.f32 %v478, %v485
  %v490 = vsub.f32 %v481, %v488
  %v491 = vmul.f32 %v489, 1.442695
  %v492 = vpow.pop %v491
  %v493 = vmul.f32 %v490, 1.442695
  %v494 = vpow.pop %v493
  %v495 = vsel %vm174, %v492, 0.0
  %496 = vadd.xlane.f32.xlu0 %v495
  %v497 = vpop.xlane.xlu0 %496
  %v498 = vsel %vm174, %v494, 0.0
  %499 = vadd.xlane.f32.xlu0 %v498
  %v500 = vpop.xlane.xlu0 %499
  %v501 = vrcp.pop %v497
  %v502 = vrcp.pop %v500
  %v503 = vmul.f32 %v492, %v501
  %v504 = vmul.f32 %v494, %v502
  %505 = vrot.lane.b32.xlu0 %v134, 104
  %v506 = vpop.permute.xlu0 %505
  %507 = vrot.lane.b32.xlu0 %v136, 104
  %v508 = vpop.permute.xlu0 %507
  %v512 = vsel %vm174, %v503, 0
  %v515 = vsel %vm174, %v504, 0
  %517 = vmatpush.msra.mxu0 0.0
  %518 = vmatpush.msra.mxu0 0.0
  %519 = vmatpush.msra.mxu0 0.0
  %520 = vmatpush.msra.mxu0 0.0
  %521 = vmatpush.msra.mxu0 0.0
  %522 = vmatpush.msra.mxu0 0.0
  %523 = vmatpush.msra.mxu0 0.0
  %524 = vmatpush.msra.mxu0 0.0
  %525 = vmatpush.msra.mxu0 0.0
  %526 = vmatpush.msra.mxu0 0.0
  %527 = vmatpush.msra.mxu0 0.0
  %528 = vmatpush.msra.mxu0 0.0
  %529 = vmatpush.msra.mxu0 0.0
  %530 = vmatpush.msra.mxu0 0.0
  %531 = vmatpush.msra.mxu0 %v508
  %532 = vmatpush.msra.mxu0 %v506
  %533 = vmatmul.f32.gmra.mxu0 %v512
  %v534 = vpop.f32.mrf.mxu0
  %v535 = vadd.f32 0.0, %v534
  %536 = vmatmul.f32.gmra.mxu0 %v515
  %v537 = vpop.f32.mrf.mxu0
  %v538 = vadd.f32 0.0, %v537
  %539 = vdwg.mxu0
  %542 = vrot.lane.b32.xlu0 %v535, 24
  %v543 = vpop.permute.xlu0 %542
  %544 = vrot.lane.b32.xlu0 %v538, 24
  %v545 = vpop.permute.xlu0 %544
  %vm548 = vcmask 261312
  %549 = vst.msk [vmem:[#allocation2] sm:$0xff] %vm548, %v543
  %550 = vst.msk [vmem:[#allocation2 + $0x8] sm:$0xff] %vm548, %v545
  %s551 = scalar_lea.vmem %s3, 16
  %v552 = vld [vmem:[%s551] sm:$0xf]
  %v553 = vld [vmem:[%s551 + $0x4] sm:$0xf]
  %v554 = vld [vmem:[%s551 + $0x8] sm:$0xf]
  %v555 = vld [vmem:[%s551 + $0xc] sm:$0xf]
  %v560 = vunpack.c.l.b16 %v552
  %v561 = vunpack.c.l.b16 %v553
  %v562 = vunpack.c.l.b16 %v554
  %v563 = vunpack.c.l.b16 %v555
  %v564 = vpack.c.b16 %v561, %v560
  %v565 = vpack.c.b16 %v563, %v562
  %v569 = vsel %vm60, %v43, 0
  %571 = vmatpush.bf16.msra.mxu0 0
  %572 = vmatpush.bf16.msra.mxu0 0
  %573 = vmatpush.bf16.msra.mxu0 0
  %574 = vmatpush.bf16.msra.mxu0 0
  %575 = vmatpush.bf16.msra.mxu0 0
  %576 = vmatpush.bf16.msra.mxu0 0
  %577 = vmatpush.bf16.msra.mxu0 %v565
  %578 = vmatpush.bf16.msra.mxu0 %v564
  %579 = vmatmul.bf16.gmra.mxu0 %v569
  %v580 = vpop.f32.mrf.mxu0
  %v581 = vadd.f32 0.0, %v580
  %v582 = vpop.f32.mrf.mxu0
  %v583 = vadd.f32 0.0, %v582
  %584 = vdwg.mxu0
  %s585 = scalar_lea.vmem %s4, 16
  %v586 = vld [vmem:[%s585] sm:$0xf]
  %v587 = vld [vmem:[%s585 + $0x4] sm:$0xf]
  %v588 = vld [vmem:[%s585 + $0x8] sm:$0xf]
  %v589 = vld [vmem:[%s585 + $0xc] sm:$0xf]
  %v594 = vunpack.c.l.b16 %v586
  %v595 = vunpack.c.l.b16 %v587
  %v596 = vunpack.c.l.b16 %v588
  %v597 = vunpack.c.l.b16 %v589
  %v598 = vpack.c.b16 %v595, %v594
  %v599 = vpack.c.b16 %v597, %v596
  %602 = vmatpush.bf16.msra.mxu0 0
  %603 = vmatpush.bf16.msra.mxu0 0
  %604 = vmatpush.bf16.msra.mxu0 0
  %605 = vmatpush.bf16.msra.mxu0 0
  %606 = vmatpush.bf16.msra.mxu0 0
  %607 = vmatpush.bf16.msra.mxu0 0
  %608 = vmatpush.bf16.msra.mxu0 %v599
  %609 = vmatpush.bf16.msra.mxu0 %v598
  %610 = vmatmul.bf16.gmra.mxu0 %v569
  %v611 = vpop.f32.mrf.mxu0
  %v612 = vadd.f32 0.0, %v611
  %v613 = vpop.f32.mrf.mxu0
  %v614 = vadd.f32 0.0, %v613
  %615 = vdwg.mxu0
  %s616 = scalar_lea.vmem %s5, 16
  %v617 = vld [vmem:[%s616] sm:$0xf]
  %v618 = vld [vmem:[%s616 + $0x4] sm:$0xf]
  %v619 = vld [vmem:[%s616 + $0x8] sm:$0xf]
  %v620 = vld [vmem:[%s616 + $0xc] sm:$0xf]
  %v625 = vunpack.c.l.b16 %v617
  %v626 = vunpack.c.l.b16 %v618
  %v627 = vunpack.c.l.b16 %v619
  %v628 = vunpack.c.l.b16 %v620
  %v629 = vpack.c.b16 %v626, %v625
  %v630 = vpack.c.b16 %v628, %v627
  %633 = vmatpush.bf16.msra.mxu0 0
  %634 = vmatpush.bf16.msra.mxu0 0
  %635 = vmatpush.bf16.msra.mxu0 0
  %636 = vmatpush.bf16.msra.mxu0 0
  %637 = vmatpush.bf16.msra.mxu0 0
  %638 = vmatpush.bf16.msra.mxu0 0
  %639 = vmatpush.bf16.msra.mxu0 %v630
  %640 = vmatpush.bf16.msra.mxu0 %v629
  %641 = vmatmul.bf16.gmra.mxu0 %v569
  %v642 = vpop.f32.mrf.mxu0
  %v643 = vadd.f32 0.0, %v642
  %v644 = vpop.f32.mrf.mxu0
  %v645 = vadd.f32 0.0, %v644
  %646 = vdwg.mxu0
  %v648 = vsel %vm138, %v581, 0
  %v651 = vsel %vm138, %v583, 0
  %v654 = vsel %vm138, %v612, 0
  %v657 = vsel %vm138, %v614, 0
  %659 = vmatpush.xpose.msra.mxu0 0.0
  %660 = vmatpush.xpose.msra.mxu0 0.0
  %661 = vmatpush.xpose.msra.mxu0 0.0
  %662 = vmatpush.xpose.msra.mxu0 0.0
  %663 = vmatpush.xpose.msra.mxu0 0.0
  %664 = vmatpush.xpose.msra.mxu0 0.0
  %665 = vmatpush.xpose.msra.mxu0 0.0
  %666 = vmatpush.xpose.msra.mxu0 0.0
  %667 = vmatpush.xpose.msra.mxu0 0.0
  %668 = vmatpush.xpose.msra.mxu0 0.0
  %669 = vmatpush.xpose.msra.mxu0 0.0
  %670 = vmatpush.xpose.msra.mxu0 0.0
  %671 = vmatpush.xpose.msra.mxu0 0.0
  %672 = vmatpush.xpose.msra.mxu0 0.0
  %673 = vmatpush.xpose.msra.mxu0 %v657
  %674 = vmatpush.xpose.msra.mxu0 %v654
  %675 = vmatmul.f32.gmra.mxu0 %v648
  %v676 = vpop.f32.mrf.mxu0
  %v677 = vadd.f32 %v36, %v676
  %678 = vmatmul.f32.gmra.mxu0 %v651
  %v679 = vpop.f32.mrf.mxu0
  %v680 = vadd.f32 %v37, %v679
  %681 = vdwg.mxu0
  %v682 = vsel %vm174, %v677, -inf
  %683 = vmax.xlane.f32.xlu0 %v682
  %v684 = vpop.xlane.xlu0 %683
  %v685 = vsel %vm174, %v680, -inf
  %686 = vmax.xlane.f32.xlu0 %v685
  %v687 = vpop.xlane.xlu0 %686
  %v688 = vsub.f32 %v677, %v684
  %v689 = vsub.f32 %v680, %v687
  %v690 = vmul.f32 %v688, 1.442695
  %v691 = vpow.pop %v690
  %v692 = vmul.f32 %v689, 1.442695
  %v693 = vpow.pop %v692
  %v694 = vsel %vm174, %v691, 0.0
  %695 = vadd.xlane.f32.xlu0 %v694
  %v696 = vpop.xlane.xlu0 %695
  %v697 = vsel %vm174, %v693, 0.0
  %698 = vadd.xlane.f32.xlu0 %v697
  %v699 = vpop.xlane.xlu0 %698
  %v700 = vrcp.pop %v696
  %v701 = vrcp.pop %v699
  %v702 = vmul.f32 %v691, %v700
  %v703 = vmul.f32 %v693, %v701
  %v705 = vsel %vm174, %v702, 0
  %v708 = vsel %vm174, %v703, 0
  %710 = vmatpush.msra.mxu0 0.0
  %711 = vmatpush.msra.mxu0 0.0
  %712 = vmatpush.msra.mxu0 0.0
  %713 = vmatpush.msra.mxu0 0.0
  %714 = vmatpush.msra.mxu0 0.0
  %715 = vmatpush.msra.mxu0 0.0
  %716 = vmatpush.msra.mxu0 0.0
  %717 = vmatpush.msra.mxu0 0.0
  %718 = vmatpush.msra.mxu0 0.0
  %719 = vmatpush.msra.mxu0 0.0
  %720 = vmatpush.msra.mxu0 0.0
  %721 = vmatpush.msra.mxu0 0.0
  %722 = vmatpush.msra.mxu0 0.0
  %723 = vmatpush.msra.mxu0 0.0
  %724 = vmatpush.msra.mxu0 %v645
  %725 = vmatpush.msra.mxu0 %v643
  %726 = vmatmul.f32.gmra.mxu0 %v705
  %v727 = vpop.f32.mrf.mxu0
  %v728 = vadd.f32 0.0, %v727
  %729 = vmatmul.f32.gmra.mxu0 %v708
  %v730 = vpop.f32.mrf.mxu0
  %v731 = vadd.f32 0.0, %v730
  %732 = vdwg.mxu0
  %735 = vrot.lane.b32.xlu0 %v728, 32
  %v736 = vpop.permute.xlu0 %735
  %737 = vrot.lane.b32.xlu0 %v731, 32
  %v738 = vpop.permute.xlu0 %737
  %vm741 = vcmask 326912
  %742 = vst.msk [vmem:[#allocation2] sm:$0xff] %vm741, %v736
  %743 = vst.msk [vmem:[#allocation2 + $0x8] sm:$0xff] %vm741, %v738
  %744 = vrot.lane.b32.xlu0 %v581, 120
  %v745 = vpop.permute.xlu0 %744
  %746 = vrot.lane.b32.xlu0 %v583, 120
  %v747 = vpop.permute.xlu0 %746
  %748 = vrot.lane.b32.xlu0 %v612, 120
  %v749 = vpop.permute.xlu0 %748
  %750 = vrot.lane.b32.xlu0 %v614, 120
  %v751 = vpop.permute.xlu0 %750
  %v752 = vsel %vm138, %v745, 0
  %v754 = vsel %vm138, %v747, 0
  %v756 = vsel %vm138, %v749, 0
  %v758 = vsel %vm138, %v751, 0
  %760 = vmatpush.xpose.msra.mxu0 0.0
  %761 = vmatpush.xpose.msra.mxu0 0.0
  %762 = vmatpush.xpose.msra.mxu0 0.0
  %763 = vmatpush.xpose.msra.mxu0 0.0
  %764 = vmatpush.xpose.msra.mxu0 0.0
  %765 = vmatpush.xpose.msra.mxu0 0.0
  %766 = vmatpush.xpose.msra.mxu0 0.0
  %767 = vmatpush.xpose.msra.mxu0 0.0
  %768 = vmatpush.xpose.msra.mxu0 0.0
  %769 = vmatpush.xpose.msra.mxu0 0.0
  %770 = vmatpush.xpose.msra.mxu0 0.0
  %771 = vmatpush.xpose.msra.mxu0 0.0
  %772 = vmatpush.xpose.msra.mxu0 0.0
  %773 = vmatpush.xpose.msra.mxu0 0.0
  %774 = vmatpush.xpose.msra.mxu0 %v758
  %775 = vmatpush.xpose.msra.mxu0 %v756
  %776 = vmatmul.f32.gmra.mxu0 %v752
  %v777 = vpop.f32.mrf.mxu0
  %v778 = vadd.f32 %v36, %v777
  %779 = vmatmul.f32.gmra.mxu0 %v754
  %v780 = vpop.f32.mrf.mxu0
  %v781 = vadd.f32 %v37, %v780
  %782 = vdwg.mxu0
  %v783 = vsel %vm174, %v778, -inf
  %784 = vmax.xlane.f32.xlu0 %v783
  %v785 = vpop.xlane.xlu0 %784
  %v786 = vsel %vm174, %v781, -inf
  %787 = vmax.xlane.f32.xlu0 %v786
  %v788 = vpop.xlane.xlu0 %787
  %v789 = vsub.f32 %v778, %v785
  %v790 = vsub.f32 %v781, %v788
  %v791 = vmul.f32 %v789, 1.442695
  %v792 = vpow.pop %v791
  %v793 = vmul.f32 %v790, 1.442695
  %v794 = vpow.pop %v793
  %v795 = vsel %vm174, %v792, 0.0
  %796 = vadd.xlane.f32.xlu0 %v795
  %v797 = vpop.xlane.xlu0 %796
  %v798 = vsel %vm174, %v794, 0.0
  %799 = vadd.xlane.f32.xlu0 %v798
  %v800 = vpop.xlane.xlu0 %799
  %v801 = vrcp.pop %v797
  %v802 = vrcp.pop %v800
  %v803 = vmul.f32 %v792, %v801
  %v804 = vmul.f32 %v794, %v802
  %807 = vrot.lane.b32.xlu0 %v643, 120
  %v808 = vpop.permute.xlu0 %807
  %809 = vrot.lane.b32.xlu0 %v645, 120
  %v810 = vpop.permute.xlu0 %809
  %v814 = vsel %vm174, %v803, 0
  %v817 = vsel %vm174, %v804, 0
  %819 = vmatpush.msra.mxu0 0.0
  %820 = vmatpush.msra.mxu0 0.0
  %821 = vmatpush.msra.mxu0 0.0
  %822 = vmatpush.msra.mxu0 0.0
  %823 = vmatpush.msra.mxu0 0.0
  %824 = vmatpush.msra.mxu0 0.0
  %825 = vmatpush.msra.mxu0 0.0
  %826 = vmatpush.msra.mxu0 0.0
  %827 = vmatpush.msra.mxu0 0.0
  %828 = vmatpush.msra.mxu0 0.0
  %829 = vmatpush.msra.mxu0 0.0
  %830 = vmatpush.msra.mxu0 0.0
  %831 = vmatpush.msra.mxu0 0.0
  %832 = vmatpush.msra.mxu0 0.0
  %833 = vmatpush.msra.mxu0 %v810
  %834 = vmatpush.msra.mxu0 %v808
  %835 = vmatmul.f32.gmra.mxu0 %v814
  %v836 = vpop.f32.mrf.mxu0
  %v837 = vadd.f32 0.0, %v836
  %838 = vmatmul.f32.gmra.mxu0 %v817
  %v839 = vpop.f32.mrf.mxu0
  %v840 = vadd.f32 0.0, %v839
  %841 = vdwg.mxu0
  %844 = vrot.lane.b32.xlu0 %v837, 40
  %v845 = vpop.permute.xlu0 %844
  %846 = vrot.lane.b32.xlu0 %v840, 40
  %v847 = vpop.permute.xlu0 %846
  %vm850 = vcmask 392512
  %851 = vst.msk [vmem:[#allocation2] sm:$0xff] %vm850, %v845
  %852 = vst.msk [vmem:[#allocation2 + $0x8] sm:$0xff] %vm850, %v847
  %853 = vrot.lane.b32.xlu0 %v581, 112
  %v854 = vpop.permute.xlu0 %853
  %855 = vrot.lane.b32.xlu0 %v583, 112
  %v856 = vpop.permute.xlu0 %855
  %857 = vrot.lane.b32.xlu0 %v612, 112
  %v858 = vpop.permute.xlu0 %857
  %859 = vrot.lane.b32.xlu0 %v614, 112
  %v860 = vpop.permute.xlu0 %859
  %v861 = vsel %vm138, %v854, 0
  %v863 = vsel %vm138, %v856, 0
  %v865 = vsel %vm138, %v858, 0
  %v867 = vsel %vm138, %v860, 0
  %869 = vmatpush.xpose.msra.mxu0 0.0
  %870 = vmatpush.xpose.msra.mxu0 0.0
  %871 = vmatpush.xpose.msra.mxu0 0.0
  %872 = vmatpush.xpose.msra.mxu0 0.0
  %873 = vmatpush.xpose.msra.mxu0 0.0
  %874 = vmatpush.xpose.msra.mxu0 0.0
  %875 = vmatpush.xpose.msra.mxu0 0.0
  %876 = vmatpush.xpose.msra.mxu0 0.0
  %877 = vmatpush.xpose.msra.mxu0 0.0
  %878 = vmatpush.xpose.msra.mxu0 0.0
  %879 = vmatpush.xpose.msra.mxu0 0.0
  %880 = vmatpush.xpose.msra.mxu0 0.0
  %881 = vmatpush.xpose.msra.mxu0 0.0
  %882 = vmatpush.xpose.msra.mxu0 0.0
  %883 = vmatpush.xpose.msra.mxu0 %v867
  %884 = vmatpush.xpose.msra.mxu0 %v865
  %885 = vmatmul.f32.gmra.mxu0 %v861
  %v886 = vpop.f32.mrf.mxu0
  %v887 = vadd.f32 %v36, %v886
  %888 = vmatmul.f32.gmra.mxu0 %v863
  %v889 = vpop.f32.mrf.mxu0
  %v890 = vadd.f32 %v37, %v889
  %891 = vdwg.mxu0
  %v892 = vsel %vm174, %v887, -inf
  %893 = vmax.xlane.f32.xlu0 %v892
  %v894 = vpop.xlane.xlu0 %893
  %v895 = vsel %vm174, %v890, -inf
  %896 = vmax.xlane.f32.xlu0 %v895
  %v897 = vpop.xlane.xlu0 %896
  %v898 = vsub.f32 %v887, %v894
  %v899 = vsub.f32 %v890, %v897
  %v900 = vmul.f32 %v898, 1.442695
  %v901 = vpow.pop %v900
  %v902 = vmul.f32 %v899, 1.442695
  %v903 = vpow.pop %v902
  %v904 = vsel %vm174, %v901, 0.0
  %905 = vadd.xlane.f32.xlu0 %v904
  %v906 = vpop.xlane.xlu0 %905
  %v907 = vsel %vm174, %v903, 0.0
  %908 = vadd.xlane.f32.xlu0 %v907
  %v909 = vpop.xlane.xlu0 %908
  %v910 = vrcp.pop %v906
  %v911 = vrcp.pop %v909
  %v912 = vmul.f32 %v901, %v910
  %v913 = vmul.f32 %v903, %v911
  %914 = vrot.lane.b32.xlu0 %v643, 112
  %v915 = vpop.permute.xlu0 %914
  %916 = vrot.lane.b32.xlu0 %v645, 112
  %v917 = vpop.permute.xlu0 %916
  %v921 = vsel %vm174, %v912, 0
  %v924 = vsel %vm174, %v913, 0
  %926 = vmatpush.msra.mxu0 0.0
  %927 = vmatpush.msra.mxu0 0.0
  %928 = vmatpush.msra.mxu0 0.0
  %929 = vmatpush.msra.mxu0 0.0
  %930 = vmatpush.msra.mxu0 0.0
  %931 = vmatpush.msra.mxu0 0.0
  %932 = vmatpush.msra.mxu0 0.0
  %933 = vmatpush.msra.mxu0 0.0
  %934 = vmatpush.msra.mxu0 0.0
  %935 = vmatpush.msra.mxu0 0.0
  %936 = vmatpush.msra.mxu0 0.0
  %937 = vmatpush.msra.mxu0 0.0
  %938 = vmatpush.msra.mxu0 0.0
  %939 = vmatpush.msra.mxu0 0.0
  %940 = vmatpush.msra.mxu0 %v917
  %941 = vmatpush.msra.mxu0 %v915
  %942 = vmatmul.f32.gmra.mxu0 %v921
  %v943 = vpop.f32.mrf.mxu0
  %v944 = vadd.f32 0.0, %v943
  %945 = vmatmul.f32.gmra.mxu0 %v924
  %v946 = vpop.f32.mrf.mxu0
  %v947 = vadd.f32 0.0, %v946
  %948 = vdwg.mxu0
  %951 = vrot.lane.b32.xlu0 %v944, 48
  %v952 = vpop.permute.xlu0 %951
  %953 = vrot.lane.b32.xlu0 %v947, 48
  %v954 = vpop.permute.xlu0 %953
  %vm957 = vcmask 458112
  %958 = vst.msk [vmem:[#allocation2] sm:$0xff] %vm957, %v952
  %959 = vst.msk [vmem:[#allocation2 + $0x8] sm:$0xff] %vm957, %v954
  %960 = vrot.lane.b32.xlu0 %v581, 104
  %v961 = vpop.permute.xlu0 %960
  %962 = vrot.lane.b32.xlu0 %v583, 104
  %v963 = vpop.permute.xlu0 %962
  %964 = vrot.lane.b32.xlu0 %v612, 104
  %v965 = vpop.permute.xlu0 %964
  %966 = vrot.lane.b32.xlu0 %v614, 104
  %v967 = vpop.permute.xlu0 %966
  %v968 = vsel %vm138, %v961, 0
  %v970 = vsel %vm138, %v963, 0
  %v972 = vsel %vm138, %v965, 0
  %v974 = vsel %vm138, %v967, 0
  %976 = vmatpush.xpose.msra.mxu0 0.0
  %977 = vmatpush.xpose.msra.mxu0 0.0
  %978 = vmatpush.xpose.msra.mxu0 0.0
  %979 = vmatpush.xpose.msra.mxu0 0.0
  %980 = vmatpush.xpose.msra.mxu0 0.0
  %981 = vmatpush.xpose.msra.mxu0 0.0
  %982 = vmatpush.xpose.msra.mxu0 0.0
  %983 = vmatpush.xpose.msra.mxu0 0.0
  %984 = vmatpush.xpose.msra.mxu0 0.0
  %985 = vmatpush.xpose.msra.mxu0 0.0
  %986 = vmatpush.xpose.msra.mxu0 0.0
  %987 = vmatpush.xpose.msra.mxu0 0.0
  %988 = vmatpush.xpose.msra.mxu0 0.0
  %989 = vmatpush.xpose.msra.mxu0 0.0
  %990 = vmatpush.xpose.msra.mxu0 %v974
  %991 = vmatpush.xpose.msra.mxu0 %v972
  %992 = vmatmul.f32.gmra.mxu0 %v968
  %v993 = vpop.f32.mrf.mxu0
  %v994 = vadd.f32 %v36, %v993
  %995 = vmatmul.f32.gmra.mxu0 %v970
  %v996 = vpop.f32.mrf.mxu0
  %v997 = vadd.f32 %v37, %v996
  %998 = vdwg.mxu0
  %v999 = vsel %vm174, %v994, -inf
  %1000 = vmax.xlane.f32.xlu0 %v999
  %v1001 = vpop.xlane.xlu0 %1000
  %v1002 = vsel %vm174, %v997, -inf
  %1003 = vmax.xlane.f32.xlu0 %v1002
  %v1004 = vpop.xlane.xlu0 %1003
  %v1005 = vsub.f32 %v994, %v1001
  %v1006 = vsub.f32 %v997, %v1004
  %v1007 = vmul.f32 %v1005, 1.442695
  %v1008 = vpow.pop %v1007
  %v1009 = vmul.f32 %v1006, 1.442695
  %v1010 = vpow.pop %v1009
  %v1011 = vsel %vm174, %v1008, 0.0
  %1012 = vadd.xlane.f32.xlu0 %v1011
  %v1013 = vpop.xlane.xlu0 %1012
  %v1014 = vsel %vm174, %v1010, 0.0
  %1015 = vadd.xlane.f32.xlu0 %v1014
  %v1016 = vpop.xlane.xlu0 %1015
  %v1017 = vrcp.pop %v1013
  %v1018 = vrcp.pop %v1016
  %v1019 = vmul.f32 %v1008, %v1017
  %v1020 = vmul.f32 %v1010, %v1018
  %1021 = vrot.lane.b32.xlu0 %v643, 104
  %v1022 = vpop.permute.xlu0 %1021
  %1023 = vrot.lane.b32.xlu0 %v645, 104
  %v1024 = vpop.permute.xlu0 %1023
  %v1028 = vsel %vm174, %v1019, 0
  %v1031 = vsel %vm174, %v1020, 0
  %1033 = vmatpush.msra.mxu0 0.0
  %1034 = vmatpush.msra.mxu0 0.0
  %1035 = vmatpush.msra.mxu0 0.0
  %1036 = vmatpush.msra.mxu0 0.0
  %1037 = vmatpush.msra.mxu0 0.0
  %1038 = vmatpush.msra.mxu0 0.0
  %1039 = vmatpush.msra.mxu0 0.0
  %1040 = vmatpush.msra.mxu0 0.0
  %1041 = vmatpush.msra.mxu0 0.0
  %1042 = vmatpush.msra.mxu0 0.0
  %1043 = vmatpush.msra.mxu0 0.0
  %1044 = vmatpush.msra.mxu0 0.0
  %1045 = vmatpush.msra.mxu0 0.0
  %1046 = vmatpush.msra.mxu0 0.0
  %1047 = vmatpush.msra.mxu0 %v1024
  %1048 = vmatpush.msra.mxu0 %v1022
  %1049 = vmatmul.f32.gmra.mxu0 %v1028
  %v1050 = vpop.f32.mrf.mxu0
  %v1051 = vadd.f32 0.0, %v1050
  %1052 = vmatmul.f32.gmra.mxu0 %v1031
  %v1053 = vpop.f32.mrf.mxu0
  %v1054 = vadd.f32 0.0, %v1053
  %1055 = vdwg.mxu0
  %1058 = vrot.lane.b32.xlu0 %v1051, 56
  %v1059 = vpop.permute.xlu0 %1058
  %1060 = vrot.lane.b32.xlu0 %v1054, 56
  %v1061 = vpop.permute.xlu0 %1060
  %vm1064 = vcmask 523712
  %1065 = vst.msk [vmem:[#allocation2] sm:$0xff] %vm1064, %v1059
  %1066 = vst.msk [vmem:[#allocation2 + $0x8] sm:$0xff] %vm1064, %v1061
  %s1067 = scalar_lea.vmem %s3, 32
  %v1068 = vld [vmem:[%s1067] sm:$0xf]
  %v1069 = vld [vmem:[%s1067 + $0x4] sm:$0xf]
  %v1070 = vld [vmem:[%s1067 + $0x8] sm:$0xf]
  %v1071 = vld [vmem:[%s1067 + $0xc] sm:$0xf]
  %v1076 = vunpack.c.l.b16 %v1068
  %v1077 = vunpack.c.l.b16 %v1069
  %v1078 = vunpack.c.l.b16 %v1070
  %v1079 = vunpack.c.l.b16 %v1071
  %v1080 = vpack.c.b16 %v1077, %v1076
  %v1081 = vpack.c.b16 %v1079, %v1078
  %1084 = vmatpush.bf16.msra.mxu0 0
  %1085 = vmatpush.bf16.msra.mxu0 0
  %1086 = vmatpush.bf16.msra.mxu0 0
  %1087 = vmatpush.bf16.msra.mxu0 0
  %1088 = vmatpush.bf16.msra.mxu0 0
  %1089 = vmatpush.bf16.msra.mxu0 0
  %1090 = vmatpush.bf16.msra.mxu0 %v1081
  %1091 = vmatpush.bf16.msra.mxu0 %v1080
  %1092 = vmatmul.bf16.gmra.mxu0 %v62
  %v1093 = vpop.f32.mrf.mxu0
  %v1094 = vadd.f32 0.0, %v1093
  %v1095 = vpop.f32.mrf.mxu0
  %v1096 = vadd.f32 0.0, %v1095
  %1097 = vdwg.mxu0
  %s1098 = scalar_lea.vmem %s4, 32
  %v1099 = vld [vmem:[%s1098] sm:$0xf]
  %v1100 = vld [vmem:[%s1098 + $0x4] sm:$0xf]
  %v1101 = vld [vmem:[%s1098 + $0x8] sm:$0xf]
  %v1102 = vld [vmem:[%s1098 + $0xc] sm:$0xf]
  %v1107 = vunpack.c.l.b16 %v1099
  %v1108 = vunpack.c.l.b16 %v1100
  %v1109 = vunpack.c.l.b16 %v1101
  %v1110 = vunpack.c.l.b16 %v1102
  %v1111 = vpack.c.b16 %v1108, %v1107
  %v1112 = vpack.c.b16 %v1110, %v1109
  %1115 = vmatpush.bf16.msra.mxu0 0
  %1116 = vmatpush.bf16.msra.mxu0 0
  %1117 = vmatpush.bf16.msra.mxu0 0
  %1118 = vmatpush.bf16.msra.mxu0 0
  %1119 = vmatpush.bf16.msra.mxu0 0
  %1120 = vmatpush.bf16.msra.mxu0 0
  %1121 = vmatpush.bf16.msra.mxu0 %v1112
  %1122 = vmatpush.bf16.msra.mxu0 %v1111
  %1123 = vmatmul.bf16.gmra.mxu0 %v569
  %v1124 = vpop.f32.mrf.mxu0
  %v1125 = vadd.f32 0.0, %v1124
  %v1126 = vpop.f32.mrf.mxu0
  %v1127 = vadd.f32 0.0, %v1126
  %1128 = vdwg.mxu0
  %s1129 = scalar_lea.vmem %s5, 32
  %v1130 = vld [vmem:[%s1129] sm:$0xf]
  %v1131 = vld [vmem:[%s1129 + $0x4] sm:$0xf]
  %v1132 = vld [vmem:[%s1129 + $0x8] sm:$0xf]
  %v1133 = vld [vmem:[%s1129 + $0xc] sm:$0xf]
  %v1138 = vunpack.c.l.b16 %v1130
  %v1139 = vunpack.c.l.b16 %v1131
  %v1140 = vunpack.c.l.b16 %v1132
  %v1141 = vunpack.c.l.b16 %v1133
  %v1142 = vpack.c.b16 %v1139, %v1138
  %v1143 = vpack.c.b16 %v1141, %v1140
  %1146 = vmatpush.bf16.msra.mxu0 0
  %1147 = vmatpush.bf16.msra.mxu0 0
  %1148 = vmatpush.bf16.msra.mxu0 0
  %1149 = vmatpush.bf16.msra.mxu0 0
  %1150 = vmatpush.bf16.msra.mxu0 0
  %1151 = vmatpush.bf16.msra.mxu0 0
  %1152 = vmatpush.bf16.msra.mxu0 %v1143
  %1153 = vmatpush.bf16.msra.mxu0 %v1142
  %1154 = vmatmul.bf16.gmra.mxu0 %v569
  %v1155 = vpop.f32.mrf.mxu0
  %v1156 = vadd.f32 0.0, %v1155
  %v1157 = vpop.f32.mrf.mxu0
  %v1158 = vadd.f32 0.0, %v1157
  %1159 = vdwg.mxu0
  %v1161 = vsel %vm138, %v1094, 0
  %v1164 = vsel %vm138, %v1096, 0
  %v1167 = vsel %vm138, %v1125, 0
  %v1170 = vsel %vm138, %v1127, 0
  %1172 = vmatpush.xpose.msra.mxu0 0.0
  %1173 = vmatpush.xpose.msra.mxu0 0.0
  %1174 = vmatpush.xpose.msra.mxu0 0.0
  %1175 = vmatpush.xpose.msra.mxu0 0.0
  %1176 = vmatpush.xpose.msra.mxu0 0.0
  %1177 = vmatpush.xpose.msra.mxu0 0.0
  %1178 = vmatpush.xpose.msra.mxu0 0.0
  %1179 = vmatpush.xpose.msra.mxu0 0.0
  %1180 = vmatpush.xpose.msra.mxu0 0.0
  %1181 = vmatpush.xpose.msra.mxu0 0.0
  %1182 = vmatpush.xpose.msra.mxu0 0.0
  %1183 = vmatpush.xpose.msra.mxu0 0.0
  %1184 = vmatpush.xpose.msra.mxu0 0.0
  %1185 = vmatpush.xpose.msra.mxu0 0.0
  %1186 = vmatpush.xpose.msra.mxu0 %v1170
  %1187 = vmatpush.xpose.msra.mxu0 %v1167
  %1188 = vmatmul.f32.gmra.mxu0 %v1161
  %v1189 = vpop.f32.mrf.mxu0
  %v1190 = vadd.f32 %v36, %v1189
  %1191 = vmatmul.f32.gmra.mxu0 %v1164
  %v1192 = vpop.f32.mrf.mxu0
  %v1193 = vadd.f32 %v37, %v1192
  %1194 = vdwg.mxu0
  %v1195 = vsel %vm174, %v1190, -inf
  %1196 = vmax.xlane.f32.xlu0 %v1195
  %v1197 = vpop.xlane.xlu0 %1196
  %v1198 = vsel %vm174, %v1193, -inf
  %1199 = vmax.xlane.f32.xlu0 %v1198
  %v1200 = vpop.xlane.xlu0 %1199
  %v1201 = vsub.f32 %v1190, %v1197
  %v1202 = vsub.f32 %v1193, %v1200
  %v1203 = vmul.f32 %v1201, 1.442695
  %v1204 = vpow.pop %v1203
  %v1205 = vmul.f32 %v1202, 1.442695
  %v1206 = vpow.pop %v1205
  %v1207 = vsel %vm174, %v1204, 0.0
  %1208 = vadd.xlane.f32.xlu0 %v1207
  %v1209 = vpop.xlane.xlu0 %1208
  %v1210 = vsel %vm174, %v1206, 0.0
  %1211 = vadd.xlane.f32.xlu0 %v1210
  %v1212 = vpop.xlane.xlu0 %1211
  %v1213 = vrcp.pop %v1209
  %v1214 = vrcp.pop %v1212
  %v1215 = vmul.f32 %v1204, %v1213
  %v1216 = vmul.f32 %v1206, %v1214
  %v1218 = vsel %vm174, %v1215, 0
  %v1221 = vsel %vm174, %v1216, 0
  %1223 = vmatpush.msra.mxu0 0.0
  %1224 = vmatpush.msra.mxu0 0.0
  %1225 = vmatpush.msra.mxu0 0.0
  %1226 = vmatpush.msra.mxu0 0.0
  %1227 = vmatpush.msra.mxu0 0.0
  %1228 = vmatpush.msra.mxu0 0.0
  %1229 = vmatpush.msra.mxu0 0.0
  %1230 = vmatpush.msra.mxu0 0.0
  %1231 = vmatpush.msra.mxu0 0.0
  %1232 = vmatpush.msra.mxu0 0.0
  %1233 = vmatpush.msra.mxu0 0.0
  %1234 = vmatpush.msra.mxu0 0.0
  %1235 = vmatpush.msra.mxu0 0.0
  %1236 = vmatpush.msra.mxu0 0.0
  %1237 = vmatpush.msra.mxu0 %v1158
  %1238 = vmatpush.msra.mxu0 %v1156
  %1239 = vmatmul.f32.gmra.mxu0 %v1218
  %v1240 = vpop.f32.mrf.mxu0
  %v1241 = vadd.f32 0.0, %v1240
  %1242 = vmatmul.f32.gmra.mxu0 %v1221
  %v1243 = vpop.f32.mrf.mxu0
  %v1244 = vadd.f32 0.0, %v1243
  %1245 = vdwg.mxu0
  %1248 = vrot.lane.b32.xlu0 %v1241, 64
  %v1249 = vpop.permute.xlu0 %1248
  %1250 = vrot.lane.b32.xlu0 %v1244, 64
  %v1251 = vpop.permute.xlu0 %1250
  %vm1254 = vcmask 589312
  %1255 = vst.msk [vmem:[#allocation2] sm:$0xff] %vm1254, %v1249
  %1256 = vst.msk [vmem:[#allocation2 + $0x8] sm:$0xff] %vm1254, %v1251
  %1257 = vrot.lane.b32.xlu0 %v1094, 120
  %v1258 = vpop.permute.xlu0 %1257
  %1259 = vrot.lane.b32.xlu0 %v1096, 120
  %v1260 = vpop.permute.xlu0 %1259
  %1261 = vrot.lane.b32.xlu0 %v1125, 120
  %v1262 = vpop.permute.xlu0 %1261
  %1263 = vrot.lane.b32.xlu0 %v1127, 120
  %v1264 = vpop.permute.xlu0 %1263
  %v1265 = vsel %vm138, %v1258, 0
  %v1267 = vsel %vm138, %v1260, 0
  %v1269 = vsel %vm138, %v1262, 0
  %v1271 = vsel %vm138, %v1264, 0
  %1273 = vmatpush.xpose.msra.mxu0 0.0
  %1274 = vmatpush.xpose.msra.mxu0 0.0
  %1275 = vmatpush.xpose.msra.mxu0 0.0
  %1276 = vmatpush.xpose.msra.mxu0 0.0
  %1277 = vmatpush.xpose.msra.mxu0 0.0
  %1278 = vmatpush.xpose.msra.mxu0 0.0
  %1279 = vmatpush.xpose.msra.mxu0 0.0
  %1280 = vmatpush.xpose.msra.mxu0 0.0
  %1281 = vmatpush.xpose.msra.mxu0 0.0
  %1282 = vmatpush.xpose.msra.mxu0 0.0
  %1283 = vmatpush.xpose.msra.mxu0 0.0
  %1284 = vmatpush.xpose.msra.mxu0 0.0
  %1285 = vmatpush.xpose.msra.mxu0 0.0
  %1286 = vmatpush.xpose.msra.mxu0 0.0
  %1287 = vmatpush.xpose.msra.mxu0 %v1271
  %1288 = vmatpush.xpose.msra.mxu0 %v1269
  %1289 = vmatmul.f32.gmra.mxu0 %v1265
  %v1290 = vpop.f32.mrf.mxu0
  %v1291 = vadd.f32 %v36, %v1290
  %1292 = vmatmul.f32.gmra.mxu0 %v1267
  %v1293 = vpop.f32.mrf.mxu0
  %v1294 = vadd.f32 %v37, %v1293
  %1295 = vdwg.mxu0
  %v1296 = vsel %vm174, %v1291, -inf
  %1297 = vmax.xlane.f32.xlu0 %v1296
  %v1298 = vpop.xlane.xlu0 %1297
  %v1299 = vsel %vm174, %v1294, -inf
  %1300 = vmax.xlane.f32.xlu0 %v1299
  %v1301 = vpop.xlane.xlu0 %1300
  %v1302 = vsub.f32 %v1291, %v1298
  %v1303 = vsub.f32 %v1294, %v1301
  %v1304 = vmul.f32 %v1302, 1.442695
  %v1305 = vpow.pop %v1304
  %v1306 = vmul.f32 %v1303, 1.442695
  %v1307 = vpow.pop %v1306
  %v1308 = vsel %vm174, %v1305, 0.0
  %1309 = vadd.xlane.f32.xlu0 %v1308
  %v1310 = vpop.xlane.xlu0 %1309
  %v1311 = vsel %vm174, %v1307, 0.0
  %1312 = vadd.xlane.f32.xlu0 %v1311
  %v1313 = vpop.xlane.xlu0 %1312
  %v1314 = vrcp.pop %v1310
  %v1315 = vrcp.pop %v1313
  %v1316 = vmul.f32 %v1305, %v1314
  %v1317 = vmul.f32 %v1307, %v1315
  %1320 = vrot.lane.b32.xlu0 %v1156, 120
  %v1321 = vpop.permute.xlu0 %1320
  %1322 = vrot.lane.b32.xlu0 %v1158, 120
  %v1323 = vpop.permute.xlu0 %1322
  %v1327 = vsel %vm174, %v1316, 0
  %v1330 = vsel %vm174, %v1317, 0
  %1332 = vmatpush.msra.mxu0 0.0
  %1333 = vmatpush.msra.mxu0 0.0
  %1334 = vmatpush.msra.mxu0 0.0
  %1335 = vmatpush.msra.mxu0 0.0
  %1336 = vmatpush.msra.mxu0 0.0
  %1337 = vmatpush.msra.mxu0 0.0
  %1338 = vmatpush.msra.mxu0 0.0
  %1339 = vmatpush.msra.mxu0 0.0
  %1340 = vmatpush.msra.mxu0 0.0
  %1341 = vmatpush.msra.mxu0 0.0
  %1342 = vmatpush.msra.mxu0 0.0
  %1343 = vmatpush.msra.mxu0 0.0
  %1344 = vmatpush.msra.mxu0 0.0
  %1345 = vmatpush.msra.mxu0 0.0
  %1346 = vmatpush.msra.mxu0 %v1323
  %1347 = vmatpush.msra.mxu0 %v1321
  %1348 = vmatmul.f32.gmra.mxu0 %v1327
  %v1349 = vpop.f32.mrf.mxu0
  %v1350 = vadd.f32 0.0, %v1349
  %1351 = vmatmul.f32.gmra.mxu0 %v1330
  %v1352 = vpop.f32.mrf.mxu0
  %v1353 = vadd.f32 0.0, %v1352
  %1354 = vdwg.mxu0
  %1357 = vrot.lane.b32.xlu0 %v1350, 72
  %v1358 = vpop.permute.xlu0 %1357
  %1359 = vrot.lane.b32.xlu0 %v1353, 72
  %v1360 = vpop.permute.xlu0 %1359
  %vm1363 = vcmask 654912
  %1364 = vst.msk [vmem:[#allocation2] sm:$0xff] %vm1363, %v1358
  %1365 = vst.msk [vmem:[#allocation2 + $0x8] sm:$0xff] %vm1363, %v1360
  %1366 = vrot.lane.b32.xlu0 %v1094, 112
  %v1367 = vpop.permute.xlu0 %1366
  %1368 = vrot.lane.b32.xlu0 %v1096, 112
  %v1369 = vpop.permute.xlu0 %1368
  %1370 = vrot.lane.b32.xlu0 %v1125, 112
  %v1371 = vpop.permute.xlu0 %1370
  %1372 = vrot.lane.b32.xlu0 %v1127, 112
  %v1373 = vpop.permute.xlu0 %1372
  %v1374 = vsel %vm138, %v1367, 0
  %v1376 = vsel %vm138, %v1369, 0
  %v1378 = vsel %vm138, %v1371, 0
  %v1380 = vsel %vm138, %v1373, 0
  %1382 = vmatpush.xpose.msra.mxu0 0.0
  %1383 = vmatpush.xpose.msra.mxu0 0.0
  %1384 = vmatpush.xpose.msra.mxu0 0.0
  %1385 = vmatpush.xpose.msra.mxu0 0.0
  %1386 = vmatpush.xpose.msra.mxu0 0.0
  %1387 = vmatpush.xpose.msra.mxu0 0.0
  %1388 = vmatpush.xpose.msra.mxu0 0.0
  %1389 = vmatpush.xpose.msra.mxu0 0.0
  %1390 = vmatpush.xpose.msra.mxu0 0.0
  %1391 = vmatpush.xpose.msra.mxu0 0.0
  %1392 = vmatpush.xpose.msra.mxu0 0.0
  %1393 = vmatpush.xpose.msra.mxu0 0.0
  %1394 = vmatpush.xpose.msra.mxu0 0.0
  %1395 = vmatpush.xpose.msra.mxu0 0.0
  %1396 = vmatpush.xpose.msra.mxu0 %v1380
  %1397 = vmatpush.xpose.msra.mxu0 %v1378
  %1398 = vmatmul.f32.gmra.mxu0 %v1374
  %v1399 = vpop.f32.mrf.mxu0
  %v1400 = vadd.f32 %v36, %v1399
  %1401 = vmatmul.f32.gmra.mxu0 %v1376
  %v1402 = vpop.f32.mrf.mxu0
  %v1403 = vadd.f32 %v37, %v1402
  %1404 = vdwg.mxu0
  %v1405 = vsel %vm174, %v1400, -inf
  %1406 = vmax.xlane.f32.xlu0 %v1405
  %v1407 = vpop.xlane.xlu0 %1406
  %v1408 = vsel %vm174, %v1403, -inf
  %1409 = vmax.xlane.f32.xlu0 %v1408
  %v1410 = vpop.xlane.xlu0 %1409
  %v1411 = vsub.f32 %v1400, %v1407
  %v1412 = vsub.f32 %v1403, %v1410
  %v1413 = vmul.f32 %v1411, 1.442695
  %v1414 = vpow.pop %v1413
  %v1415 = vmul.f32 %v1412, 1.442695
  %v1416 = vpow.pop %v1415
  %v1417 = vsel %vm174, %v1414, 0.0
  %1418 = vadd.xlane.f32.xlu0 %v1417
  %v1419 = vpop.xlane.xlu0 %1418
  %v1420 = vsel %vm174, %v1416, 0.0
  %1421 = vadd.xlane.f32.xlu0 %v1420
  %v1422 = vpop.xlane.xlu0 %1421
  %v1423 = vrcp.pop %v1419
  %v1424 = vrcp.pop %v1422
  %v1425 = vmul.f32 %v1414, %v1423
  %v1426 = vmul.f32 %v1416, %v1424
  %1427 = vrot.lane.b32.xlu0 %v1156, 112
  %v1428 = vpop.permute.xlu0 %1427
  %1429 = vrot.lane.b32.xlu0 %v1158, 112
  %v1430 = vpop.permute.xlu0 %1429
  %v1434 = vsel %vm174, %v1425, 0
  %v1437 = vsel %vm174, %v1426, 0
  %1439 = vmatpush.msra.mxu0 0.0
  %1440 = vmatpush.msra.mxu0 0.0
  %1441 = vmatpush.msra.mxu0 0.0
  %1442 = vmatpush.msra.mxu0 0.0
  %1443 = vmatpush.msra.mxu0 0.0
  %1444 = vmatpush.msra.mxu0 0.0
  %1445 = vmatpush.msra.mxu0 0.0
  %1446 = vmatpush.msra.mxu0 0.0
  %1447 = vmatpush.msra.mxu0 0.0
  %1448 = vmatpush.msra.mxu0 0.0
  %1449 = vmatpush.msra.mxu0 0.0
  %1450 = vmatpush.msra.mxu0 0.0
  %1451 = vmatpush.msra.mxu0 0.0
  %1452 = vmatpush.msra.mxu0 0.0
  %1453 = vmatpush.msra.mxu0 %v1430
  %1454 = vmatpush.msra.mxu0 %v1428
  %1455 = vmatmul.f32.gmra.mxu0 %v1434
  %v1456 = vpop.f32.mrf.mxu0
  %v1457 = vadd.f32 0.0, %v1456
  %1458 = vmatmul.f32.gmra.mxu0 %v1437
  %v1459 = vpop.f32.mrf.mxu0
  %v1460 = vadd.f32 0.0, %v1459
  %1461 = vdwg.mxu0
  %1464 = vrot.lane.b32.xlu0 %v1457, 80
  %v1465 = vpop.permute.xlu0 %1464
  %1466 = vrot.lane.b32.xlu0 %v1460, 80
  %v1467 = vpop.permute.xlu0 %1466
  %vm1470 = vcmask 720512
  %1471 = vst.msk [vmem:[#allocation2] sm:$0xff] %vm1470, %v1465
  %1472 = vst.msk [vmem:[#allocation2 + $0x8] sm:$0xff] %vm1470, %v1467
  %1473 = vrot.lane.b32.xlu0 %v1094, 104
  %v1474 = vpop.permute.xlu0 %1473
  %1475 = vrot.lane.b32.xlu0 %v1096, 104
  %v1476 = vpop.permute.xlu0 %1475
  %1477 = vrot.lane.b32.xlu0 %v1125, 104
  %v1478 = vpop.permute.xlu0 %1477
  %1479 = vrot.lane.b32.xlu0 %v1127, 104
  %v1480 = vpop.permute.xlu0 %1479
  %v1481 = vsel %vm138, %v1474, 0
  %v1483 = vsel %vm138, %v1476, 0
  %v1485 = vsel %vm138, %v1478, 0
  %v1487 = vsel %vm138, %v1480, 0
  %1489 = vmatpush.xpose.msra.mxu0 0.0
  %1490 = vmatpush.xpose.msra.mxu0 0.0
  %1491 = vmatpush.xpose.msra.mxu0 0.0
  %1492 = vmatpush.xpose.msra.mxu0 0.0
  %1493 = vmatpush.xpose.msra.mxu0 0.0
  %1494 = vmatpush.xpose.msra.mxu0 0.0
  %1495 = vmatpush.xpose.msra.mxu0 0.0
  %1496 = vmatpush.xpose.msra.mxu0 0.0
  %1497 = vmatpush.xpose.msra.mxu0 0.0
  %1498 = vmatpush.xpose.msra.mxu0 0.0
  %1499 = vmatpush.xpose.msra.mxu0 0.0
  %1500 = vmatpush.xpose.msra.mxu0 0.0
  %1501 = vmatpush.xpose.msra.mxu0 0.0
  %1502 = vmatpush.xpose.msra.mxu0 0.0
  %1503 = vmatpush.xpose.msra.mxu0 %v1487
  %1504 = vmatpush.xpose.msra.mxu0 %v1485
  %1505 = vmatmul.f32.gmra.mxu0 %v1481
  %v1506 = vpop.f32.mrf.mxu0
  %v1507 = vadd.f32 %v36, %v1506
  %1508 = vmatmul.f32.gmra.mxu0 %v1483
  %v1509 = vpop.f32.mrf.mxu0
  %v1510 = vadd.f32 %v37, %v1509
  %1511 = vdwg.mxu0
  %v1512 = vsel %vm174, %v1507, -inf
  %1513 = vmax.xlane.f32.xlu0 %v1512
  %v1514 = vpop.xlane.xlu0 %1513
  %v1515 = vsel %vm174, %v1510, -inf
  %1516 = vmax.xlane.f32.xlu0 %v1515
  %v1517 = vpop.xlane.xlu0 %1516
  %v1518 = vsub.f32 %v1507, %v1514
  %v1519 = vsub.f32 %v1510, %v1517
  %v1520 = vmul.f32 %v1518, 1.442695
  %v1521 = vpow.pop %v1520
  %v1522 = vmul.f32 %v1519, 1.442695
  %v1523 = vpow.pop %v1522
  %v1524 = vsel %vm174, %v1521, 0.0
  %1525 = vadd.xlane.f32.xlu0 %v1524
  %v1526 = vpop.xlane.xlu0 %1525
  %v1527 = vsel %vm174, %v1523, 0.0
  %1528 = vadd.xlane.f32.xlu0 %v1527
  %v1529 = vpop.xlane.xlu0 %1528
  %v1530 = vrcp.pop %v1526
  %v1531 = vrcp.pop %v1529
  %v1532 = vmul.f32 %v1521, %v1530
  %v1533 = vmul.f32 %v1523, %v1531
  %1534 = vrot.lane.b32.xlu0 %v1156, 104
  %v1535 = vpop.permute.xlu0 %1534
  %1536 = vrot.lane.b32.xlu0 %v1158, 104
  %v1537 = vpop.permute.xlu0 %1536
  %v1541 = vsel %vm174, %v1532, 0
  %v1544 = vsel %vm174, %v1533, 0
  %1546 = vmatpush.msra.mxu0 0.0
  %1547 = vmatpush.msra.mxu0 0.0
  %1548 = vmatpush.msra.mxu0 0.0
  %1549 = vmatpush.msra.mxu0 0.0
  %1550 = vmatpush.msra.mxu0 0.0
  %1551 = vmatpush.msra.mxu0 0.0
  %1552 = vmatpush.msra.mxu0 0.0
  %1553 = vmatpush.msra.mxu0 0.0
  %1554 = vmatpush.msra.mxu0 0.0
  %1555 = vmatpush.msra.mxu0 0.0
  %1556 = vmatpush.msra.mxu0 0.0
  %1557 = vmatpush.msra.mxu0 0.0
  %1558 = vmatpush.msra.mxu0 0.0
  %1559 = vmatpush.msra.mxu0 0.0
  %1560 = vmatpush.msra.mxu0 %v1537
  %1561 = vmatpush.msra.mxu0 %v1535
  %1562 = vmatmul.f32.gmra.mxu0 %v1541
  %v1563 = vpop.f32.mrf.mxu0
  %v1564 = vadd.f32 0.0, %v1563
  %1565 = vmatmul.f32.gmra.mxu0 %v1544
  %v1566 = vpop.f32.mrf.mxu0
  %v1567 = vadd.f32 0.0, %v1566
  %1568 = vdwg.mxu0
  %1571 = vrot.lane.b32.xlu0 %v1564, 88
  %v1572 = vpop.permute.xlu0 %1571
  %1573 = vrot.lane.b32.xlu0 %v1567, 88
  %v1574 = vpop.permute.xlu0 %1573
  %vm1577 = vcmask 786112
  %1578 = vst.msk [vmem:[#allocation2] sm:$0xff] %vm1577, %v1572
  %1579 = vst.msk [vmem:[#allocation2 + $0x8] sm:$0xff] %vm1577, %v1574
  %s1580 = scalar_lea.vmem %s3, 48
  %v1581 = vld [vmem:[%s1580] sm:$0xf]
  %v1582 = vld [vmem:[%s1580 + $0x4] sm:$0xf]
  %v1583 = vld [vmem:[%s1580 + $0x8] sm:$0xf]
  %v1584 = vld [vmem:[%s1580 + $0xc] sm:$0xf]
  %v1589 = vunpack.c.l.b16 %v1581
  %v1590 = vunpack.c.l.b16 %v1582
  %v1591 = vunpack.c.l.b16 %v1583
  %v1592 = vunpack.c.l.b16 %v1584
  %v1593 = vpack.c.b16 %v1590, %v1589
  %v1594 = vpack.c.b16 %v1592, %v1591
  %1597 = vmatpush.bf16.msra.mxu0 0
  %1598 = vmatpush.bf16.msra.mxu0 0
  %1599 = vmatpush.bf16.msra.mxu0 0
  %1600 = vmatpush.bf16.msra.mxu0 0
  %1601 = vmatpush.bf16.msra.mxu0 0
  %1602 = vmatpush.bf16.msra.mxu0 0
  %1603 = vmatpush.bf16.msra.mxu0 %v1594
  %1604 = vmatpush.bf16.msra.mxu0 %v1593
  %1605 = vmatmul.bf16.gmra.mxu0 %v569
  %v1606 = vpop.f32.mrf.mxu0
  %v1607 = vadd.f32 0.0, %v1606
  %v1608 = vpop.f32.mrf.mxu0
  %v1609 = vadd.f32 0.0, %v1608
  %1610 = vdwg.mxu0
  %s1611 = scalar_lea.vmem %s4, 48
  %v1612 = vld [vmem:[%s1611] sm:$0xf]
  %v1613 = vld [vmem:[%s1611 + $0x4] sm:$0xf]
  %v1614 = vld [vmem:[%s1611 + $0x8] sm:$0xf]
  %v1615 = vld [vmem:[%s1611 + $0xc] sm:$0xf]
  %v1620 = vunpack.c.l.b16 %v1612
  %v1621 = vunpack.c.l.b16 %v1613
  %v1622 = vunpack.c.l.b16 %v1614
  %v1623 = vunpack.c.l.b16 %v1615
  %v1624 = vpack.c.b16 %v1621, %v1620
  %v1625 = vpack.c.b16 %v1623, %v1622
  %1628 = vmatpush.bf16.msra.mxu0 0
  %1629 = vmatpush.bf16.msra.mxu0 0
  %1630 = vmatpush.bf16.msra.mxu0 0
  %1631 = vmatpush.bf16.msra.mxu0 0
  %1632 = vmatpush.bf16.msra.mxu0 0
  %1633 = vmatpush.bf16.msra.mxu0 0
  %1634 = vmatpush.bf16.msra.mxu0 %v1625
  %1635 = vmatpush.bf16.msra.mxu0 %v1624
  %1636 = vmatmul.bf16.gmra.mxu0 %v62
  %v1637 = vpop.f32.mrf.mxu0
  %v1638 = vadd.f32 0.0, %v1637
  %v1639 = vpop.f32.mrf.mxu0
  %v1640 = vadd.f32 0.0, %v1639
  %1641 = vdwg.mxu0
  %s1642 = scalar_lea.vmem %s5, 48
  %v1643 = vld [vmem:[%s1642] sm:$0xf]
  %v1644 = vld [vmem:[%s1642 + $0x4] sm:$0xf]
  %v1645 = vld [vmem:[%s1642 + $0x8] sm:$0xf]
  %v1646 = vld [vmem:[%s1642 + $0xc] sm:$0xf]
  %v1651 = vunpack.c.l.b16 %v1643
  %v1652 = vunpack.c.l.b16 %v1644
  %v1653 = vunpack.c.l.b16 %v1645
  %v1654 = vunpack.c.l.b16 %v1646
  %v1655 = vpack.c.b16 %v1652, %v1651
  %v1656 = vpack.c.b16 %v1654, %v1653
  %1659 = vmatpush.bf16.msra.mxu0 0
  %1660 = vmatpush.bf16.msra.mxu0 0
  %1661 = vmatpush.bf16.msra.mxu0 0
  %1662 = vmatpush.bf16.msra.mxu0 0
  %1663 = vmatpush.bf16.msra.mxu0 0
  %1664 = vmatpush.bf16.msra.mxu0 0
  %1665 = vmatpush.bf16.msra.mxu0 %v1656
  %1666 = vmatpush.bf16.msra.mxu0 %v1655
  %1667 = vmatmul.bf16.gmra.mxu0 %v62
  %v1668 = vpop.f32.mrf.mxu0
  %v1669 = vadd.f32 0.0, %v1668
  %v1670 = vpop.f32.mrf.mxu0
  %v1671 = vadd.f32 0.0, %v1670
  %1672 = vdwg.mxu0
  %v1674 = vsel %vm138, %v1607, 0
  %v1677 = vsel %vm138, %v1609, 0
  %v1680 = vsel %vm138, %v1638, 0
  %v1683 = vsel %vm138, %v1640, 0
  %1685 = vmatpush.xpose.msra.mxu0 0.0
  %1686 = vmatpush.xpose.msra.mxu0 0.0
  %1687 = vmatpush.xpose.msra.mxu0 0.0
  %1688 = vmatpush.xpose.msra.mxu0 0.0
  %1689 = vmatpush.xpose.msra.mxu0 0.0
  %1690 = vmatpush.xpose.msra.mxu0 0.0
  %1691 = vmatpush.xpose.msra.mxu0 0.0
  %1692 = vmatpush.xpose.msra.mxu0 0.0
  %1693 = vmatpush.xpose.msra.mxu0 0.0
  %1694 = vmatpush.xpose.msra.mxu0 0.0
  %1695 = vmatpush.xpose.msra.mxu0 0.0
  %1696 = vmatpush.xpose.msra.mxu0 0.0
  %1697 = vmatpush.xpose.msra.mxu0 0.0
  %1698 = vmatpush.xpose.msra.mxu0 0.0
  %1699 = vmatpush.xpose.msra.mxu0 %v1683
  %1700 = vmatpush.xpose.msra.mxu0 %v1680
  %1701 = vmatmul.f32.gmra.mxu0 %v1674
  %v1702 = vpop.f32.mrf.mxu0
  %v1703 = vadd.f32 %v36, %v1702
  %1704 = vmatmul.f32.gmra.mxu0 %v1677
  %v1705 = vpop.f32.mrf.mxu0
  %v1706 = vadd.f32 %v37, %v1705
  %1707 = vdwg.mxu0
  %v1708 = vsel %vm174, %v1703, -inf
  %1709 = vmax.xlane.f32.xlu0 %v1708
  %v1710 = vpop.xlane.xlu0 %1709
  %v1711 = vsel %vm174, %v1706, -inf
  %1712 = vmax.xlane.f32.xlu0 %v1711
  %v1713 = vpop.xlane.xlu0 %1712
  %v1714 = vsub.f32 %v1703, %v1710
  %v1715 = vsub.f32 %v1706, %v1713
  %v1716 = vmul.f32 %v1714, 1.442695
  %v1717 = vpow.pop %v1716
  %v1718 = vmul.f32 %v1715, 1.442695
  %v1719 = vpow.pop %v1718
  %v1720 = vsel %vm174, %v1717, 0.0
  %1721 = vadd.xlane.f32.xlu0 %v1720
  %v1722 = vpop.xlane.xlu0 %1721
  %v1723 = vsel %vm174, %v1719, 0.0
  %1724 = vadd.xlane.f32.xlu0 %v1723
  %v1725 = vpop.xlane.xlu0 %1724
  %v1726 = vrcp.pop %v1722
  %v1727 = vrcp.pop %v1725
  %v1728 = vmul.f32 %v1717, %v1726
  %v1729 = vmul.f32 %v1719, %v1727
  %v1731 = vsel %vm174, %v1728, 0
  %v1734 = vsel %vm174, %v1729, 0
  %1736 = vmatpush.msra.mxu0 0.0
  %1737 = vmatpush.msra.mxu0 0.0
  %1738 = vmatpush.msra.mxu0 0.0
  %1739 = vmatpush.msra.mxu0 0.0
  %1740 = vmatpush.msra.mxu0 0.0
  %1741 = vmatpush.msra.mxu0 0.0
  %1742 = vmatpush.msra.mxu0 0.0
  %1743 = vmatpush.msra.mxu0 0.0
  %1744 = vmatpush.msra.mxu0 0.0
  %1745 = vmatpush.msra.mxu0 0.0
  %1746 = vmatpush.msra.mxu0 0.0
  %1747 = vmatpush.msra.mxu0 0.0
  %1748 = vmatpush.msra.mxu0 0.0
  %1749 = vmatpush.msra.mxu0 0.0
  %1750 = vmatpush.msra.mxu0 %v1671
  %1751 = vmatpush.msra.mxu0 %v1669
  %1752 = vmatmul.f32.gmra.mxu0 %v1731
  %v1753 = vpop.f32.mrf.mxu0
  %v1754 = vadd.f32 0.0, %v1753
  %1755 = vmatmul.f32.gmra.mxu0 %v1734
  %v1756 = vpop.f32.mrf.mxu0
  %v1757 = vadd.f32 0.0, %v1756
  %1758 = vdwg.mxu0
  %1761 = vrot.lane.b32.xlu0 %v1754, 96
  %v1762 = vpop.permute.xlu0 %1761
  %1763 = vrot.lane.b32.xlu0 %v1757, 96
  %v1764 = vpop.permute.xlu0 %1763
  %vm1767 = vcmask 851712
  %1768 = vst.msk [vmem:[#allocation2] sm:$0xff] %vm1767, %v1762
  %1769 = vst.msk [vmem:[#allocation2 + $0x8] sm:$0xff] %vm1767, %v1764
  %1770 = vrot.lane.b32.xlu0 %v1607, 120
  %v1771 = vpop.permute.xlu0 %1770
  %1772 = vrot.lane.b32.xlu0 %v1609, 120
  %v1773 = vpop.permute.xlu0 %1772
  %1774 = vrot.lane.b32.xlu0 %v1638, 120
  %v1775 = vpop.permute.xlu0 %1774
  %1776 = vrot.lane.b32.xlu0 %v1640, 120
  %v1777 = vpop.permute.xlu0 %1776
  %v1778 = vsel %vm138, %v1771, 0
  %v1780 = vsel %vm138, %v1773, 0
  %v1782 = vsel %vm138, %v1775, 0
  %v1784 = vsel %vm138, %v1777, 0
  %1786 = vmatpush.xpose.msra.mxu0 0.0
  %1787 = vmatpush.xpose.msra.mxu0 0.0
  %1788 = vmatpush.xpose.msra.mxu0 0.0
  %1789 = vmatpush.xpose.msra.mxu0 0.0
  %1790 = vmatpush.xpose.msra.mxu0 0.0
  %1791 = vmatpush.xpose.msra.mxu0 0.0
  %1792 = vmatpush.xpose.msra.mxu0 0.0
  %1793 = vmatpush.xpose.msra.mxu0 0.0
  %1794 = vmatpush.xpose.msra.mxu0 0.0
  %1795 = vmatpush.xpose.msra.mxu0 0.0
  %1796 = vmatpush.xpose.msra.mxu0 0.0
  %1797 = vmatpush.xpose.msra.mxu0 0.0
  %1798 = vmatpush.xpose.msra.mxu0 0.0
  %1799 = vmatpush.xpose.msra.mxu0 0.0
  %1800 = vmatpush.xpose.msra.mxu0 %v1784
  %1801 = vmatpush.xpose.msra.mxu0 %v1782
  %1802 = vmatmul.f32.gmra.mxu0 %v1778
  %v1803 = vpop.f32.mrf.mxu0
  %v1804 = vadd.f32 %v36, %v1803
  %1805 = vmatmul.f32.gmra.mxu0 %v1780
  %v1806 = vpop.f32.mrf.mxu0
  %v1807 = vadd.f32 %v37, %v1806
  %1808 = vdwg.mxu0
  %v1809 = vsel %vm174, %v1804, -inf
  %1810 = vmax.xlane.f32.xlu0 %v1809
  %v1811 = vpop.xlane.xlu0 %1810
  %v1812 = vsel %vm174, %v1807, -inf
  %1813 = vmax.xlane.f32.xlu0 %v1812
  %v1814 = vpop.xlane.xlu0 %1813
  %v1815 = vsub.f32 %v1804, %v1811
  %v1816 = vsub.f32 %v1807, %v1814
  %v1817 = vmul.f32 %v1815, 1.442695
  %v1818 = vpow.pop %v1817
  %v1819 = vmul.f32 %v1816, 1.442695
  %v1820 = vpow.pop %v1819
  %v1821 = vsel %vm174, %v1818, 0.0
  %1822 = vadd.xlane.f32.xlu0 %v1821
  %v1823 = vpop.xlane.xlu0 %1822
  %v1824 = vsel %vm174, %v1820, 0.0
  %1825 = vadd.xlane.f32.xlu0 %v1824
  %v1826 = vpop.xlane.xlu0 %1825
  %v1827 = vrcp.pop %v1823
  %v1828 = vrcp.pop %v1826
  %v1829 = vmul.f32 %v1818, %v1827
  %v1830 = vmul.f32 %v1820, %v1828
  %1833 = vrot.lane.b32.xlu0 %v1669, 120
  %v1834 = vpop.permute.xlu0 %1833
  %1835 = vrot.lane.b32.xlu0 %v1671, 120
  %v1836 = vpop.permute.xlu0 %1835
  %v1840 = vsel %vm174, %v1829, 0
  %v1843 = vsel %vm174, %v1830, 0
  %1845 = vmatpush.msra.mxu0 0.0
  %1846 = vmatpush.msra.mxu0 0.0
  %1847 = vmatpush.msra.mxu0 0.0
  %1848 = vmatpush.msra.mxu0 0.0
  %1849 = vmatpush.msra.mxu0 0.0
  %1850 = vmatpush.msra.mxu0 0.0
  %1851 = vmatpush.msra.mxu0 0.0
  %1852 = vmatpush.msra.mxu0 0.0
  %1853 = vmatpush.msra.mxu0 0.0
  %1854 = vmatpush.msra.mxu0 0.0
  %1855 = vmatpush.msra.mxu0 0.0
  %1856 = vmatpush.msra.mxu0 0.0
  %1857 = vmatpush.msra.mxu0 0.0
  %1858 = vmatpush.msra.mxu0 0.0
  %1859 = vmatpush.msra.mxu0 %v1836
  %1860 = vmatpush.msra.mxu0 %v1834
  %1861 = vmatmul.f32.gmra.mxu0 %v1840
  %v1862 = vpop.f32.mrf.mxu0
  %v1863 = vadd.f32 0.0, %v1862
  %1864 = vmatmul.f32.gmra.mxu0 %v1843
  %v1865 = vpop.f32.mrf.mxu0
  %v1866 = vadd.f32 0.0, %v1865
  %1867 = vdwg.mxu0
  %1870 = vrot.lane.b32.xlu0 %v1863, 104
  %v1871 = vpop.permute.xlu0 %1870
  %1872 = vrot.lane.b32.xlu0 %v1866, 104
  %v1873 = vpop.permute.xlu0 %1872
  %vm1876 = vcmask 917312
  %1877 = vst.msk [vmem:[#allocation2] sm:$0xff] %vm1876, %v1871
  %1878 = vst.msk [vmem:[#allocation2 + $0x8] sm:$0xff] %vm1876, %v1873
  %1879 = vrot.lane.b32.xlu0 %v1607, 112
  %v1880 = vpop.permute.xlu0 %1879
  %1881 = vrot.lane.b32.xlu0 %v1609, 112
  %v1882 = vpop.permute.xlu0 %1881
  %1883 = vrot.lane.b32.xlu0 %v1638, 112
  %v1884 = vpop.permute.xlu0 %1883
  %1885 = vrot.lane.b32.xlu0 %v1640, 112
  %v1886 = vpop.permute.xlu0 %1885
  %v1887 = vsel %vm138, %v1880, 0
  %v1889 = vsel %vm138, %v1882, 0
  %v1891 = vsel %vm138, %v1884, 0
  %v1893 = vsel %vm138, %v1886, 0
  %1895 = vmatpush.xpose.msra.mxu0 0.0
  %1896 = vmatpush.xpose.msra.mxu0 0.0
  %1897 = vmatpush.xpose.msra.mxu0 0.0
  %1898 = vmatpush.xpose.msra.mxu0 0.0
  %1899 = vmatpush.xpose.msra.mxu0 0.0
  %1900 = vmatpush.xpose.msra.mxu0 0.0
  %1901 = vmatpush.xpose.msra.mxu0 0.0
  %1902 = vmatpush.xpose.msra.mxu0 0.0
  %1903 = vmatpush.xpose.msra.mxu0 0.0
  %1904 = vmatpush.xpose.msra.mxu0 0.0
  %1905 = vmatpush.xpose.msra.mxu0 0.0
  %1906 = vmatpush.xpose.msra.mxu0 0.0
  %1907 = vmatpush.xpose.msra.mxu0 0.0
  %1908 = vmatpush.xpose.msra.mxu0 0.0
  %1909 = vmatpush.xpose.msra.mxu0 %v1893
  %1910 = vmatpush.xpose.msra.mxu0 %v1891
  %1911 = vmatmul.f32.gmra.mxu0 %v1887
  %v1912 = vpop.f32.mrf.mxu0
  %v1913 = vadd.f32 %v36, %v1912
  %1914 = vmatmul.f32.gmra.mxu0 %v1889
  %v1915 = vpop.f32.mrf.mxu0
  %v1916 = vadd.f32 %v37, %v1915
  %1917 = vdwg.mxu0
  %v1918 = vsel %vm174, %v1913, -inf
  %1919 = vmax.xlane.f32.xlu0 %v1918
  %v1920 = vpop.xlane.xlu0 %1919
  %v1921 = vsel %vm174, %v1916, -inf
  %1922 = vmax.xlane.f32.xlu0 %v1921
  %v1923 = vpop.xlane.xlu0 %1922
  %v1924 = vsub.f32 %v1913, %v1920
  %v1925 = vsub.f32 %v1916, %v1923
  %v1926 = vmul.f32 %v1924, 1.442695
  %v1927 = vpow.pop %v1926
  %v1928 = vmul.f32 %v1925, 1.442695
  %v1929 = vpow.pop %v1928
  %v1930 = vsel %vm174, %v1927, 0.0
  %1931 = vadd.xlane.f32.xlu0 %v1930
  %v1932 = vpop.xlane.xlu0 %1931
  %v1933 = vsel %vm174, %v1929, 0.0
  %1934 = vadd.xlane.f32.xlu0 %v1933
  %v1935 = vpop.xlane.xlu0 %1934
  %v1936 = vrcp.pop %v1932
  %v1937 = vrcp.pop %v1935
  %v1938 = vmul.f32 %v1927, %v1936
  %v1939 = vmul.f32 %v1929, %v1937
  %1940 = vrot.lane.b32.xlu0 %v1669, 112
  %v1941 = vpop.permute.xlu0 %1940
  %1942 = vrot.lane.b32.xlu0 %v1671, 112
  %v1943 = vpop.permute.xlu0 %1942
  %v1947 = vsel %vm174, %v1938, 0
  %v1950 = vsel %vm174, %v1939, 0
  %1952 = vmatpush.msra.mxu0 0.0
  %1953 = vmatpush.msra.mxu0 0.0
  %1954 = vmatpush.msra.mxu0 0.0
  %1955 = vmatpush.msra.mxu0 0.0
  %1956 = vmatpush.msra.mxu0 0.0
  %1957 = vmatpush.msra.mxu0 0.0
  %1958 = vmatpush.msra.mxu0 0.0
  %1959 = vmatpush.msra.mxu0 0.0
  %1960 = vmatpush.msra.mxu0 0.0
  %1961 = vmatpush.msra.mxu0 0.0
  %1962 = vmatpush.msra.mxu0 0.0
  %1963 = vmatpush.msra.mxu0 0.0
  %1964 = vmatpush.msra.mxu0 0.0
  %1965 = vmatpush.msra.mxu0 0.0
  %1966 = vmatpush.msra.mxu0 %v1943
  %1967 = vmatpush.msra.mxu0 %v1941
  %1968 = vmatmul.f32.gmra.mxu0 %v1947
  %v1969 = vpop.f32.mrf.mxu0
  %v1970 = vadd.f32 0.0, %v1969
  %1971 = vmatmul.f32.gmra.mxu0 %v1950
  %v1972 = vpop.f32.mrf.mxu0
  %v1973 = vadd.f32 0.0, %v1972
  %1974 = vdwg.mxu0
  %1977 = vrot.lane.b32.xlu0 %v1970, 112
  %v1978 = vpop.permute.xlu0 %1977
  %1979 = vrot.lane.b32.xlu0 %v1973, 112
  %v1980 = vpop.permute.xlu0 %1979
  %vm1983 = vcmask 982912
  %1984 = vst.msk [vmem:[#allocation2] sm:$0xff] %vm1983, %v1978
  %1985 = vst.msk [vmem:[#allocation2 + $0x8] sm:$0xff] %vm1983, %v1980
  %1986 = vrot.lane.b32.xlu0 %v1607, 104
  %v1987 = vpop.permute.xlu0 %1986
  %1988 = vrot.lane.b32.xlu0 %v1609, 104
  %v1989 = vpop.permute.xlu0 %1988
  %1990 = vrot.lane.b32.xlu0 %v1638, 104
  %v1991 = vpop.permute.xlu0 %1990
  %1992 = vrot.lane.b32.xlu0 %v1640, 104
  %v1993 = vpop.permute.xlu0 %1992
  %v1994 = vsel %vm138, %v1987, 0
  %v1996 = vsel %vm138, %v1989, 0
  %v1998 = vsel %vm138, %v1991, 0
  %v2000 = vsel %vm138, %v1993, 0
  %2002 = vmatpush.xpose.msra.mxu0 0.0
  %2003 = vmatpush.xpose.msra.mxu0 0.0
  %2004 = vmatpush.xpose.msra.mxu0 0.0
  %2005 = vmatpush.xpose.msra.mxu0 0.0
  %2006 = vmatpush.xpose.msra.mxu0 0.0
  %2007 = vmatpush.xpose.msra.mxu0 0.0
  %2008 = vmatpush.xpose.msra.mxu0 0.0
  %2009 = vmatpush.xpose.msra.mxu0 0.0
  %2010 = vmatpush.xpose.msra.mxu0 0.0
  %2011 = vmatpush.xpose.msra.mxu0 0.0
  %2012 = vmatpush.xpose.msra.mxu0 0.0
  %2013 = vmatpush.xpose.msra.mxu0 0.0
  %2014 = vmatpush.xpose.msra.mxu0 0.0
  %2015 = vmatpush.xpose.msra.mxu0 0.0
  %2016 = vmatpush.xpose.msra.mxu0 %v2000
  %2017 = vmatpush.xpose.msra.mxu0 %v1998
  %2018 = vmatmul.f32.gmra.mxu0 %v1994
  %v2019 = vpop.f32.mrf.mxu0
  %v2020 = vadd.f32 %v36, %v2019
  %2021 = vmatmul.f32.gmra.mxu0 %v1996
  %v2022 = vpop.f32.mrf.mxu0
  %v2023 = vadd.f32 %v37, %v2022
  %2024 = vdwg.mxu0
  %v2025 = vsel %vm174, %v2020, -inf
  %2026 = vmax.xlane.f32.xlu0 %v2025
  %v2027 = vpop.xlane.xlu0 %2026
  %v2028 = vsel %vm174, %v2023, -inf
  %2029 = vmax.xlane.f32.xlu0 %v2028
  %v2030 = vpop.xlane.xlu0 %2029
  %v2031 = vsub.f32 %v2020, %v2027
  %v2032 = vsub.f32 %v2023, %v2030
  %v2033 = vmul.f32 %v2031, 1.442695
  %v2034 = vpow.pop %v2033
  %v2035 = vmul.f32 %v2032, 1.442695
  %v2036 = vpow.pop %v2035
  %v2037 = vsel %vm174, %v2034, 0.0
  %2038 = vadd.xlane.f32.xlu0 %v2037
  %v2039 = vpop.xlane.xlu0 %2038
  %v2040 = vsel %vm174, %v2036, 0.0
  %2041 = vadd.xlane.f32.xlu0 %v2040
  %v2042 = vpop.xlane.xlu0 %2041
  %v2043 = vrcp.pop %v2039
  %v2044 = vrcp.pop %v2042
  %v2045 = vmul.f32 %v2034, %v2043
  %v2046 = vmul.f32 %v2036, %v2044
  %2047 = vrot.lane.b32.xlu0 %v1669, 104
  %v2048 = vpop.permute.xlu0 %2047
  %2049 = vrot.lane.b32.xlu0 %v1671, 104
  %v2050 = vpop.permute.xlu0 %2049
  %v2054 = vsel %vm174, %v2045, 0
  %v2057 = vsel %vm174, %v2046, 0
  %2059 = vmatpush.msra.mxu0 0.0
  %2060 = vmatpush.msra.mxu0 0.0
  %2061 = vmatpush.msra.mxu0 0.0
  %2062 = vmatpush.msra.mxu0 0.0
  %2063 = vmatpush.msra.mxu0 0.0
  %2064 = vmatpush.msra.mxu0 0.0
  %2065 = vmatpush.msra.mxu0 0.0
  %2066 = vmatpush.msra.mxu0 0.0
  %2067 = vmatpush.msra.mxu0 0.0
  %2068 = vmatpush.msra.mxu0 0.0
  %2069 = vmatpush.msra.mxu0 0.0
  %2070 = vmatpush.msra.mxu0 0.0
  %2071 = vmatpush.msra.mxu0 0.0
  %2072 = vmatpush.msra.mxu0 0.0
  %2073 = vmatpush.msra.mxu0 %v2050
  %2074 = vmatpush.msra.mxu0 %v2048
  %2075 = vmatmul.f32.gmra.mxu0 %v2054
  %v2076 = vpop.f32.mrf.mxu0
  %v2077 = vadd.f32 0.0, %v2076
  %2078 = vmatmul.f32.gmra.mxu0 %v2057
  %v2079 = vpop.f32.mrf.mxu0
  %v2080 = vadd.f32 0.0, %v2079
  %2081 = vdwg.mxu0
  %2084 = vrot.lane.b32.xlu0 %v2077, 120
  %v2085 = vpop.permute.xlu0 %2084
  %2086 = vrot.lane.b32.xlu0 %v2080, 120
  %v2087 = vpop.permute.xlu0 %2086
  %vm2090 = vcmask 1048512
  %2091 = vst.msk [vmem:[#allocation2] sm:$0xff] %vm2090, %v2085
  %2092 = vst.msk [vmem:[#allocation2 + $0x8] sm:$0xff] %vm2090, %v2087
  %v2093 = vld [vmem:[#allocation2] sm:$0xff]
  %v2094 = vld [vmem:[#allocation2 + $0x8] sm:$0xff]
  %v2095 = vpack.c.bf16 %v2094, %v2093
  %v2096 = vld [vmem:[%s6] sm:$0xf]
  %v2097 = vld [vmem:[%s6 + $0x4] sm:$0xf]
  %v2098 = vld [vmem:[%s6 + $0x8] sm:$0xf]
  %v2099 = vld [vmem:[%s6 + $0xc] sm:$0xf]
  %v2100 = vld [vmem:[%s6 + $0x10] sm:$0xf]
  %v2101 = vld [vmem:[%s6 + $0x14] sm:$0xf]
  %v2102 = vld [vmem:[%s6 + $0x18] sm:$0xf]
  %v2103 = vld [vmem:[%s6 + $0x1c] sm:$0xf]
  %v2104 = vld [vmem:[%s6 + $0x20] sm:$0xf]
  %v2105 = vld [vmem:[%s6 + $0x24] sm:$0xf]
  %v2106 = vld [vmem:[%s6 + $0x28] sm:$0xf]
  %v2107 = vld [vmem:[%s6 + $0x2c] sm:$0xf]
  %v2108 = vld [vmem:[%s6 + $0x30] sm:$0xf]
  %v2109 = vld [vmem:[%s6 + $0x34] sm:$0xf]
  %v2110 = vld [vmem:[%s6 + $0x38] sm:$0xf]
  %v2111 = vld [vmem:[%s6 + $0x3c] sm:$0xf]
  %v2128 = vunpack.c.l.b16 %v2096
  %v2129 = vunpack.c.l.b16 %v2097
  %v2130 = vunpack.c.l.b16 %v2098
  %v2131 = vunpack.c.l.b16 %v2099
  %v2132 = vunpack.c.l.b16 %v2100
  %v2133 = vunpack.c.l.b16 %v2101
  %v2134 = vunpack.c.l.b16 %v2102
  %v2135 = vunpack.c.l.b16 %v2103
  %v2136 = vunpack.c.l.b16 %v2104
  %v2137 = vunpack.c.l.b16 %v2105
  %v2138 = vunpack.c.l.b16 %v2106
  %v2139 = vunpack.c.l.b16 %v2107
  %v2140 = vunpack.c.l.b16 %v2108
  %v2141 = vunpack.c.l.b16 %v2109
  %v2142 = vunpack.c.l.b16 %v2110
  %v2143 = vunpack.c.l.b16 %v2111
  %v2144 = vpack.c.b16 %v2129, %v2128
  %v2145 = vpack.c.b16 %v2131, %v2130
  %v2146 = vpack.c.b16 %v2133, %v2132
  %v2147 = vpack.c.b16 %v2135, %v2134
  %v2148 = vpack.c.b16 %v2137, %v2136
  %v2149 = vpack.c.b16 %v2139, %v2138
  %v2150 = vpack.c.b16 %v2141, %v2140
  %v2151 = vpack.c.b16 %v2143, %v2142
  %2160 = vmatpush.bf16.msra.mxu0 %v2151
  %2161 = vmatpush.bf16.msra.mxu0 %v2150
  %2162 = vmatpush.bf16.msra.mxu0 %v2149
  %2163 = vmatpush.bf16.msra.mxu0 %v2148
  %2164 = vmatpush.bf16.msra.mxu0 %v2147
  %2165 = vmatpush.bf16.msra.mxu0 %v2146
  %2166 = vmatpush.bf16.msra.mxu0 %v2145
  %2167 = vmatpush.bf16.msra.mxu0 %v2144
  %2168 = vmatmul.bf16.gmra.mxu0 %v2095
  %v2169 = vpop.f32.mrf.mxu0
  %v2170 = vadd.f32 0.0, %v2169
  %v2171 = vpop.f32.mrf.mxu0
  %v2172 = vadd.f32 0.0, %v2171
  %2173 = vdwg.mxu0
  %v2174 = vld [vmem:[%s7] sm:$0xf]
  %v2175 = vld [vmem:[%s7 + $0x4] sm:$0xf]
  %v2176 = vld [vmem:[%s7 + $0x8] sm:$0xf]
  %v2177 = vld [vmem:[%s7 + $0xc] sm:$0xf]
  %v2178 = vld [vmem:[%s7 + $0x10] sm:$0xf]
  %v2179 = vld [vmem:[%s7 + $0x14] sm:$0xf]
  %v2180 = vld [vmem:[%s7 + $0x18] sm:$0xf]
  %v2181 = vld [vmem:[%s7 + $0x1c] sm:$0xf]
  %v2182 = vld [vmem:[%s7 + $0x20] sm:$0xf]
  %v2183 = vld [vmem:[%s7 + $0x24] sm:$0xf]
  %v2184 = vld [vmem:[%s7 + $0x28] sm:$0xf]
  %v2185 = vld [vmem:[%s7 + $0x2c] sm:$0xf]
  %v2186 = vld [vmem:[%s7 + $0x30] sm:$0xf]
  %v2187 = vld [vmem:[%s7 + $0x34] sm:$0xf]
  %v2188 = vld [vmem:[%s7 + $0x38] sm:$0xf]
  %v2189 = vld [vmem:[%s7 + $0x3c] sm:$0xf]
  %v2206 = vunpack.c.l.b16 %v2174
  %v2207 = vunpack.c.l.b16 %v2175
  %v2208 = vunpack.c.l.b16 %v2176
  %v2209 = vunpack.c.l.b16 %v2177
  %v2210 = vunpack.c.l.b16 %v2178
  %v2211 = vunpack.c.l.b16 %v2179
  %v2212 = vunpack.c.l.b16 %v2180
  %v2213 = vunpack.c.l.b16 %v2181
  %v2214 = vunpack.c.l.b16 %v2182
  %v2215 = vunpack.c.l.b16 %v2183
  %v2216 = vunpack.c.l.b16 %v2184
  %v2217 = vunpack.c.l.b16 %v2185
  %v2218 = vunpack.c.l.b16 %v2186
  %v2219 = vunpack.c.l.b16 %v2187
  %v2220 = vunpack.c.l.b16 %v2188
  %v2221 = vunpack.c.l.b16 %v2189
  %v2222 = vpack.c.b16 %v2207, %v2206
  %v2223 = vpack.c.b16 %v2209, %v2208
  %v2224 = vpack.c.b16 %v2211, %v2210
  %v2225 = vpack.c.b16 %v2213, %v2212
  %v2226 = vpack.c.b16 %v2215, %v2214
  %v2227 = vpack.c.b16 %v2217, %v2216
  %v2228 = vpack.c.b16 %v2219, %v2218
  %v2229 = vpack.c.b16 %v2221, %v2220
  %2238 = vmatpush.bf16.msra.mxu0 %v2229
  %2239 = vmatpush.bf16.msra.mxu0 %v2228
  %2240 = vmatpush.bf16.msra.mxu0 %v2227
  %2241 = vmatpush.bf16.msra.mxu0 %v2226
  %2242 = vmatpush.bf16.msra.mxu0 %v2225
  %2243 = vmatpush.bf16.msra.mxu0 %v2224
  %2244 = vmatpush.bf16.msra.mxu0 %v2223
  %2245 = vmatpush.bf16.msra.mxu0 %v2222
  %2246 = vmatmul.bf16.gmra.mxu0 %v2095
  %v2247 = vpop.f32.mrf.mxu0
  %v2248 = vadd.f32 0.0, %v2247
  %v2249 = vpop.f32.mrf.mxu0
  %v2250 = vadd.f32 0.0, %v2249
  %2251 = vdwg.mxu0
  %v2252 = vld [vmem:[%s8] sm:$0xf]
  %v2253 = vld [vmem:[%s8 + $0x4] sm:$0xf]
  %v2254 = vld [vmem:[%s8 + $0x8] sm:$0xf]
  %v2255 = vld [vmem:[%s8 + $0xc] sm:$0xf]
  %v2256 = vld [vmem:[%s8 + $0x10] sm:$0xf]
  %v2257 = vld [vmem:[%s8 + $0x14] sm:$0xf]
  %v2258 = vld [vmem:[%s8 + $0x18] sm:$0xf]
  %v2259 = vld [vmem:[%s8 + $0x1c] sm:$0xf]
  %v2260 = vld [vmem:[%s8 + $0x20] sm:$0xf]
  %v2261 = vld [vmem:[%s8 + $0x24] sm:$0xf]
  %v2262 = vld [vmem:[%s8 + $0x28] sm:$0xf]
  %v2263 = vld [vmem:[%s8 + $0x2c] sm:$0xf]
  %v2264 = vld [vmem:[%s8 + $0x30] sm:$0xf]
  %v2265 = vld [vmem:[%s8 + $0x34] sm:$0xf]
  %v2266 = vld [vmem:[%s8 + $0x38] sm:$0xf]
  %v2267 = vld [vmem:[%s8 + $0x3c] sm:$0xf]
  %v2284 = vunpack.c.l.b16 %v2252
  %v2285 = vunpack.c.l.b16 %v2253
  %v2286 = vunpack.c.l.b16 %v2254
  %v2287 = vunpack.c.l.b16 %v2255
  %v2288 = vunpack.c.l.b16 %v2256
  %v2289 = vunpack.c.l.b16 %v2257
  %v2290 = vunpack.c.l.b16 %v2258
  %v2291 = vunpack.c.l.b16 %v2259
  %v2292 = vunpack.c.l.b16 %v2260
  %v2293 = vunpack.c.l.b16 %v2261
  %v2294 = vunpack.c.l.b16 %v2262
  %v2295 = vunpack.c.l.b16 %v2263
  %v2296 = vunpack.c.l.b16 %v2264
  %v2297 = vunpack.c.l.b16 %v2265
  %v2298 = vunpack.c.l.b16 %v2266
  %v2299 = vunpack.c.l.b16 %v2267
  %v2300 = vpack.c.b16 %v2285, %v2284
  %v2301 = vpack.c.b16 %v2287, %v2286
  %v2302 = vpack.c.b16 %v2289, %v2288
  %v2303 = vpack.c.b16 %v2291, %v2290
  %v2304 = vpack.c.b16 %v2293, %v2292
  %v2305 = vpack.c.b16 %v2295, %v2294
  %v2306 = vpack.c.b16 %v2297, %v2296
  %v2307 = vpack.c.b16 %v2299, %v2298
  %2316 = vmatpush.bf16.msra.mxu0 %v2307
  %2317 = vmatpush.bf16.msra.mxu0 %v2306
  %2318 = vmatpush.bf16.msra.mxu0 %v2305
  %2319 = vmatpush.bf16.msra.mxu0 %v2304
  %2320 = vmatpush.bf16.msra.mxu0 %v2303
  %2321 = vmatpush.bf16.msra.mxu0 %v2302
  %2322 = vmatpush.bf16.msra.mxu0 %v2301
  %2323 = vmatpush.bf16.msra.mxu0 %v2300
  %2324 = vmatmul.bf16.gmra.mxu0 %v2095
  %v2325 = vpop.f32.mrf.mxu0
  %v2326 = vadd.f32 0.0, %v2325
  %v2327 = vpop.f32.mrf.mxu0
  %v2328 = vadd.f32 0.0, %v2327
  %2329 = vdwg.mxu0
  %v2331 = vsel %vm138, %v2170, 0
  %v2334 = vsel %vm138, %v2172, 0
  %v2337 = vsel %vm138, %v2248, 0
  %v2340 = vsel %vm138, %v2250, 0
  %2342 = vmatpush.xpose.msra.mxu0 0.0
  %2343 = vmatpush.xpose.msra.mxu0 0.0
  %2344 = vmatpush.xpose.msra.mxu0 0.0
  %2345 = vmatpush.xpose.msra.mxu0 0.0
  %2346 = vmatpush.xpose.msra.mxu0 0.0
  %2347 = vmatpush.xpose.msra.mxu0 0.0
  %2348 = vmatpush.xpose.msra.mxu0 0.0
  %2349 = vmatpush.xpose.msra.mxu0 0.0
  %2350 = vmatpush.xpose.msra.mxu0 0.0
  %2351 = vmatpush.xpose.msra.mxu0 0.0
  %2352 = vmatpush.xpose.msra.mxu0 0.0
  %2353 = vmatpush.xpose.msra.mxu0 0.0
  %2354 = vmatpush.xpose.msra.mxu0 0.0
  %2355 = vmatpush.xpose.msra.mxu0 0.0
  %2356 = vmatpush.xpose.msra.mxu0 %v2340
  %2357 = vmatpush.xpose.msra.mxu0 %v2337
  %2358 = vmatmul.f32.gmra.mxu0 %v2331
  %v2359 = vpop.f32.mrf.mxu0
  %v2360 = vadd.f32 %v36, %v2359
  %2361 = vmatmul.f32.gmra.mxu0 %v2334
  %v2362 = vpop.f32.mrf.mxu0
  %v2363 = vadd.f32 %v37, %v2362
  %2364 = vdwg.mxu0
  %v2365 = vsel %vm174, %v2360, -inf
  %2366 = vmax.xlane.f32.xlu0 %v2365
  %v2367 = vpop.xlane.xlu0 %2366
  %v2368 = vsel %vm174, %v2363, -inf
  %2369 = vmax.xlane.f32.xlu0 %v2368
  %v2370 = vpop.xlane.xlu0 %2369
  %v2371 = vsub.f32 %v2360, %v2367
  %v2372 = vsub.f32 %v2363, %v2370
  %v2373 = vmul.f32 %v2371, 1.442695
  %v2374 = vpow.pop %v2373
  %v2375 = vmul.f32 %v2372, 1.442695
  %v2376 = vpow.pop %v2375
  %v2377 = vsel %vm174, %v2374, 0.0
  %2378 = vadd.xlane.f32.xlu0 %v2377
  %v2379 = vpop.xlane.xlu0 %2378
  %v2380 = vsel %vm174, %v2376, 0.0
  %2381 = vadd.xlane.f32.xlu0 %v2380
  %v2382 = vpop.xlane.xlu0 %2381
  %v2383 = vrcp.pop %v2379
  %v2384 = vrcp.pop %v2382
  %v2385 = vmul.f32 %v2374, %v2383
  %v2386 = vmul.f32 %v2376, %v2384
  %v2388 = vsel %vm174, %v2385, 0
  %v2391 = vsel %vm174, %v2386, 0
  %2393 = vmatpush.msra.mxu0 0.0
  %2394 = vmatpush.msra.mxu0 0.0
  %2395 = vmatpush.msra.mxu0 0.0
  %2396 = vmatpush.msra.mxu0 0.0
  %2397 = vmatpush.msra.mxu0 0.0
  %2398 = vmatpush.msra.mxu0 0.0
  %2399 = vmatpush.msra.mxu0 0.0
  %2400 = vmatpush.msra.mxu0 0.0
  %2401 = vmatpush.msra.mxu0 0.0
  %2402 = vmatpush.msra.mxu0 0.0
  %2403 = vmatpush.msra.mxu0 0.0
  %2404 = vmatpush.msra.mxu0 0.0
  %2405 = vmatpush.msra.mxu0 0.0
  %2406 = vmatpush.msra.mxu0 0.0
  %2407 = vmatpush.msra.mxu0 %v2328
  %2408 = vmatpush.msra.mxu0 %v2326
  %2409 = vmatmul.f32.gmra.mxu0 %v2388
  %v2410 = vpop.f32.mrf.mxu0
  %v2411 = vadd.f32 0.0, %v2410
  %2412 = vmatmul.f32.gmra.mxu0 %v2391
  %v2413 = vpop.f32.mrf.mxu0
  %v2414 = vadd.f32 0.0, %v2413
  %2415 = vdwg.mxu0
  %2416 = vst.msk [vmem:[#allocation3] sm:$0xff] %vm138, %v2411
  %2417 = vst.msk [vmem:[#allocation3 + $0x8] sm:$0xff] %vm138, %v2414
  %2418 = vrot.lane.b32.xlu0 %v2170, 120
  %v2419 = vpop.permute.xlu0 %2418
  %2420 = vrot.lane.b32.xlu0 %v2172, 120
  %v2421 = vpop.permute.xlu0 %2420
  %2422 = vrot.lane.b32.xlu0 %v2248, 120
  %v2423 = vpop.permute.xlu0 %2422
  %2424 = vrot.lane.b32.xlu0 %v2250, 120
  %v2425 = vpop.permute.xlu0 %2424
  %v2426 = vsel %vm138, %v2419, 0
  %v2428 = vsel %vm138, %v2421, 0
  %v2430 = vsel %vm138, %v2423, 0
  %v2432 = vsel %vm138, %v2425, 0
  %2434 = vmatpush.xpose.msra.mxu0 0.0
  %2435 = vmatpush.xpose.msra.mxu0 0.0
  %2436 = vmatpush.xpose.msra.mxu0 0.0
  %2437 = vmatpush.xpose.msra.mxu0 0.0
  %2438 = vmatpush.xpose.msra.mxu0 0.0
  %2439 = vmatpush.xpose.msra.mxu0 0.0
  %2440 = vmatpush.xpose.msra.mxu0 0.0
  %2441 = vmatpush.xpose.msra.mxu0 0.0
  %2442 = vmatpush.xpose.msra.mxu0 0.0
  %2443 = vmatpush.xpose.msra.mxu0 0.0
  %2444 = vmatpush.xpose.msra.mxu0 0.0
  %2445 = vmatpush.xpose.msra.mxu0 0.0
  %2446 = vmatpush.xpose.msra.mxu0 0.0
  %2447 = vmatpush.xpose.msra.mxu0 0.0
  %2448 = vmatpush.xpose.msra.mxu0 %v2432
  %2449 = vmatpush.xpose.msra.mxu0 %v2430
  %2450 = vmatmul.f32.gmra.mxu0 %v2426
  %v2451 = vpop.f32.mrf.mxu0
  %v2452 = vadd.f32 %v36, %v2451
  %2453 = vmatmul.f32.gmra.mxu0 %v2428
  %v2454 = vpop.f32.mrf.mxu0
  %v2455 = vadd.f32 %v37, %v2454
  %2456 = vdwg.mxu0
  %v2457 = vsel %vm174, %v2452, -inf
  %2458 = vmax.xlane.f32.xlu0 %v2457
  %v2459 = vpop.xlane.xlu0 %2458
  %v2460 = vsel %vm174, %v2455, -inf
  %2461 = vmax.xlane.f32.xlu0 %v2460
  %v2462 = vpop.xlane.xlu0 %2461
  %v2463 = vsub.f32 %v2452, %v2459
  %v2464 = vsub.f32 %v2455, %v2462
  %v2465 = vmul.f32 %v2463, 1.442695
  %v2466 = vpow.pop %v2465
  %v2467 = vmul.f32 %v2464, 1.442695
  %v2468 = vpow.pop %v2467
  %v2469 = vsel %vm174, %v2466, 0.0
  %2470 = vadd.xlane.f32.xlu0 %v2469
  %v2471 = vpop.xlane.xlu0 %2470
  %v2472 = vsel %vm174, %v2468, 0.0
  %2473 = vadd.xlane.f32.xlu0 %v2472
  %v2474 = vpop.xlane.xlu0 %2473
  %v2475 = vrcp.pop %v2471
  %v2476 = vrcp.pop %v2474
  %v2477 = vmul.f32 %v2466, %v2475
  %v2478 = vmul.f32 %v2468, %v2476
  %2481 = vrot.lane.b32.xlu0 %v2326, 120
  %v2482 = vpop.permute.xlu0 %2481
  %2483 = vrot.lane.b32.xlu0 %v2328, 120
  %v2484 = vpop.permute.xlu0 %2483
  %v2488 = vsel %vm174, %v2477, 0
  %v2491 = vsel %vm174, %v2478, 0
  %2493 = vmatpush.msra.mxu0 0.0
  %2494 = vmatpush.msra.mxu0 0.0
  %2495 = vmatpush.msra.mxu0 0.0
  %2496 = vmatpush.msra.mxu0 0.0
  %2497 = vmatpush.msra.mxu0 0.0
  %2498 = vmatpush.msra.mxu0 0.0
  %2499 = vmatpush.msra.mxu0 0.0
  %2500 = vmatpush.msra.mxu0 0.0
  %2501 = vmatpush.msra.mxu0 0.0
  %2502 = vmatpush.msra.mxu0 0.0
  %2503 = vmatpush.msra.mxu0 0.0
  %2504 = vmatpush.msra.mxu0 0.0
  %2505 = vmatpush.msra.mxu0 0.0
  %2506 = vmatpush.msra.mxu0 0.0
  %2507 = vmatpush.msra.mxu0 %v2484
  %2508 = vmatpush.msra.mxu0 %v2482
  %2509 = vmatmul.f32.gmra.mxu0 %v2488
  %v2510 = vpop.f32.mrf.mxu0
  %v2511 = vadd.f32 0.0, %v2510
  %2512 = vmatmul.f32.gmra.mxu0 %v2491
  %v2513 = vpop.f32.mrf.mxu0
  %v2514 = vadd.f32 0.0, %v2513
  %2515 = vdwg.mxu0
  %2518 = vrot.lane.b32.xlu0 %v2511, 8
  %v2519 = vpop.permute.xlu0 %2518
  %2520 = vrot.lane.b32.xlu0 %v2514, 8
  %v2521 = vpop.permute.xlu0 %2520
  %2524 = vst.msk [vmem:[#allocation3] sm:$0xff] %vm334, %v2519
  %2525 = vst.msk [vmem:[#allocation3 + $0x8] sm:$0xff] %vm334, %v2521
  %2526 = vrot.lane.b32.xlu0 %v2170, 112
  %v2527 = vpop.permute.xlu0 %2526
  %2528 = vrot.lane.b32.xlu0 %v2172, 112
  %v2529 = vpop.permute.xlu0 %2528
  %2530 = vrot.lane.b32.xlu0 %v2248, 112
  %v2531 = vpop.permute.xlu0 %2530
  %2532 = vrot.lane.b32.xlu0 %v2250, 112
  %v2533 = vpop.permute.xlu0 %2532
  %v2534 = vsel %vm138, %v2527, 0
  %v2536 = vsel %vm138, %v2529, 0
  %v2538 = vsel %vm138, %v2531, 0
  %v2540 = vsel %vm138, %v2533, 0
  %2542 = vmatpush.xpose.msra.mxu0 0.0
  %2543 = vmatpush.xpose.msra.mxu0 0.0
  %2544 = vmatpush.xpose.msra.mxu0 0.0
  %2545 = vmatpush.xpose.msra.mxu0 0.0
  %2546 = vmatpush.xpose.msra.mxu0 0.0
  %2547 = vmatpush.xpose.msra.mxu0 0.0
  %2548 = vmatpush.xpose.msra.mxu0 0.0
  %2549 = vmatpush.xpose.msra.mxu0 0.0
  %2550 = vmatpush.xpose.msra.mxu0 0.0
  %2551 = vmatpush.xpose.msra.mxu0 0.0
  %2552 = vmatpush.xpose.msra.mxu0 0.0
  %2553 = vmatpush.xpose.msra.mxu0 0.0
  %2554 = vmatpush.xpose.msra.mxu0 0.0
  %2555 = vmatpush.xpose.msra.mxu0 0.0
  %2556 = vmatpush.xpose.msra.mxu0 %v2540
  %2557 = vmatpush.xpose.msra.mxu0 %v2538
  %2558 = vmatmul.f32.gmra.mxu0 %v2534
  %v2559 = vpop.f32.mrf.mxu0
  %v2560 = vadd.f32 %v36, %v2559
  %2561 = vmatmul.f32.gmra.mxu0 %v2536
  %v2562 = vpop.f32.mrf.mxu0
  %v2563 = vadd.f32 %v37, %v2562
  %2564 = vdwg.mxu0
  %v2565 = vsel %vm174, %v2560, -inf
  %2566 = vmax.xlane.f32.xlu0 %v2565
  %v2567 = vpop.xlane.xlu0 %2566
  %v2568 = vsel %vm174, %v2563, -inf
  %2569 = vmax.xlane.f32.xlu0 %v2568
  %v2570 = vpop.xlane.xlu0 %2569
  %v2571 = vsub.f32 %v2560, %v2567
  %v2572 = vsub.f32 %v2563, %v2570
  %v2573 = vmul.f32 %v2571, 1.442695
  %v2574 = vpow.pop %v2573
  %v2575 = vmul.f32 %v2572, 1.442695
  %v2576 = vpow.pop %v2575
  %v2577 = vsel %vm174, %v2574, 0.0
  %2578 = vadd.xlane.f32.xlu0 %v2577
  %v2579 = vpop.xlane.xlu0 %2578
  %v2580 = vsel %vm174, %v2576, 0.0
  %2581 = vadd.xlane.f32.xlu0 %v2580
  %v2582 = vpop.xlane.xlu0 %2581
  %v2583 = vrcp.pop %v2579
  %v2584 = vrcp.pop %v2582
  %v2585 = vmul.f32 %v2574, %v2583
  %v2586 = vmul.f32 %v2576, %v2584
  %2587 = vrot.lane.b32.xlu0 %v2326, 112
  %v2588 = vpop.permute.xlu0 %2587
  %2589 = vrot.lane.b32.xlu0 %v2328, 112
  %v2590 = vpop.permute.xlu0 %2589
  %v2594 = vsel %vm174, %v2585, 0
  %v2597 = vsel %vm174, %v2586, 0
  %2599 = vmatpush.msra.mxu0 0.0
  %2600 = vmatpush.msra.mxu0 0.0
  %2601 = vmatpush.msra.mxu0 0.0
  %2602 = vmatpush.msra.mxu0 0.0
  %2603 = vmatpush.msra.mxu0 0.0
  %2604 = vmatpush.msra.mxu0 0.0
  %2605 = vmatpush.msra.mxu0 0.0
  %2606 = vmatpush.msra.mxu0 0.0
  %2607 = vmatpush.msra.mxu0 0.0
  %2608 = vmatpush.msra.mxu0 0.0
  %2609 = vmatpush.msra.mxu0 0.0
  %2610 = vmatpush.msra.mxu0 0.0
  %2611 = vmatpush.msra.mxu0 0.0
  %2612 = vmatpush.msra.mxu0 0.0
  %2613 = vmatpush.msra.mxu0 %v2590
  %2614 = vmatpush.msra.mxu0 %v2588
  %2615 = vmatmul.f32.gmra.mxu0 %v2594
  %v2616 = vpop.f32.mrf.mxu0
  %v2617 = vadd.f32 0.0, %v2616
  %2618 = vmatmul.f32.gmra.mxu0 %v2597
  %v2619 = vpop.f32.mrf.mxu0
  %v2620 = vadd.f32 0.0, %v2619
  %2621 = vdwg.mxu0
  %2624 = vrot.lane.b32.xlu0 %v2617, 16
  %v2625 = vpop.permute.xlu0 %2624
  %2626 = vrot.lane.b32.xlu0 %v2620, 16
  %v2627 = vpop.permute.xlu0 %2626
  %2630 = vst.msk [vmem:[#allocation3] sm:$0xff] %vm441, %v2625
  %2631 = vst.msk [vmem:[#allocation3 + $0x8] sm:$0xff] %vm441, %v2627
  %2632 = vrot.lane.b32.xlu0 %v2170, 104
  %v2633 = vpop.permute.xlu0 %2632
  %2634 = vrot.lane.b32.xlu0 %v2172, 104
  %v2635 = vpop.permute.xlu0 %2634
  %2636 = vrot.lane.b32.xlu0 %v2248, 104
  %v2637 = vpop.permute.xlu0 %2636
  %2638 = vrot.lane.b32.xlu0 %v2250, 104
  %v2639 = vpop.permute.xlu0 %2638
  %v2640 = vsel %vm138, %v2633, 0
  %v2642 = vsel %vm138, %v2635, 0
  %v2644 = vsel %vm138, %v2637, 0
  %v2646 = vsel %vm138, %v2639, 0
  %2648 = vmatpush.xpose.msra.mxu0 0.0
  %2649 = vmatpush.xpose.msra.mxu0 0.0
  %2650 = vmatpush.xpose.msra.mxu0 0.0
  %2651 = vmatpush.xpose.msra.mxu0 0.0
  %2652 = vmatpush.xpose.msra.mxu0 0.0
  %2653 = vmatpush.xpose.msra.mxu0 0.0
  %2654 = vmatpush.xpose.msra.mxu0 0.0
  %2655 = vmatpush.xpose.msra.mxu0 0.0
  %2656 = vmatpush.xpose.msra.mxu0 0.0
  %2657 = vmatpush.xpose.msra.mxu0 0.0
  %2658 = vmatpush.xpose.msra.mxu0 0.0
  %2659 = vmatpush.xpose.msra.mxu0 0.0
  %2660 = vmatpush.xpose.msra.mxu0 0.0
  %2661 = vmatpush.xpose.msra.mxu0 0.0
  %2662 = vmatpush.xpose.msra.mxu0 %v2646
  %2663 = vmatpush.xpose.msra.mxu0 %v2644
  %2664 = vmatmul.f32.gmra.mxu0 %v2640
  %v2665 = vpop.f32.mrf.mxu0
  %v2666 = vadd.f32 %v36, %v2665
  %2667 = vmatmul.f32.gmra.mxu0 %v2642
  %v2668 = vpop.f32.mrf.mxu0
  %v2669 = vadd.f32 %v37, %v2668
  %2670 = vdwg.mxu0
  %v2671 = vsel %vm174, %v2666, -inf
  %2672 = vmax.xlane.f32.xlu0 %v2671
  %v2673 = vpop.xlane.xlu0 %2672
  %v2674 = vsel %vm174, %v2669, -inf
  %2675 = vmax.xlane.f32.xlu0 %v2674
  %v2676 = vpop.xlane.xlu0 %2675
  %v2677 = vsub.f32 %v2666, %v2673
  %v2678 = vsub.f32 %v2669, %v2676
  %v2679 = vmul.f32 %v2677, 1.442695
  %v2680 = vpow.pop %v2679
  %v2681 = vmul.f32 %v2678, 1.442695
  %v2682 = vpow.pop %v2681
  %v2683 = vsel %vm174, %v2680, 0.0
  %2684 = vadd.xlane.f32.xlu0 %v2683
  %v2685 = vpop.xlane.xlu0 %2684
  %v2686 = vsel %vm174, %v2682, 0.0
  %2687 = vadd.xlane.f32.xlu0 %v2686
  %v2688 = vpop.xlane.xlu0 %2687
  %v2689 = vrcp.pop %v2685
  %v2690 = vrcp.pop %v2688
  %v2691 = vmul.f32 %v2680, %v2689
  %v2692 = vmul.f32 %v2682, %v2690
  %2693 = vrot.lane.b32.xlu0 %v2326, 104
  %v2694 = vpop.permute.xlu0 %2693
  %2695 = vrot.lane.b32.xlu0 %v2328, 104
  %v2696 = vpop.permute.xlu0 %2695
  %v2700 = vsel %vm174, %v2691, 0
  %v2703 = vsel %vm174, %v2692, 0
  %2705 = vmatpush.msra.mxu0 0.0
  %2706 = vmatpush.msra.mxu0 0.0
  %2707 = vmatpush.msra.mxu0 0.0
  %2708 = vmatpush.msra.mxu0 0.0
  %2709 = vmatpush.msra.mxu0 0.0
  %2710 = vmatpush.msra.mxu0 0.0
  %2711 = vmatpush.msra.mxu0 0.0
  %2712 = vmatpush.msra.mxu0 0.0
  %2713 = vmatpush.msra.mxu0 0.0
  %2714 = vmatpush.msra.mxu0 0.0
  %2715 = vmatpush.msra.mxu0 0.0
  %2716 = vmatpush.msra.mxu0 0.0
  %2717 = vmatpush.msra.mxu0 0.0
  %2718 = vmatpush.msra.mxu0 0.0
  %2719 = vmatpush.msra.mxu0 %v2696
  %2720 = vmatpush.msra.mxu0 %v2694
  %2721 = vmatmul.f32.gmra.mxu0 %v2700
  %v2722 = vpop.f32.mrf.mxu0
  %v2723 = vadd.f32 0.0, %v2722
  %2724 = vmatmul.f32.gmra.mxu0 %v2703
  %v2725 = vpop.f32.mrf.mxu0
  %v2726 = vadd.f32 0.0, %v2725
  %2727 = vdwg.mxu0
  %2730 = vrot.lane.b32.xlu0 %v2723, 24
  %v2731 = vpop.permute.xlu0 %2730
  %2732 = vrot.lane.b32.xlu0 %v2726, 24
  %v2733 = vpop.permute.xlu0 %2732
  %2736 = vst.msk [vmem:[#allocation3] sm:$0xff] %vm548, %v2731
  %2737 = vst.msk [vmem:[#allocation3 + $0x8] sm:$0xff] %vm548, %v2733
  %s2738 = scalar_lea.vmem %s6, 64
  %v2739 = vld [vmem:[%s2738] sm:$0xf]
  %v2740 = vld [vmem:[%s2738 + $0x4] sm:$0xf]
  %v2741 = vld [vmem:[%s2738 + $0x8] sm:$0xf]
  %v2742 = vld [vmem:[%s2738 + $0xc] sm:$0xf]
  %v2743 = vld [vmem:[%s2738 + $0x10] sm:$0xf]
  %v2744 = vld [vmem:[%s2738 + $0x14] sm:$0xf]
  %v2745 = vld [vmem:[%s2738 + $0x18] sm:$0xf]
  %v2746 = vld [vmem:[%s2738 + $0x1c] sm:$0xf]
  %v2747 = vld [vmem:[%s2738 + $0x20] sm:$0xf]
  %v2748 = vld [vmem:[%s2738 + $0x24] sm:$0xf]
  %v2749 = vld [vmem:[%s2738 + $0x28] sm:$0xf]
  %v2750 = vld [vmem:[%s2738 + $0x2c] sm:$0xf]
  %v2751 = vld [vmem:[%s2738 + $0x30] sm:$0xf]
  %v2752 = vld [vmem:[%s2738 + $0x34] sm:$0xf]
  %v2753 = vld [vmem:[%s2738 + $0x38] sm:$0xf]
  %v2754 = vld [vmem:[%s2738 + $0x3c] sm:$0xf]
  %v2771 = vunpack.c.l.b16 %v2739
  %v2772 = vunpack.c.l.b16 %v2740
  %v2773 = vunpack.c.l.b16 %v2741
  %v2774 = vunpack.c.l.b16 %v2742
  %v2775 = vunpack.c.l.b16 %v2743
  %v2776 = vunpack.c.l.b16 %v2744
  %v2777 = vunpack.c.l.b16 %v2745
  %v2778 = vunpack.c.l.b16 %v2746
  %v2779 = vunpack.c.l.b16 %v2747
  %v2780 = vunpack.c.l.b16 %v2748
  %v2781 = vunpack.c.l.b16 %v2749
  %v2782 = vunpack.c.l.b16 %v2750
  %v2783 = vunpack.c.l.b16 %v2751
  %v2784 = vunpack.c.l.b16 %v2752
  %v2785 = vunpack.c.l.b16 %v2753
  %v2786 = vunpack.c.l.b16 %v2754
  %v2787 = vpack.c.b16 %v2772, %v2771
  %v2788 = vpack.c.b16 %v2774, %v2773
  %v2789 = vpack.c.b16 %v2776, %v2775
  %v2790 = vpack.c.b16 %v2778, %v2777
  %v2791 = vpack.c.b16 %v2780, %v2779
  %v2792 = vpack.c.b16 %v2782, %v2781
  %v2793 = vpack.c.b16 %v2784, %v2783
  %v2794 = vpack.c.b16 %v2786, %v2785
  %2803 = vmatpush.bf16.msra.mxu0 %v2794
  %2804 = vmatpush.bf16.msra.mxu0 %v2793
  %2805 = vmatpush.bf16.msra.mxu0 %v2792
  %2806 = vmatpush.bf16.msra.mxu0 %v2791
  %2807 = vmatpush.bf16.msra.mxu0 %v2790
  %2808 = vmatpush.bf16.msra.mxu0 %v2789
  %2809 = vmatpush.bf16.msra.mxu0 %v2788
  %2810 = vmatpush.bf16.msra.mxu0 %v2787
  %2811 = vmatmul.bf16.gmra.mxu0 %v2095
  %v2812 = vpop.f32.mrf.mxu0
  %v2813 = vadd.f32 0.0, %v2812
  %v2814 = vpop.f32.mrf.mxu0
  %v2815 = vadd.f32 0.0, %v2814
  %2816 = vdwg.mxu0
  %s2817 = scalar_lea.vmem %s7, 64
  %v2818 = vld [vmem:[%s2817] sm:$0xf]
  %v2819 = vld [vmem:[%s2817 + $0x4] sm:$0xf]
  %v2820 = vld [vmem:[%s2817 + $0x8] sm:$0xf]
  %v2821 = vld [vmem:[%s2817 + $0xc] sm:$0xf]
  %v2822 = vld [vmem:[%s2817 + $0x10] sm:$0xf]
  %v2823 = vld [vmem:[%s2817 + $0x14] sm:$0xf]
  %v2824 = vld [vmem:[%s2817 + $0x18] sm:$0xf]
  %v2825 = vld [vmem:[%s2817 + $0x1c] sm:$0xf]
  %v2826 = vld [vmem:[%s2817 + $0x20] sm:$0xf]
  %v2827 = vld [vmem:[%s2817 + $0x24] sm:$0xf]
  %v2828 = vld [vmem:[%s2817 + $0x28] sm:$0xf]
  %v2829 = vld [vmem:[%s2817 + $0x2c] sm:$0xf]
  %v2830 = vld [vmem:[%s2817 + $0x30] sm:$0xf]
  %v2831 = vld [vmem:[%s2817 + $0x34] sm:$0xf]
  %v2832 = vld [vmem:[%s2817 + $0x38] sm:$0xf]
  %v2833 = vld [vmem:[%s2817 + $0x3c] sm:$0xf]
  %v2850 = vunpack.c.l.b16 %v2818
  %v2851 = vunpack.c.l.b16 %v2819
  %v2852 = vunpack.c.l.b16 %v2820
  %v2853 = vunpack.c.l.b16 %v2821
  %v2854 = vunpack.c.l.b16 %v2822
  %v2855 = vunpack.c.l.b16 %v2823
  %v2856 = vunpack.c.l.b16 %v2824
  %v2857 = vunpack.c.l.b16 %v2825
  %v2858 = vunpack.c.l.b16 %v2826
  %v2859 = vunpack.c.l.b16 %v2827
  %v2860 = vunpack.c.l.b16 %v2828
  %v2861 = vunpack.c.l.b16 %v2829
  %v2862 = vunpack.c.l.b16 %v2830
  %v2863 = vunpack.c.l.b16 %v2831
  %v2864 = vunpack.c.l.b16 %v2832
  %v2865 = vunpack.c.l.b16 %v2833
  %v2866 = vpack.c.b16 %v2851, %v2850
  %v2867 = vpack.c.b16 %v2853, %v2852
  %v2868 = vpack.c.b16 %v2855, %v2854
  %v2869 = vpack.c.b16 %v2857, %v2856
  %v2870 = vpack.c.b16 %v2859, %v2858
  %v2871 = vpack.c.b16 %v2861, %v2860
  %v2872 = vpack.c.b16 %v2863, %v2862
  %v2873 = vpack.c.b16 %v2865, %v2864
  %2882 = vmatpush.bf16.msra.mxu0 %v2873
  %2883 = vmatpush.bf16.msra.mxu0 %v2872
  %2884 = vmatpush.bf16.msra.mxu0 %v2871
  %2885 = vmatpush.bf16.msra.mxu0 %v2870
  %2886 = vmatpush.bf16.msra.mxu0 %v2869
  %2887 = vmatpush.bf16.msra.mxu0 %v2868
  %2888 = vmatpush.bf16.msra.mxu0 %v2867
  %2889 = vmatpush.bf16.msra.mxu0 %v2866
  %2890 = vmatmul.bf16.gmra.mxu0 %v2095
  %v2891 = vpop.f32.mrf.mxu0
  %v2892 = vadd.f32 0.0, %v2891
  %v2893 = vpop.f32.mrf.mxu0
  %v2894 = vadd.f32 0.0, %v2893
  %2895 = vdwg.mxu0
  %s2896 = scalar_lea.vmem %s8, 64
  %v2897 = vld [vmem:[%s2896] sm:$0xf]
  %v2898 = vld [vmem:[%s2896 + $0x4] sm:$0xf]
  %v2899 = vld [vmem:[%s2896 + $0x8] sm:$0xf]
  %v2900 = vld [vmem:[%s2896 + $0xc] sm:$0xf]
  %v2901 = vld [vmem:[%s2896 + $0x10] sm:$0xf]
  %v2902 = vld [vmem:[%s2896 + $0x14] sm:$0xf]
  %v2903 = vld [vmem:[%s2896 + $0x18] sm:$0xf]
  %v2904 = vld [vmem:[%s2896 + $0x1c] sm:$0xf]
  %v2905 = vld [vmem:[%s2896 + $0x20] sm:$0xf]
  %v2906 = vld [vmem:[%s2896 + $0x24] sm:$0xf]
  %v2907 = vld [vmem:[%s2896 + $0x28] sm:$0xf]
  %v2908 = vld [vmem:[%s2896 + $0x2c] sm:$0xf]
  %v2909 = vld [vmem:[%s2896 + $0x30] sm:$0xf]
  %v2910 = vld [vmem:[%s2896 + $0x34] sm:$0xf]
  %v2911 = vld [vmem:[%s2896 + $0x38] sm:$0xf]
  %v2912 = vld [vmem:[%s2896 + $0x3c] sm:$0xf]
  %v2929 = vunpack.c.l.b16 %v2897
  %v2930 = vunpack.c.l.b16 %v2898
  %v2931 = vunpack.c.l.b16 %v2899
  %v2932 = vunpack.c.l.b16 %v2900
  %v2933 = vunpack.c.l.b16 %v2901
  %v2934 = vunpack.c.l.b16 %v2902
  %v2935 = vunpack.c.l.b16 %v2903
  %v2936 = vunpack.c.l.b16 %v2904
  %v2937 = vunpack.c.l.b16 %v2905
  %v2938 = vunpack.c.l.b16 %v2906
  %v2939 = vunpack.c.l.b16 %v2907
  %v2940 = vunpack.c.l.b16 %v2908
  %v2941 = vunpack.c.l.b16 %v2909
  %v2942 = vunpack.c.l.b16 %v2910
  %v2943 = vunpack.c.l.b16 %v2911
  %v2944 = vunpack.c.l.b16 %v2912
  %v2945 = vpack.c.b16 %v2930, %v2929
  %v2946 = vpack.c.b16 %v2932, %v2931
  %v2947 = vpack.c.b16 %v2934, %v2933
  %v2948 = vpack.c.b16 %v2936, %v2935
  %v2949 = vpack.c.b16 %v2938, %v2937
  %v2950 = vpack.c.b16 %v2940, %v2939
  %v2951 = vpack.c.b16 %v2942, %v2941
  %v2952 = vpack.c.b16 %v2944, %v2943
  %2961 = vmatpush.bf16.msra.mxu0 %v2952
  %2962 = vmatpush.bf16.msra.mxu0 %v2951
  %2963 = vmatpush.bf16.msra.mxu0 %v2950
  %2964 = vmatpush.bf16.msra.mxu0 %v2949
  %2965 = vmatpush.bf16.msra.mxu0 %v2948
  %2966 = vmatpush.bf16.msra.mxu0 %v2947
  %2967 = vmatpush.bf16.msra.mxu0 %v2946
  %2968 = vmatpush.bf16.msra.mxu0 %v2945
  %2969 = vmatmul.bf16.gmra.mxu0 %v2095
  %v2970 = vpop.f32.mrf.mxu0
  %v2971 = vadd.f32 0.0, %v2970
  %v2972 = vpop.f32.mrf.mxu0
  %v2973 = vadd.f32 0.0, %v2972
  %2974 = vdwg.mxu0
  %v2976 = vsel %vm138, %v2813, 0
  %v2979 = vsel %vm138, %v2815, 0
  %v2982 = vsel %vm138, %v2892, 0
  %v2985 = vsel %vm138, %v2894, 0
  %2987 = vmatpush.xpose.msra.mxu0 0.0
  %2988 = vmatpush.xpose.msra.mxu0 0.0
  %2989 = vmatpush.xpose.msra.mxu0 0.0
  %2990 = vmatpush.xpose.msra.mxu0 0.0
  %2991 = vmatpush.xpose.msra.mxu0 0.0
  %2992 = vmatpush.xpose.msra.mxu0 0.0
  %2993 = vmatpush.xpose.msra.mxu0 0.0
  %2994 = vmatpush.xpose.msra.mxu0 0.0
  %2995 = vmatpush.xpose.msra.mxu0 0.0
  %2996 = vmatpush.xpose.msra.mxu0 0.0
  %2997 = vmatpush.xpose.msra.mxu0 0.0
  %2998 = vmatpush.xpose.msra.mxu0 0.0
  %2999 = vmatpush.xpose.msra.mxu0 0.0
  %3000 = vmatpush.xpose.msra.mxu0 0.0
  %3001 = vmatpush.xpose.msra.mxu0 %v2985
  %3002 = vmatpush.xpose.msra.mxu0 %v2982
  %3003 = vmatmul.f32.gmra.mxu0 %v2976
  %v3004 = vpop.f32.mrf.mxu0
  %v3005 = vadd.f32 %v36, %v3004
  %3006 = vmatmul.f32.gmra.mxu0 %v2979
  %v3007 = vpop.f32.mrf.mxu0
  %v3008 = vadd.f32 %v37, %v3007
  %3009 = vdwg.mxu0
  %v3010 = vsel %vm174, %v3005, -inf
  %3011 = vmax.xlane.f32.xlu0 %v3010
  %v3012 = vpop.xlane.xlu0 %3011
  %v3013 = vsel %vm174, %v3008, -inf
  %3014 = vmax.xlane.f32.xlu0 %v3013
  %v3015 = vpop.xlane.xlu0 %3014
  %v3016 = vsub.f32 %v3005, %v3012
  %v3017 = vsub.f32 %v3008, %v3015
  %v3018 = vmul.f32 %v3016, 1.442695
  %v3019 = vpow.pop %v3018
  %v3020 = vmul.f32 %v3017, 1.442695
  %v3021 = vpow.pop %v3020
  %v3022 = vsel %vm174, %v3019, 0.0
  %3023 = vadd.xlane.f32.xlu0 %v3022
  %v3024 = vpop.xlane.xlu0 %3023
  %v3025 = vsel %vm174, %v3021, 0.0
  %3026 = vadd.xlane.f32.xlu0 %v3025
  %v3027 = vpop.xlane.xlu0 %3026
  %v3028 = vrcp.pop %v3024
  %v3029 = vrcp.pop %v3027
  %v3030 = vmul.f32 %v3019, %v3028
  %v3031 = vmul.f32 %v3021, %v3029
  %v3033 = vsel %vm174, %v3030, 0
  %v3036 = vsel %vm174, %v3031, 0
  %3038 = vmatpush.msra.mxu0 0.0
  %3039 = vmatpush.msra.mxu0 0.0
  %3040 = vmatpush.msra.mxu0 0.0
  %3041 = vmatpush.msra.mxu0 0.0
  %3042 = vmatpush.msra.mxu0 0.0
  %3043 = vmatpush.msra.mxu0 0.0
  %3044 = vmatpush.msra.mxu0 0.0
  %3045 = vmatpush.msra.mxu0 0.0
  %3046 = vmatpush.msra.mxu0 0.0
  %3047 = vmatpush.msra.mxu0 0.0
  %3048 = vmatpush.msra.mxu0 0.0
  %3049 = vmatpush.msra.mxu0 0.0
  %3050 = vmatpush.msra.mxu0 0.0
  %3051 = vmatpush.msra.mxu0 0.0
  %3052 = vmatpush.msra.mxu0 %v2973
  %3053 = vmatpush.msra.mxu0 %v2971
  %3054 = vmatmul.f32.gmra.mxu0 %v3033
  %v3055 = vpop.f32.mrf.mxu0
  %v3056 = vadd.f32 0.0, %v3055
  %3057 = vmatmul.f32.gmra.mxu0 %v3036
  %v3058 = vpop.f32.mrf.mxu0
  %v3059 = vadd.f32 0.0, %v3058
  %3060 = vdwg.mxu0
  %3063 = vrot.lane.b32.xlu0 %v3056, 32
  %v3064 = vpop.permute.xlu0 %3063
  %3065 = vrot.lane.b32.xlu0 %v3059, 32
  %v3066 = vpop.permute.xlu0 %3065
  %3069 = vst.msk [vmem:[#allocation3] sm:$0xff] %vm741, %v3064
  %3070 = vst.msk [vmem:[#allocation3 + $0x8] sm:$0xff] %vm741, %v3066
  %3071 = vrot.lane.b32.xlu0 %v2813, 120
  %v3072 = vpop.permute.xlu0 %3071
  %3073 = vrot.lane.b32.xlu0 %v2815, 120
  %v3074 = vpop.permute.xlu0 %3073
  %3075 = vrot.lane.b32.xlu0 %v2892, 120
  %v3076 = vpop.permute.xlu0 %3075
  %3077 = vrot.lane.b32.xlu0 %v2894, 120
  %v3078 = vpop.permute.xlu0 %3077
  %v3079 = vsel %vm138, %v3072, 0
  %v3081 = vsel %vm138, %v3074, 0
  %v3083 = vsel %vm138, %v3076, 0
  %v3085 = vsel %vm138, %v3078, 0
  %3087 = vmatpush.xpose.msra.mxu0 0.0
  %3088 = vmatpush.xpose.msra.mxu0 0.0
  %3089 = vmatpush.xpose.msra.mxu0 0.0
  %3090 = vmatpush.xpose.msra.mxu0 0.0
  %3091 = vmatpush.xpose.msra.mxu0 0.0
  %3092 = vmatpush.xpose.msra.mxu0 0.0
  %3093 = vmatpush.xpose.msra.mxu0 0.0
  %3094 = vmatpush.xpose.msra.mxu0 0.0
  %3095 = vmatpush.xpose.msra.mxu0 0.0
  %3096 = vmatpush.xpose.msra.mxu0 0.0
  %3097 = vmatpush.xpose.msra.mxu0 0.0
  %3098 = vmatpush.xpose.msra.mxu0 0.0
  %3099 = vmatpush.xpose.msra.mxu0 0.0
  %3100 = vmatpush.xpose.msra.mxu0 0.0
  %3101 = vmatpush.xpose.msra.mxu0 %v3085
  %3102 = vmatpush.xpose.msra.mxu0 %v3083
  %3103 = vmatmul.f32.gmra.mxu0 %v3079
  %v3104 = vpop.f32.mrf.mxu0
  %v3105 = vadd.f32 %v36, %v3104
  %3106 = vmatmul.f32.gmra.mxu0 %v3081
  %v3107 = vpop.f32.mrf.mxu0
  %v3108 = vadd.f32 %v37, %v3107
  %3109 = vdwg.mxu0
  %v3110 = vsel %vm174, %v3105, -inf
  %3111 = vmax.xlane.f32.xlu0 %v3110
  %v3112 = vpop.xlane.xlu0 %3111
  %v3113 = vsel %vm174, %v3108, -inf
  %3114 = vmax.xlane.f32.xlu0 %v3113
  %v3115 = vpop.xlane.xlu0 %3114
  %v3116 = vsub.f32 %v3105, %v3112
  %v3117 = vsub.f32 %v3108, %v3115
  %v3118 = vmul.f32 %v3116, 1.442695
  %v3119 = vpow.pop %v3118
  %v3120 = vmul.f32 %v3117, 1.442695
  %v3121 = vpow.pop %v3120
  %v3122 = vsel %vm174, %v3119, 0.0
  %3123 = vadd.xlane.f32.xlu0 %v3122
  %v3124 = vpop.xlane.xlu0 %3123
  %v3125 = vsel %vm174, %v3121, 0.0
  %3126 = vadd.xlane.f32.xlu0 %v3125
  %v3127 = vpop.xlane.xlu0 %3126
  %v3128 = vrcp.pop %v3124
  %v3129 = vrcp.pop %v3127
  %v3130 = vmul.f32 %v3119, %v3128
  %v3131 = vmul.f32 %v3121, %v3129
  %3134 = vrot.lane.b32.xlu0 %v2971, 120
  %v3135 = vpop.permute.xlu0 %3134
  %3136 = vrot.lane.b32.xlu0 %v2973, 120
  %v3137 = vpop.permute.xlu0 %3136
  %v3141 = vsel %vm174, %v3130, 0
  %v3144 = vsel %vm174, %v3131, 0
  %3146 = vmatpush.msra.mxu0 0.0
  %3147 = vmatpush.msra.mxu0 0.0
  %3148 = vmatpush.msra.mxu0 0.0
  %3149 = vmatpush.msra.mxu0 0.0
  %3150 = vmatpush.msra.mxu0 0.0
  %3151 = vmatpush.msra.mxu0 0.0
  %3152 = vmatpush.msra.mxu0 0.0
  %3153 = vmatpush.msra.mxu0 0.0
  %3154 = vmatpush.msra.mxu0 0.0
  %3155 = vmatpush.msra.mxu0 0.0
  %3156 = vmatpush.msra.mxu0 0.0
  %3157 = vmatpush.msra.mxu0 0.0
  %3158 = vmatpush.msra.mxu0 0.0
  %3159 = vmatpush.msra.mxu0 0.0
  %3160 = vmatpush.msra.mxu0 %v3137
  %3161 = vmatpush.msra.mxu0 %v3135
  %3162 = vmatmul.f32.gmra.mxu0 %v3141
  %v3163 = vpop.f32.mrf.mxu0
  %v3164 = vadd.f32 0.0, %v3163
  %3165 = vmatmul.f32.gmra.mxu0 %v3144
  %v3166 = vpop.f32.mrf.mxu0
  %v3167 = vadd.f32 0.0, %v3166
  %3168 = vdwg.mxu0
  %3171 = vrot.lane.b32.xlu0 %v3164, 40
  %v3172 = vpop.permute.xlu0 %3171
  %3173 = vrot.lane.b32.xlu0 %v3167, 40
  %v3174 = vpop.permute.xlu0 %3173
  %3177 = vst.msk [vmem:[#allocation3] sm:$0xff] %vm850, %v3172
  %3178 = vst.msk [vmem:[#allocation3 + $0x8] sm:$0xff] %vm850, %v3174
  %3179 = vrot.lane.b32.xlu0 %v2813, 112
  %v3180 = vpop.permute.xlu0 %3179
  %3181 = vrot.lane.b32.xlu0 %v2815, 112
  %v3182 = vpop.permute.xlu0 %3181
  %3183 = vrot.lane.b32.xlu0 %v2892, 112
  %v3184 = vpop.permute.xlu0 %3183
  %3185 = vrot.lane.b32.xlu0 %v2894, 112
  %v3186 = vpop.permute.xlu0 %3185
  %v3187 = vsel %vm138, %v3180, 0
  %v3189 = vsel %vm138, %v3182, 0
  %v3191 = vsel %vm138, %v3184, 0
  %v3193 = vsel %vm138, %v3186, 0
  %3195 = vmatpush.xpose.msra.mxu0 0.0
  %3196 = vmatpush.xpose.msra.mxu0 0.0
  %3197 = vmatpush.xpose.msra.mxu0 0.0
  %3198 = vmatpush.xpose.msra.mxu0 0.0
  %3199 = vmatpush.xpose.msra.mxu0 0.0
  %3200 = vmatpush.xpose.msra.mxu0 0.0
  %3201 = vmatpush.xpose.msra.mxu0 0.0
  %3202 = vmatpush.xpose.msra.mxu0 0.0
  %3203 = vmatpush.xpose.msra.mxu0 0.0
  %3204 = vmatpush.xpose.msra.mxu0 0.0
  %3205 = vmatpush.xpose.msra.mxu0 0.0
  %3206 = vmatpush.xpose.msra.mxu0 0.0
  %3207 = vmatpush.xpose.msra.mxu0 0.0
  %3208 = vmatpush.xpose.msra.mxu0 0.0
  %3209 = vmatpush.xpose.msra.mxu0 %v3193
  %3210 = vmatpush.xpose.msra.mxu0 %v3191
  %3211 = vmatmul.f32.gmra.mxu0 %v3187
  %v3212 = vpop.f32.mrf.mxu0
  %v3213 = vadd.f32 %v36, %v3212
  %3214 = vmatmul.f32.gmra.mxu0 %v3189
  %v3215 = vpop.f32.mrf.mxu0
  %v3216 = vadd.f32 %v37, %v3215
  %3217 = vdwg.mxu0
  %v3218 = vsel %vm174, %v3213, -inf
  %3219 = vmax.xlane.f32.xlu0 %v3218
  %v3220 = vpop.xlane.xlu0 %3219
  %v3221 = vsel %vm174, %v3216, -inf
  %3222 = vmax.xlane.f32.xlu0 %v3221
  %v3223 = vpop.xlane.xlu0 %3222
  %v3224 = vsub.f32 %v3213, %v3220
  %v3225 = vsub.f32 %v3216, %v3223
  %v3226 = vmul.f32 %v3224, 1.442695
  %v3227 = vpow.pop %v3226
  %v3228 = vmul.f32 %v3225, 1.442695
  %v3229 = vpow.pop %v3228
  %v3230 = vsel %vm174, %v3227, 0.0
  %3231 = vadd.xlane.f32.xlu0 %v3230
  %v3232 = vpop.xlane.xlu0 %3231
  %v3233 = vsel %vm174, %v3229, 0.0
  %3234 = vadd.xlane.f32.xlu0 %v3233
  %v3235 = vpop.xlane.xlu0 %3234
  %v3236 = vrcp.pop %v3232
  %v3237 = vrcp.pop %v3235
  %v3238 = vmul.f32 %v3227, %v3236
  %v3239 = vmul.f32 %v3229, %v3237
  %3240 = vrot.lane.b32.xlu0 %v2971, 112
  %v3241 = vpop.permute.xlu0 %3240
  %3242 = vrot.lane.b32.xlu0 %v2973, 112
  %v3243 = vpop.permute.xlu0 %3242
  %v3247 = vsel %vm174, %v3238, 0
  %v3250 = vsel %vm174, %v3239, 0
  %3252 = vmatpush.msra.mxu0 0.0
  %3253 = vmatpush.msra.mxu0 0.0
  %3254 = vmatpush.msra.mxu0 0.0
  %3255 = vmatpush.msra.mxu0 0.0
  %3256 = vmatpush.msra.mxu0 0.0
  %3257 = vmatpush.msra.mxu0 0.0
  %3258 = vmatpush.msra.mxu0 0.0
  %3259 = vmatpush.msra.mxu0 0.0
  %3260 = vmatpush.msra.mxu0 0.0
  %3261 = vmatpush.msra.mxu0 0.0
  %3262 = vmatpush.msra.mxu0 0.0
  %3263 = vmatpush.msra.mxu0 0.0
  %3264 = vmatpush.msra.mxu0 0.0
  %3265 = vmatpush.msra.mxu0 0.0
  %3266 = vmatpush.msra.mxu0 %v3243
  %3267 = vmatpush.msra.mxu0 %v3241
  %3268 = vmatmul.f32.gmra.mxu0 %v3247
  %v3269 = vpop.f32.mrf.mxu0
  %v3270 = vadd.f32 0.0, %v3269
  %3271 = vmatmul.f32.gmra.mxu0 %v3250
  %v3272 = vpop.f32.mrf.mxu0
  %v3273 = vadd.f32 0.0, %v3272
  %3274 = vdwg.mxu0
  %3277 = vrot.lane.b32.xlu0 %v3270, 48
  %v3278 = vpop.permute.xlu0 %3277
  %3279 = vrot.lane.b32.xlu0 %v3273, 48
  %v3280 = vpop.permute.xlu0 %3279
  %3283 = vst.msk [vmem:[#allocation3] sm:$0xff] %vm957, %v3278
  %3284 = vst.msk [vmem:[#allocation3 + $0x8] sm:$0xff] %vm957, %v3280
  %3285 = vrot.lane.b32.xlu0 %v2813, 104
  %v3286 = vpop.permute.xlu0 %3285
  %3287 = vrot.lane.b32.xlu0 %v2815, 104
  %v3288 = vpop.permute.xlu0 %3287
  %3289 = vrot.lane.b32.xlu0 %v2892, 104
  %v3290 = vpop.permute.xlu0 %3289
  %3291 = vrot.lane.b32.xlu0 %v2894, 104
  %v3292 = vpop.permute.xlu0 %3291
  %v3293 = vsel %vm138, %v3286, 0
  %v3295 = vsel %vm138, %v3288, 0
  %v3297 = vsel %vm138, %v3290, 0
  %v3299 = vsel %vm138, %v3292, 0
  %3301 = vmatpush.xpose.msra.mxu0 0.0
  %3302 = vmatpush.xpose.msra.mxu0 0.0
  %3303 = vmatpush.xpose.msra.mxu0 0.0
  %3304 = vmatpush.xpose.msra.mxu0 0.0
  %3305 = vmatpush.xpose.msra.mxu0 0.0
  %3306 = vmatpush.xpose.msra.mxu0 0.0
  %3307 = vmatpush.xpose.msra.mxu0 0.0
  %3308 = vmatpush.xpose.msra.mxu0 0.0
  %3309 = vmatpush.xpose.msra.mxu0 0.0
  %3310 = vmatpush.xpose.msra.mxu0 0.0
  %3311 = vmatpush.xpose.msra.mxu0 0.0
  %3312 = vmatpush.xpose.msra.mxu0 0.0
  %3313 = vmatpush.xpose.msra.mxu0 0.0
  %3314 = vmatpush.xpose.msra.mxu0 0.0
  %3315 = vmatpush.xpose.msra.mxu0 %v3299
  %3316 = vmatpush.xpose.msra.mxu0 %v3297
  %3317 = vmatmul.f32.gmra.mxu0 %v3293
  %v3318 = vpop.f32.mrf.mxu0
  %v3319 = vadd.f32 %v36, %v3318
  %3320 = vmatmul.f32.gmra.mxu0 %v3295
  %v3321 = vpop.f32.mrf.mxu0
  %v3322 = vadd.f32 %v37, %v3321
  %3323 = vdwg.mxu0
  %v3324 = vsel %vm174, %v3319, -inf
  %3325 = vmax.xlane.f32.xlu0 %v3324
  %v3326 = vpop.xlane.xlu0 %3325
  %v3327 = vsel %vm174, %v3322, -inf
  %3328 = vmax.xlane.f32.xlu0 %v3327
  %v3329 = vpop.xlane.xlu0 %3328
  %v3330 = vsub.f32 %v3319, %v3326
  %v3331 = vsub.f32 %v3322, %v3329
  %v3332 = vmul.f32 %v3330, 1.442695
  %v3333 = vpow.pop %v3332
  %v3334 = vmul.f32 %v3331, 1.442695
  %v3335 = vpow.pop %v3334
  %v3336 = vsel %vm174, %v3333, 0.0
  %3337 = vadd.xlane.f32.xlu0 %v3336
  %v3338 = vpop.xlane.xlu0 %3337
  %v3339 = vsel %vm174, %v3335, 0.0
  %3340 = vadd.xlane.f32.xlu0 %v3339
  %v3341 = vpop.xlane.xlu0 %3340
  %v3342 = vrcp.pop %v3338
  %v3343 = vrcp.pop %v3341
  %v3344 = vmul.f32 %v3333, %v3342
  %v3345 = vmul.f32 %v3335, %v3343
  %3346 = vrot.lane.b32.xlu0 %v2971, 104
  %v3347 = vpop.permute.xlu0 %3346
  %3348 = vrot.lane.b32.xlu0 %v2973, 104
  %v3349 = vpop.permute.xlu0 %3348
  %v3353 = vsel %vm174, %v3344, 0
  %v3356 = vsel %vm174, %v3345, 0
  %3358 = vmatpush.msra.mxu0 0.0
  %3359 = vmatpush.msra.mxu0 0.0
  %3360 = vmatpush.msra.mxu0 0.0
  %3361 = vmatpush.msra.mxu0 0.0
  %3362 = vmatpush.msra.mxu0 0.0
  %3363 = vmatpush.msra.mxu0 0.0
  %3364 = vmatpush.msra.mxu0 0.0
  %3365 = vmatpush.msra.mxu0 0.0
  %3366 = vmatpush.msra.mxu0 0.0
  %3367 = vmatpush.msra.mxu0 0.0
  %3368 = vmatpush.msra.mxu0 0.0
  %3369 = vmatpush.msra.mxu0 0.0
  %3370 = vmatpush.msra.mxu0 0.0
  %3371 = vmatpush.msra.mxu0 0.0
  %3372 = vmatpush.msra.mxu0 %v3349
  %3373 = vmatpush.msra.mxu0 %v3347
  %3374 = vmatmul.f32.gmra.mxu0 %v3353
  %v3375 = vpop.f32.mrf.mxu0
  %v3376 = vadd.f32 0.0, %v3375
  %3377 = vmatmul.f32.gmra.mxu0 %v3356
  %v3378 = vpop.f32.mrf.mxu0
  %v3379 = vadd.f32 0.0, %v3378
  %3380 = vdwg.mxu0
  %3383 = vrot.lane.b32.xlu0 %v3376, 56
  %v3384 = vpop.permute.xlu0 %3383
  %3385 = vrot.lane.b32.xlu0 %v3379, 56
  %v3386 = vpop.permute.xlu0 %3385
  %3389 = vst.msk [vmem:[#allocation3] sm:$0xff] %vm1064, %v3384
  %3390 = vst.msk [vmem:[#allocation3 + $0x8] sm:$0xff] %vm1064, %v3386
  %v3391 = vld [vmem:[#allocation3] sm:$0xff]
  %v3392 = vld [vmem:[#allocation3 + $0x8] sm:$0xff]
  %v3393 = vpack.c.bf16 %v3392, %v3391
  %v3394 = vld [vmem:[%s9] sm:$0xf]
  %v3395 = vld [vmem:[%s9 + $0x4] sm:$0xf]
  %v3396 = vld [vmem:[%s9 + $0x8] sm:$0xf]
  %v3397 = vld [vmem:[%s9 + $0xc] sm:$0xf]
  %v3398 = vld [vmem:[%s9 + $0x10] sm:$0xf]
  %v3399 = vld [vmem:[%s9 + $0x14] sm:$0xf]
  %v3400 = vld [vmem:[%s9 + $0x18] sm:$0xf]
  %v3401 = vld [vmem:[%s9 + $0x1c] sm:$0xf]
  %v3410 = vunpack.c.l.b16 %v3394
  %v3411 = vunpack.c.l.b16 %v3395
  %v3412 = vunpack.c.l.b16 %v3396
  %v3413 = vunpack.c.l.b16 %v3397
  %v3414 = vunpack.c.l.b16 %v3398
  %v3415 = vunpack.c.l.b16 %v3399
  %v3416 = vunpack.c.l.b16 %v3400
  %v3417 = vunpack.c.l.b16 %v3401
  %v3418 = vpack.c.b16 %v3411, %v3410
  %v3419 = vpack.c.b16 %v3413, %v3412
  %v3420 = vpack.c.b16 %v3415, %v3414
  %v3421 = vpack.c.b16 %v3417, %v3416
  %vm3426 = vcmask 523264
  %v3428 = vsel %vm3426, %v3393, 0
  %3430 = vmatpush.bf16.msra.mxu0 0
  %3431 = vmatpush.bf16.msra.mxu0 0
  %3432 = vmatpush.bf16.msra.mxu0 0
  %3433 = vmatpush.bf16.msra.mxu0 0
  %3434 = vmatpush.bf16.msra.mxu0 %v3421
  %3435 = vmatpush.bf16.msra.mxu0 %v3420
  %3436 = vmatpush.bf16.msra.mxu0 %v3419
  %3437 = vmatpush.bf16.msra.mxu0 %v3418
  %3438 = vmatmul.bf16.gmra.mxu0 %v3428
  %v3439 = vpop.f32.mrf.mxu0
  %v3440 = vadd.f32 0.0, %v3439
  %v3441 = vpop.f32.mrf.mxu0
  %v3442 = vadd.f32 0.0, %v3441
  %3443 = vdwg.mxu0
  %3444 = vst.msk [vmem:[%s10] sm:$0xff] %vm3426, %v3440
  %3445 = vst.msk [vmem:[%s10 + $0x8] sm:$0xff] %vm3426, %v3442
  // Predicated region
  $region42: #{combined_mha_forward.1} parent=0 // pred_check
    _
  $region43: #{combined_mha_forward.1} parent=0 // pred_check_branch
    %3447 = sbr.rel (0) target = $region45
  $region44: #{combined_mha_forward.1} parent=0 // pred_region
    _
  $region45: #{combined_mha_forward.1} parent=0 // pred_fallthru
    _
  // Predicated region
  $region46: #{combined_mha_forward.1} parent=0 // pred_check
    _
  $region47: #{combined_mha_forward.1} parent=0 // pred_check_branch
    %3449 = sbr.rel (0) target = $region49
  $region48: #{combined_mha_forward.1} parent=0 // pred_region
    _
  $region49: #{combined_mha_forward.1} parent=0 // pred_fallthru
    _

</llo_original>
